<compile_context>
chip_gen: v7x
topology: tpu7x:2x2x1
jax: 0.10.0
libtpu: 0.0.40
codegen_flags: <defaults>
</compile_context>

<pallas_src>
import functools

import jax
import jax.numpy as jnp
from jax import lax
from jax.experimental import pallas as pl
from jax.experimental.pallas import tpu as pltpu


def _round_up(x, m):
    return (x + m - 1) // m * m


# ----------------------------- Pallas kernel --------------------------------

def _s2vt_kernel(vid_ref, emb_ref,
                 w1ih_ref, w1hh_ref, b1i_ref, b1hn_ref,
                 w2blk_ref, w2w_ref, b2w_ref, b2hn_ref,
                 wout_ref, bout_ref,
                 out_ref,
                 gi1e_ref, gw_ref, h2s_ref):
    """Full S2VT train-mode forward (time-major layout).

    vid_ref  : (T, B, Dv)   video features (B padded to x8)
    emb_ref  : (L, B, Dw)   embedded target words, L = max_len - 1
    w1ih     : (Dv, 3H)     GRU1 input weights, gate-stacked columns (r|z|n)
    w1hh     : (H, 3H)      GRU1 hidden weights, gate-stacked
    b1i      : (1, 3H)      [b1ih_r+b1hh_r | b1ih_z+b1hh_z | b1ih_n]
    b1hn     : (1, H)       b1hh_n (added inside r * (.))
    w2blk    : (2H, 4H)     GRU2 block weights: rows [h1n; h2],
                            columns [r_pre | z_pre | gi_n | gh_n]
    w2w      : (Dw, 3H)     GRU2 word-half input weights, gate-stacked
    b2w      : (1, 3H)      [b2ih_r+b2hh_r | b2ih_z+b2hh_z | b2ih_n]
    b2hn     : (1, H)       b2hh_n
    wout     : (H, Vp), bout: (1, Vp)   output projection (V padded to x128)
    out_ref  : (L, B, Vp)   log-softmax logits per decode step
    scratch  : gi1e (T,B,3H); gw (L,B,3H); h2s (L,B,H)
    """
    T, B, Dv = vid_ref.shape
    L, _, Dw = emb_ref.shape
    H = b1hn_ref.shape[1]
    Vp = wout_ref.shape[1]
    f32 = jnp.float32

    # ---- hoisted loop-invariant weight / bias loads -------------------------
    w1hh = w1hh_ref[...]           # (H, 3H)
    w2blk = w2blk_ref[...]         # (2H, 4H)
    b1i = b1i_ref[...]             # (1, 3H)
    b1hn = b1hn_ref[...]           # (1, H)
    b2w = b2w_ref[...]             # (1, 3H)
    b2hn = b2hn_ref[...]           # (1, H)
    b1i_r, b1i_z, b1i_n = b1i[:, 0:H], b1i[:, H:2 * H], b1i[:, 2 * H:]
    b2w_r, b2w_z, b2w_n = b2w[:, 0:H], b2w[:, H:2 * H], b2w[:, 2 * H:]

    # ---- batched (time-parallel) gate-stacked projections --------------------
    vid2d = vid_ref[...].reshape(T * B, Dv)
    gi1e_ref[...] = (jnp.dot(vid2d, w1ih_ref[...], preferred_element_type=f32)
                     + b1i).reshape(T, B, 3 * H)
    emb2d = emb_ref[...].reshape(L * B, Dw)
    gw_ref[...] = (jnp.dot(emb2d, w2w_ref[...], preferred_element_type=f32)
                   + b2w).reshape(L, B, 3 * H)

    # ---- per-step cells (1 MXU push each) ------------------------------------
    def gru1_step(h1, gi_r, gi_z, gi_n):
        gh1 = jnp.dot(h1, w1hh, preferred_element_type=f32)        # (B, 3H)
        r1 = jax.nn.sigmoid(gi_r + gh1[:, 0:H])
        z1 = jax.nn.sigmoid(gi_z + gh1[:, H:2 * H])
        n1 = jnp.tanh(gi_n + r1 * (gh1[:, 2 * H:] + b1hn))
        return (1.0 - z1) * n1 + z1 * h1

    def gru2_step(h1n, h2, gw_r, gw_z, gw_n):
        x = jnp.concatenate([h1n, h2], axis=1)                     # (B, 2H)
        g = jnp.dot(x, w2blk, preferred_element_type=f32)          # (B, 4H)
        r2 = jax.nn.sigmoid(g[:, 0:H] + gw_r)
        z2 = jax.nn.sigmoid(g[:, H:2 * H] + gw_z)
        n2 = jnp.tanh(g[:, 2 * H:3 * H] + gw_n + r2 * (g[:, 3 * H:] + b2hn))
        return (1.0 - z2) * n2 + z2 * h2

    # ---- encoder: rnn1 over frames, rnn2 over [output1 ; zero words] ---------
    def enc_body(t, carry):
        h1, h2 = carry
        gi1 = gi1e_ref[t]                                          # (B, 3H)
        h1n = gru1_step(h1, gi1[:, 0:H], gi1[:, H:2 * H], gi1[:, 2 * H:])
        h2n = gru2_step(h1n, h2, b2w_r, b2w_z, b2w_n)              # word=0 -> bias only
        return (h1n, h2n)

    # ---- decoder: rnn1 on zero frame (bias only), rnn2 on [output1 ; word] ---
    def dec_body(i, carry):
        h1, h2 = carry
        h1n = gru1_step(h1, b1i_r, b1i_z, b1i_n)                   # frame=0 -> bias only
        gw = gw_ref[i]                                             # (B, 3H)
        h2n = gru2_step(h1n, h2, gw[:, 0:H], gw[:, H:2 * H], gw[:, 2 * H:])
        h2s_ref[i] = h2n
        return (h1n, h2n)

    h0 = jnp.zeros((B, H), f32)
    enc_unroll = True if T <= 16 else 4
    dec_unroll = True if L <= 16 else 4
    h1f, h2f = lax.fori_loop(0, T, enc_body, (h0, h0), unroll=enc_unroll)
    lax.fori_loop(0, L, dec_body, (h1f, h2f), unroll=dec_unroll)

    # ---- batched output projection + log_softmax (lane-dense slab write) -----
    h2all = h2s_ref[...].reshape(L * B, H)
    logits = jnp.dot(h2all, wout_ref[...], preferred_element_type=f32) + bout_ref[...]
    out_ref[...] = jax.nn.log_softmax(logits, axis=-1).reshape(L, B, Vp)


# ------------------------------- wrapper -------------------------------------

def s2vt_forward_train(vid_feats, target, params, max_len):
    """Equivalent of S2VTModel.forward(vid_feats, target, mode='train').

    vid_feats: (B, T, dim_vid) float32, target: (B, max_len) int32.
    Returns seq_probs of shape (B, max_len - 1, vocab) and an empty seq_preds list.
    """
    B, T, Dv = vid_feats.shape
    H = params["w1_hh"].shape[1]
    Dw = params["emb"].shape[1]
    V = params["w_out"].shape[0]
    L = max_len - 1

    Bp = _round_up(B, 8)      # sublane-pad batch (f32 tile)
    Vp = _round_up(V, 128)    # lane-pad vocab so output stores are dense

    # Glue (embedding gather + layout transposes + padding) stays in plain JAX.
    emb_words = params["emb"][target[:, :L]]                              # (B, L, Dw)
    emb_tm = jnp.transpose(emb_words, (1, 0, 2)).astype(jnp.float32)      # (L, B, Dw)
    vid_tm = jnp.transpose(vid_feats, (1, 0, 2)).astype(jnp.float32)      # (T, B, Dv)
    if Bp != B:
        emb_tm = jnp.pad(emb_tm, ((0, 0), (0, Bp - B), (0, 0)))
        vid_tm = jnp.pad(vid_tm, ((0, 0), (0, Bp - B), (0, 0)))

    # Gate-stacked weights: PyTorch GRU weights are (3H, Din) with gate rows
    # (r, z, n); transposing gives (Din, 3H) with gate columns (r|z|n).
    w1ih_s = params["w1_ih"].T.astype(jnp.float32)      # (Dv, 3H)
    w1hh_s = params["w1_hh"].T.astype(jnp.float32)      # (H, 3H)
    w2ihT = params["w2_ih"].T.astype(jnp.float32)       # (H+Dw, 3H)
    w2ih_h = w2ihT[:H]                                  # (H, 3H)   output1 half
    w2ih_w = w2ihT[H:]                                  # (Dw, 3H)  word half
    w2hh_s = params["w2_hh"].T.astype(jnp.float32)      # (H, 3H)

    # GRU2 block weight: rows [h1n ; h2], columns [r_pre | z_pre | gi_n | gh_n].
    zH = jnp.zeros((H, H), jnp.float32)
    w2_blk = jnp.concatenate([
        jnp.concatenate([w2ih_h, zH], axis=1),                              # (H, 4H)
        jnp.concatenate([w2hh_s[:, :2 * H], zH, w2hh_s[:, 2 * H:]], axis=1),  # (H, 4H)
    ], axis=0)                                                              # (2H, 4H)

    b1ih = params["b1_ih"].astype(jnp.float32)
    b1hh = params["b1_hh"].astype(jnp.float32)
    b2ih = params["b2_ih"].astype(jnp.float32)
    b2hh = params["b2_hh"].astype(jnp.float32)
    b1i_fold = jnp.concatenate([b1ih[:2 * H] + b1hh[:2 * H], b1ih[2 * H:]]).reshape(1, 3 * H)
    b1h_n = b1hh[2 * H:].reshape(1, H)
    b2w_fold = jnp.concatenate([b2ih[:2 * H] + b2hh[:2 * H], b2ih[2 * H:]]).reshape(1, 3 * H)
    b2h_n = b2hh[2 * H:].reshape(1, H)

    wout = params["w_out"].T.astype(jnp.float32)        # (H, V)
    bout = params["b_out"].reshape(1, V).astype(jnp.float32)
    if Vp != V:
        wout = jnp.pad(wout, ((0, 0), (0, Vp - V)))
        # padded logits pushed to -1e30 so log_softmax over Vp matches V
        bout = jnp.pad(bout, ((0, 0), (0, Vp - V)), constant_values=-1e30)

    inputs = (vid_tm, emb_tm,
              w1ih_s, w1hh_s, b1i_fold, b1h_n,
              w2_blk, w2ih_w, b2w_fold, b2h_n,
              wout, bout)

    vmem_spec = pl.BlockSpec(memory_space=pltpu.MemorySpace.VMEM)
    out_tm = pl.pallas_call(
        _s2vt_kernel,
        out_shape=jax.ShapeDtypeStruct((L, Bp, Vp), jnp.float32),
        in_specs=[vmem_spec] * len(inputs),
        out_specs=vmem_spec,
        scratch_shapes=[
            pltpu.VMEM((T, Bp, 3 * H), jnp.float32),   # gi1e (encoder input proj, gate-stacked)
            pltpu.VMEM((L, Bp, 3 * H), jnp.float32),   # gw   (decoder word proj, gate-stacked)
            pltpu.VMEM((L, Bp, H), jnp.float32),       # h2s  (decode-step hidden history)
        ],
    )(*inputs)

    seq_probs = jnp.transpose(out_tm, (1, 0, 2))[:B, :, :V]   # (B, L, V)
    seq_preds = []                                            # train mode: empty, like PyTorch
    return seq_probs, seq_preds


# --------------------------- pure-JAX reference -------------------------------

def _gru_step_ref(x, h, wih, whh, bih, bhh):
    H = h.shape[1]
    gi = x @ wih.T + bih
    gh = h @ whh.T + bhh
    r = jax.nn.sigmoid(gi[:, :H] + gh[:, :H])
    z = jax.nn.sigmoid(gi[:, H:2 * H] + gh[:, H:2 * H])
    n = jnp.tanh(gi[:, 2 * H:] + r * gh[:, 2 * H:])
    return (1.0 - z) * n + z * h


def s2vt_forward_train_ref(vid_feats, target, params, max_len):
    B, T, Dv = vid_feats.shape
    H = params["w1_hh"].shape[1]
    Dw = params["emb"].shape[1]
    h1 = jnp.zeros((B, H), jnp.float32)
    h2 = jnp.zeros((B, H), jnp.float32)
    for t in range(T):
        h1 = _gru_step_ref(vid_feats[:, t], h1, params["w1_ih"], params["w1_hh"],
                           params["b1_ih"], params["b1_hh"])
        x2 = jnp.concatenate([h1, jnp.zeros((B, Dw), jnp.float32)], axis=1)
        h2 = _gru_step_ref(x2, h2, params["w2_ih"], params["w2_hh"],
                           params["b2_ih"], params["b2_hh"])
    probs = []
    for i in range(max_len - 1):
        cur = params["emb"][target[:, i]]
        h1 = _gru_step_ref(jnp.zeros((B, Dv), jnp.float32), h1,
                           params["w1_ih"], params["w1_hh"],
                           params["b1_ih"], params["b1_hh"])
        x2 = jnp.concatenate([h1, cur], axis=1)
        h2 = _gru_step_ref(x2, h2, params["w2_ih"], params["w2_hh"],
                           params["b2_ih"], params["b2_hh"])
        logits = h2 @ params["w_out"].T + params["b_out"]
        probs.append(jax.nn.log_softmax(logits, axis=-1)[:, None, :])
    return jnp.concatenate(probs, axis=1)


# --------------------------------- main ---------------------------------------

def _uniform(key, shape, scale):
    return jax.random.uniform(key, shape, jnp.float32, minval=-scale, maxval=scale)


if __name__ == "__main__":
    # Small, module-consistent shapes.
    vocab_size = 32
    max_len = 6
    dim_hidden = 32
    dim_word = 16
    dim_vid = 64
    batch = 2
    n_frames = 4

    key = jax.random.PRNGKey(0)
    keys = jax.random.split(key, 16)
    k = 1.0 / jnp.sqrt(dim_hidden)

    params = {
        # rnn1: GRU(dim_vid -> dim_hidden), gate order (r, z, n)
        "w1_ih": _uniform(keys[0], (3 * dim_hidden, dim_vid), k),
        "w1_hh": _uniform(keys[1], (3 * dim_hidden, dim_hidden), k),
        "b1_ih": _uniform(keys[2], (3 * dim_hidden,), k),
        "b1_hh": _uniform(keys[3], (3 * dim_hidden,), k),
        # rnn2: GRU(dim_hidden + dim_word -> dim_hidden)
        "w2_ih": _uniform(keys[4], (3 * dim_hidden, dim_hidden + dim_word), k),
        "w2_hh": _uniform(keys[5], (3 * dim_hidden, dim_hidden), k),
        "b2_ih": _uniform(keys[6], (3 * dim_hidden,), k),
        "b2_hh": _uniform(keys[7], (3 * dim_hidden,), k),
        # embedding + output projection
        "emb":   jax.random.normal(keys[8], (vocab_size, dim_word), jnp.float32),
        "w_out": _uniform(keys[9], (vocab_size, dim_hidden), k),
        "b_out": _uniform(keys[10], (vocab_size,), k),
    }

    vid_feats = jax.random.normal(keys[11], (batch, n_frames, dim_vid), jnp.float32)
    target = jax.random.randint(keys[12], (batch, max_len), 0, vocab_size, jnp.int32)

    fwd = jax.jit(functools.partial(s2vt_forward_train, max_len=max_len))
    seq_probs, seq_preds = fwd(vid_feats, target, params)
    seq_probs = jax.block_until_ready(seq_probs)

    ref = s2vt_forward_train_ref(vid_feats, target, params, max_len)
    assert seq_probs.shape == (batch, max_len - 1, vocab_size)
    assert jnp.allclose(seq_probs, ref, rtol=1e-3, atol=1e-4), "mismatch vs JAX reference"

    print("KERNEL_OK")
</pallas_src>

<mosaic_0001>
module attributes {stable_mosaic.version = 11 : i64} {
  func.func @_s2vt_kernel(%arg0: memref<4x8x64xf32, #tpu.memory_space<vmem>>, %arg1: memref<5x8x16xf32, #tpu.memory_space<vmem>>, %arg2: memref<64x96xf32, #tpu.memory_space<vmem>>, %arg3: memref<32x96xf32, #tpu.memory_space<vmem>>, %arg4: memref<1x96xf32, #tpu.memory_space<vmem>>, %arg5: memref<1x32xf32, #tpu.memory_space<vmem>>, %arg6: memref<64x128xf32, #tpu.memory_space<vmem>>, %arg7: memref<16x96xf32, #tpu.memory_space<vmem>>, %arg8: memref<1x96xf32, #tpu.memory_space<vmem>>, %arg9: memref<1x32xf32, #tpu.memory_space<vmem>>, %arg10: memref<32x128xf32, #tpu.memory_space<vmem>>, %arg11: memref<1x128xf32, #tpu.memory_space<vmem>>, %arg12: memref<5x8x128xf32, #tpu.memory_space<vmem>>, %arg13: memref<4x8x96xf32, #tpu.memory_space<vmem>>, %arg14: memref<5x8x96xf32, #tpu.memory_space<vmem>>, %arg15: memref<5x8x32xf32, #tpu.memory_space<vmem>>) attributes {dimension_semantics = [], scalar_prefetch = 0 : i64, scratch_operands = 3 : i64, tpu.core_type = #tpu.core_type<tc>} {
    %c0 = arith.constant 0 : index
    %c0_0 = arith.constant 0 : index
    %0 = vector.load %arg3[%c0, %c0_0] : memref<32x96xf32, #tpu.memory_space<vmem>>, vector<32x96xf32>
    %c0_1 = arith.constant 0 : index
    %c0_2 = arith.constant 0 : index
    %1 = vector.load %arg6[%c0_1, %c0_2] : memref<64x128xf32, #tpu.memory_space<vmem>>, vector<64x128xf32>
    %c0_3 = arith.constant 0 : index
    %c0_4 = arith.constant 0 : index
    %2 = vector.load %arg4[%c0_3, %c0_4] : memref<1x96xf32, #tpu.memory_space<vmem>>, vector<1x96xf32>
    %c0_5 = arith.constant 0 : index
    %c0_6 = arith.constant 0 : index
    %3 = vector.load %arg5[%c0_5, %c0_6] : memref<1x32xf32, #tpu.memory_space<vmem>>, vector<1x32xf32>
    %c0_7 = arith.constant 0 : index
    %c0_8 = arith.constant 0 : index
    %4 = vector.load %arg8[%c0_7, %c0_8] : memref<1x96xf32, #tpu.memory_space<vmem>>, vector<1x96xf32>
    %c0_9 = arith.constant 0 : index
    %c0_10 = arith.constant 0 : index
    %5 = vector.load %arg9[%c0_9, %c0_10] : memref<1x32xf32, #tpu.memory_space<vmem>>, vector<1x32xf32>
    %6 = vector.extract_strided_slice %2 {offsets = [0, 0], sizes = [1, 32], strides = [1, 1]} : vector<1x96xf32> to vector<1x32xf32>
    %7 = vector.extract_strided_slice %2 {offsets = [0, 32], sizes = [1, 32], strides = [1, 1]} : vector<1x96xf32> to vector<1x32xf32>
    %8 = vector.extract_strided_slice %2 {offsets = [0, 64], sizes = [1, 32], strides = [1, 1]} : vector<1x96xf32> to vector<1x32xf32>
    %9 = vector.extract_strided_slice %4 {offsets = [0, 0], sizes = [1, 32], strides = [1, 1]} : vector<1x96xf32> to vector<1x32xf32>
    %10 = vector.extract_strided_slice %4 {offsets = [0, 32], sizes = [1, 32], strides = [1, 1]} : vector<1x96xf32> to vector<1x32xf32>
    %11 = vector.extract_strided_slice %4 {offsets = [0, 64], sizes = [1, 32], strides = [1, 1]} : vector<1x96xf32> to vector<1x32xf32>
    %c0_11 = arith.constant 0 : index
    %c0_12 = arith.constant 0 : index
    %c0_13 = arith.constant 0 : index
    %12 = vector.load %arg0[%c0_11, %c0_12, %c0_13] : memref<4x8x64xf32, #tpu.memory_space<vmem>>, vector<4x8x64xf32>
    %13 = vector.shape_cast %12 : vector<4x8x64xf32> to vector<32x64xf32>
    %c0_14 = arith.constant 0 : index
    %c0_15 = arith.constant 0 : index
    %14 = vector.load %arg2[%c0_14, %c0_15] : memref<64x96xf32, #tpu.memory_space<vmem>>, vector<64x96xf32>
    %cst = arith.constant dense<0.000000e+00> : vector<32x96xf32>
    %15 = tpu.matmul %13, %14, %cst {dimension_numbers = #tpu.dot_dimension_numbers<[1], [0], [0], [1], [0, 0, 1, 1], [], []>} : vector<32x64xf32>, vector<64x96xf32>, vector<32x96xf32> -> vector<32x96xf32>
    %16 = vector.broadcast %2 : vector<1x96xf32> to vector<32x96xf32>
    %17 = arith.addf %15, %16 : vector<32x96xf32>
    %18 = vector.shape_cast %17 : vector<32x96xf32> to vector<4x8x96xf32>
    %c0_16 = arith.constant 0 : index
    %c0_17 = arith.constant 0 : index
    %c0_18 = arith.constant 0 : index
    %19 = vector.load %arg13[%c0_16, %c0_17, %c0_18] : memref<4x8x96xf32, #tpu.memory_space<vmem>>, vector<4x8x96xf32>
    tpu.vector_store %arg13[%c0_16, %c0_17, %c0_18], %18 {strides = array<i32>} : memref<4x8x96xf32, #tpu.memory_space<vmem>>, vector<4x8x96xf32>,
    %c0_19 = arith.constant 0 : index
    %c0_20 = arith.constant 0 : index
    %c0_21 = arith.constant 0 : index
    %20 = vector.load %arg1[%c0_19, %c0_20, %c0_21] : memref<5x8x16xf32, #tpu.memory_space<vmem>>, vector<5x8x16xf32>
    %21 = vector.shape_cast %20 : vector<5x8x16xf32> to vector<40x16xf32>
    %c0_22 = arith.constant 0 : index
    %c0_23 = arith.constant 0 : index
    %22 = vector.load %arg7[%c0_22, %c0_23] : memref<16x96xf32, #tpu.memory_space<vmem>>, vector<16x96xf32>
    %cst_24 = arith.constant dense<0.000000e+00> : vector<40x96xf32>
    %23 = tpu.matmul %21, %22, %cst_24 {dimension_numbers = #tpu.dot_dimension_numbers<[1], [0], [0], [1], [0, 0, 1, 1], [], []>} : vector<40x16xf32>, vector<16x96xf32>, vector<40x96xf32> -> vector<40x96xf32>
    %24 = vector.broadcast %4 : vector<1x96xf32> to vector<40x96xf32>
    %25 = arith.addf %23, %24 : vector<40x96xf32>
    %26 = vector.shape_cast %25 : vector<40x96xf32> to vector<5x8x96xf32>
    %c0_25 = arith.constant 0 : index
    %c0_26 = arith.constant 0 : index
    %c0_27 = arith.constant 0 : index
    %27 = vector.load %arg14[%c0_25, %c0_26, %c0_27] : memref<5x8x96xf32, #tpu.memory_space<vmem>>, vector<5x8x96xf32>
    tpu.vector_store %arg14[%c0_25, %c0_26, %c0_27], %26 {strides = array<i32>} : memref<5x8x96xf32, #tpu.memory_space<vmem>>, vector<5x8x96xf32>,
    %cst_28 = arith.constant 0.000000e+00 : f32
    %28 = vector.broadcast %cst_28 : f32 to vector<8x32xf32>
    %c0_i32 = arith.constant 0 : i32
    %29 = arith.index_cast %c0_i32 : i32 to index
    %c0_29 = arith.constant 0 : index
    %c0_30 = arith.constant 0 : index
    %30 = vector.load %arg13[%29, %c0_29, %c0_30] : memref<4x8x96xf32, #tpu.memory_space<vmem>>, vector<1x8x96xf32>
    %31 = vector.shape_cast %30 : vector<1x8x96xf32> to vector<8x96xf32>
    %32 = vector.extract_strided_slice %31 {offsets = [0, 0], sizes = [8, 32], strides = [1, 1]} : vector<8x96xf32> to vector<8x32xf32>
    %33 = vector.extract_strided_slice %31 {offsets = [0, 32], sizes = [8, 32], strides = [1, 1]} : vector<8x96xf32> to vector<8x32xf32>
    %34 = vector.extract_strided_slice %31 {offsets = [0, 64], sizes = [8, 32], strides = [1, 1]} : vector<8x96xf32> to vector<8x32xf32>
    %cst_31 = arith.constant dense<0.000000e+00> : vector<8x96xf32>
    %35 = tpu.matmul %28, %0, %cst_31 {dimension_numbers = #tpu.dot_dimension_numbers<[1], [0], [0], [1], [0, 0, 1, 1], [], []>} : vector<8x32xf32>, vector<32x96xf32>, vector<8x96xf32> -> vector<8x96xf32>
    %36 = vector.extract_strided_slice %35 {offsets = [0, 0], sizes = [8, 32], strides = [1, 1]} : vector<8x96xf32> to vector<8x32xf32>
    %37 = arith.addf %32, %36 : vector<8x32xf32>
    %38 = arith.negf %37 : vector<8x32xf32>
    %39 = math.exp %38 : vector<8x32xf32>
    %cst_32 = arith.constant 1.000000e+00 : f32
    %40 = vector.broadcast %cst_32 : f32 to vector<8x32xf32>
    %41 = arith.addf %40, %39 : vector<8x32xf32>
    %42 = arith.divf %40, %41 : vector<8x32xf32>
    %43 = vector.extract_strided_slice %35 {offsets = [0, 32], sizes = [8, 32], strides = [1, 1]} : vector<8x96xf32> to vector<8x32xf32>
    %44 = arith.addf %33, %43 : vector<8x32xf32>
    %45 = arith.negf %44 : vector<8x32xf32>
    %46 = math.exp %45 : vector<8x32xf32>
    %cst_33 = arith.constant 1.000000e+00 : f32
    %47 = vector.broadcast %cst_33 : f32 to vector<8x32xf32>
    %48 = arith.addf %47, %46 : vector<8x32xf32>
    %49 = arith.divf %47, %48 : vector<8x32xf32>
    %50 = vector.extract_strided_slice %35 {offsets = [0, 64], sizes = [8, 32], strides = [1, 1]} : vector<8x96xf32> to vector<8x32xf32>
    %51 = vector.broadcast %3 : vector<1x32xf32> to vector<8x32xf32>
    %52 = arith.addf %50, %51 : vector<8x32xf32>
    %53 = arith.mulf %42, %52 : vector<8x32xf32>
    %54 = arith.addf %34, %53 : vector<8x32xf32>
    %55 = math.tanh %54 : vector<8x32xf32>
    %cst_34 = arith.constant 1.000000e+00 : f32
    %56 = vector.broadcast %cst_34 : f32 to vector<8x32xf32>
    %57 = arith.subf %56, %49 : vector<8x32xf32>
    %58 = arith.mulf %57, %55 : vector<8x32xf32>
    %59 = arith.mulf %49, %28 : vector<8x32xf32>
    %60 = arith.addf %58, %59 : vector<8x32xf32>
    %61 = tpu.concatenate %60, %28 in 1 : vector<8x32xf32>, vector<8x32xf32> -> vector<8x64xf32>
    %cst_35 = arith.constant dense<0.000000e+00> : vector<8x128xf32>
    %62 = tpu.matmul %61, %1, %cst_35 {dimension_numbers = #tpu.dot_dimension_numbers<[1], [0], [0], [1], [0, 0, 1, 1], [], []>} : vector<8x64xf32>, vector<64x128xf32>, vector<8x128xf32> -> vector<8x128xf32>
    %63 = vector.extract_strided_slice %62 {offsets = [0, 0], sizes = [8, 32], strides = [1, 1]} : vector<8x128xf32> to vector<8x32xf32>
    %64 = vector.broadcast %9 : vector<1x32xf32> to vector<8x32xf32>
    %65 = arith.addf %63, %64 : vector<8x32xf32>
    %66 = arith.negf %65 : vector<8x32xf32>
    %67 = math.exp %66 : vector<8x32xf32>
    %cst_36 = arith.constant 1.000000e+00 : f32
    %68 = vector.broadcast %cst_36 : f32 to vector<8x32xf32>
    %69 = arith.addf %68, %67 : vector<8x32xf32>
    %70 = arith.divf %68, %69 : vector<8x32xf32>
    %71 = vector.extract_strided_slice %62 {offsets = [0, 32], sizes = [8, 32], strides = [1, 1]} : vector<8x128xf32> to vector<8x32xf32>
    %72 = vector.broadcast %10 : vector<1x32xf32> to vector<8x32xf32>
    %73 = arith.addf %71, %72 : vector<8x32xf32>
    %74 = arith.negf %73 : vector<8x32xf32>
    %75 = math.exp %74 : vector<8x32xf32>
    %cst_37 = arith.constant 1.000000e+00 : f32
    %76 = vector.broadcast %cst_37 : f32 to vector<8x32xf32>
    %77 = arith.addf %76, %75 : vector<8x32xf32>
    %78 = arith.divf %76, %77 : vector<8x32xf32>
    %79 = vector.extract_strided_slice %62 {offsets = [0, 64], sizes = [8, 32], strides = [1, 1]} : vector<8x128xf32> to vector<8x32xf32>
    %80 = vector.broadcast %11 : vector<1x32xf32> to vector<8x32xf32>
    %81 = arith.addf %79, %80 : vector<8x32xf32>
    %82 = vector.extract_strided_slice %62 {offsets = [0, 96], sizes = [8, 32], strides = [1, 1]} : vector<8x128xf32> to vector<8x32xf32>
    %83 = vector.broadcast %5 : vector<1x32xf32> to vector<8x32xf32>
    %84 = arith.addf %82, %83 : vector<8x32xf32>
    %85 = arith.mulf %70, %84 : vector<8x32xf32>
    %86 = arith.addf %81, %85 : vector<8x32xf32>
    %87 = math.tanh %86 : vector<8x32xf32>
    %cst_38 = arith.constant 1.000000e+00 : f32
    %88 = vector.broadcast %cst_38 : f32 to vector<8x32xf32>
    %89 = arith.subf %88, %78 : vector<8x32xf32>
    %90 = arith.mulf %89, %87 : vector<8x32xf32>
    %91 = arith.mulf %78, %28 : vector<8x32xf32>
    %92 = arith.addf %90, %91 : vector<8x32xf32>
    %c1_i32 = arith.constant 1 : i32
    %93 = arith.index_cast %c1_i32 : i32 to index
    %c0_39 = arith.constant 0 : index
    %c0_40 = arith.constant 0 : index
    %94 = vector.load %arg13[%93, %c0_39, %c0_40] : memref<4x8x96xf32, #tpu.memory_space<vmem>>, vector<1x8x96xf32>
    %95 = vector.shape_cast %94 : vector<1x8x96xf32> to vector<8x96xf32>
    %96 = vector.extract_strided_slice %95 {offsets = [0, 0], sizes = [8, 32], strides = [1, 1]} : vector<8x96xf32> to vector<8x32xf32>
    %97 = vector.extract_strided_slice %95 {offsets = [0, 32], sizes = [8, 32], strides = [1, 1]} : vector<8x96xf32> to vector<8x32xf32>
    %98 = vector.extract_strided_slice %95 {offsets = [0, 64], sizes = [8, 32], strides = [1, 1]} : vector<8x96xf32> to vector<8x32xf32>
    %cst_41 = arith.constant dense<0.000000e+00> : vector<8x96xf32>
    %99 = tpu.matmul %60, %0, %cst_41 {dimension_numbers = #tpu.dot_dimension_numbers<[1], [0], [0], [1], [0, 0, 1, 1], [], []>} : vector<8x32xf32>, vector<32x96xf32>, vector<8x96xf32> -> vector<8x96xf32>
    %100 = vector.extract_strided_slice %99 {offsets = [0, 0], sizes = [8, 32], strides = [1, 1]} : vector<8x96xf32> to vector<8x32xf32>
    %101 = arith.addf %96, %100 : vector<8x32xf32>
    %102 = arith.negf %101 : vector<8x32xf32>
    %103 = math.exp %102 : vector<8x32xf32>
    %cst_42 = arith.constant 1.000000e+00 : f32
    %104 = vector.broadcast %cst_42 : f32 to vector<8x32xf32>
    %105 = arith.addf %104, %103 : vector<8x32xf32>
    %106 = arith.divf %104, %105 : vector<8x32xf32>
    %107 = vector.extract_strided_slice %99 {offsets = [0, 32], sizes = [8, 32], strides = [1, 1]} : vector<8x96xf32> to vector<8x32xf32>
    %108 = arith.addf %97, %107 : vector<8x32xf32>
    %109 = arith.negf %108 : vector<8x32xf32>
    %110 = math.exp %109 : vector<8x32xf32>
    %cst_43 = arith.constant 1.000000e+00 : f32
    %111 = vector.broadcast %cst_43 : f32 to vector<8x32xf32>
    %112 = arith.addf %111, %110 : vector<8x32xf32>
    %113 = arith.divf %111, %112 : vector<8x32xf32>
    %114 = vector.extract_strided_slice %99 {offsets = [0, 64], sizes = [8, 32], strides = [1, 1]} : vector<8x96xf32> to vector<8x32xf32>
    %115 = vector.broadcast %3 : vector<1x32xf32> to vector<8x32xf32>
    %116 = arith.addf %114, %115 : vector<8x32xf32>
    %117 = arith.mulf %106, %116 : vector<8x32xf32>
    %118 = arith.addf %98, %117 : vector<8x32xf32>
    %119 = math.tanh %118 : vector<8x32xf32>
    %cst_44 = arith.constant 1.000000e+00 : f32
    %120 = vector.broadcast %cst_44 : f32 to vector<8x32xf32>
    %121 = arith.subf %120, %113 : vector<8x32xf32>
    %122 = arith.mulf %121, %119 : vector<8x32xf32>
    %123 = arith.mulf %113, %60 : vector<8x32xf32>
    %124 = arith.addf %122, %123 : vector<8x32xf32>
    %125 = tpu.concatenate %124, %92 in 1 : vector<8x32xf32>, vector<8x32xf32> -> vector<8x64xf32>
    %cst_45 = arith.constant dense<0.000000e+00> : vector<8x128xf32>
    %126 = tpu.matmul %125, %1, %cst_45 {dimension_numbers = #tpu.dot_dimension_numbers<[1], [0], [0], [1], [0, 0, 1, 1], [], []>} : vector<8x64xf32>, vector<64x128xf32>, vector<8x128xf32> -> vector<8x128xf32>
    %127 = vector.extract_strided_slice %126 {offsets = [0, 0], sizes = [8, 32], strides = [1, 1]} : vector<8x128xf32> to vector<8x32xf32>
    %128 = vector.broadcast %9 : vector<1x32xf32> to vector<8x32xf32>
    %129 = arith.addf %127, %128 : vector<8x32xf32>
    %130 = arith.negf %129 : vector<8x32xf32>
    %131 = math.exp %130 : vector<8x32xf32>
    %cst_46 = arith.constant 1.000000e+00 : f32
    %132 = vector.broadcast %cst_46 : f32 to vector<8x32xf32>
    %133 = arith.addf %132, %131 : vector<8x32xf32>
    %134 = arith.divf %132, %133 : vector<8x32xf32>
    %135 = vector.extract_strided_slice %126 {offsets = [0, 32], sizes = [8, 32], strides = [1, 1]} : vector<8x128xf32> to vector<8x32xf32>
    %136 = vector.broadcast %10 : vector<1x32xf32> to vector<8x32xf32>
    %137 = arith.addf %135, %136 : vector<8x32xf32>
    %138 = arith.negf %137 : vector<8x32xf32>
    %139 = math.exp %138 : vector<8x32xf32>
    %cst_47 = arith.constant 1.000000e+00 : f32
    %140 = vector.broadcast %cst_47 : f32 to vector<8x32xf32>
    %141 = arith.addf %140, %139 : vector<8x32xf32>
    %142 = arith.divf %140, %141 : vector<8x32xf32>
    %143 = vector.extract_strided_slice %126 {offsets = [0, 64], sizes = [8, 32], strides = [1, 1]} : vector<8x128xf32> to vector<8x32xf32>
    %144 = vector.broadcast %11 : vector<1x32xf32> to vector<8x32xf32>
    %145 = arith.addf %143, %144 : vector<8x32xf32>
    %146 = vector.extract_strided_slice %126 {offsets = [0, 96], sizes = [8, 32], strides = [1, 1]} : vector<8x128xf32> to vector<8x32xf32>
    %147 = vector.broadcast %5 : vector<1x32xf32> to vector<8x32xf32>
    %148 = arith.addf %146, %147 : vector<8x32xf32>
    %149 = arith.mulf %134, %148 : vector<8x32xf32>
    %150 = arith.addf %145, %149 : vector<8x32xf32>
    %151 = math.tanh %150 : vector<8x32xf32>
    %cst_48 = arith.constant 1.000000e+00 : f32
    %152 = vector.broadcast %cst_48 : f32 to vector<8x32xf32>
    %153 = arith.subf %152, %142 : vector<8x32xf32>
    %154 = arith.mulf %153, %151 : vector<8x32xf32>
    %155 = arith.mulf %142, %92 : vector<8x32xf32>
    %156 = arith.addf %154, %155 : vector<8x32xf32>
    %c2_i32 = arith.constant 2 : i32
    %157 = arith.index_cast %c2_i32 : i32 to index
    %c0_49 = arith.constant 0 : index
    %c0_50 = arith.constant 0 : index
    %158 = vector.load %arg13[%157, %c0_49, %c0_50] : memref<4x8x96xf32, #tpu.memory_space<vmem>>, vector<1x8x96xf32>
    %159 = vector.shape_cast %158 : vector<1x8x96xf32> to vector<8x96xf32>
    %160 = vector.extract_strided_slice %159 {offsets = [0, 0], sizes = [8, 32], strides = [1, 1]} : vector<8x96xf32> to vector<8x32xf32>
    %161 = vector.extract_strided_slice %159 {offsets = [0, 32], sizes = [8, 32], strides = [1, 1]} : vector<8x96xf32> to vector<8x32xf32>
    %162 = vector.extract_strided_slice %159 {offsets = [0, 64], sizes = [8, 32], strides = [1, 1]} : vector<8x96xf32> to vector<8x32xf32>
    %cst_51 = arith.constant dense<0.000000e+00> : vector<8x96xf32>
    %163 = tpu.matmul %124, %0, %cst_51 {dimension_numbers = #tpu.dot_dimension_numbers<[1], [0], [0], [1], [0, 0, 1, 1], [], []>} : vector<8x32xf32>, vector<32x96xf32>, vector<8x96xf32> -> vector<8x96xf32>
    %164 = vector.extract_strided_slice %163 {offsets = [0, 0], sizes = [8, 32], strides = [1, 1]} : vector<8x96xf32> to vector<8x32xf32>
    %165 = arith.addf %160, %164 : vector<8x32xf32>
    %166 = arith.negf %165 : vector<8x32xf32>
    %167 = math.exp %166 : vector<8x32xf32>
    %cst_52 = arith.constant 1.000000e+00 : f32
    %168 = vector.broadcast %cst_52 : f32 to vector<8x32xf32>
    %169 = arith.addf %168, %167 : vector<8x32xf32>
    %170 = arith.divf %168, %169 : vector<8x32xf32>
    %171 = vector.extract_strided_slice %163 {offsets = [0, 32], sizes = [8, 32], strides = [1, 1]} : vector<8x96xf32> to vector<8x32xf32>
    %172 = arith.addf %161, %171 : vector<8x32xf32>
    %173 = arith.negf %172 : vector<8x32xf32>
    %174 = math.exp %173 : vector<8x32xf32>
    %cst_53 = arith.constant 1.000000e+00 : f32
    %175 = vector.broadcast %cst_53 : f32 to vector<8x32xf32>
    %176 = arith.addf %175, %174 : vector<8x32xf32>
    %177 = arith.divf %175, %176 : vector<8x32xf32>
    %178 = vector.extract_strided_slice %163 {offsets = [0, 64], sizes = [8, 32], strides = [1, 1]} : vector<8x96xf32> to vector<8x32xf32>
    %179 = vector.broadcast %3 : vector<1x32xf32> to vector<8x32xf32>
    %180 = arith.addf %178, %179 : vector<8x32xf32>
    %181 = arith.mulf %170, %180 : vector<8x32xf32>
    %182 = arith.addf %162, %181 : vector<8x32xf32>
    %183 = math.tanh %182 : vector<8x32xf32>
    %cst_54 = arith.constant 1.000000e+00 : f32
    %184 = vector.broadcast %cst_54 : f32 to vector<8x32xf32>
    %185 = arith.subf %184, %177 : vector<8x32xf32>
    %186 = arith.mulf %185, %183 : vector<8x32xf32>
    %187 = arith.mulf %177, %124 : vector<8x32xf32>
    %188 = arith.addf %186, %187 : vector<8x32xf32>
    %189 = tpu.concatenate %188, %156 in 1 : vector<8x32xf32>, vector<8x32xf32> -> vector<8x64xf32>
    %cst_55 = arith.constant dense<0.000000e+00> : vector<8x128xf32>
    %190 = tpu.matmul %189, %1, %cst_55 {dimension_numbers = #tpu.dot_dimension_numbers<[1], [0], [0], [1], [0, 0, 1, 1], [], []>} : vector<8x64xf32>, vector<64x128xf32>, vector<8x128xf32> -> vector<8x128xf32>
    %191 = vector.extract_strided_slice %190 {offsets = [0, 0], sizes = [8, 32], strides = [1, 1]} : vector<8x128xf32> to vector<8x32xf32>
    %192 = vector.broadcast %9 : vector<1x32xf32> to vector<8x32xf32>
    %193 = arith.addf %191, %192 : vector<8x32xf32>
    %194 = arith.negf %193 : vector<8x32xf32>
    %195 = math.exp %194 : vector<8x32xf32>
    %cst_56 = arith.constant 1.000000e+00 : f32
    %196 = vector.broadcast %cst_56 : f32 to vector<8x32xf32>
    %197 = arith.addf %196, %195 : vector<8x32xf32>
    %198 = arith.divf %196, %197 : vector<8x32xf32>
    %199 = vector.extract_strided_slice %190 {offsets = [0, 32], sizes = [8, 32], strides = [1, 1]} : vector<8x128xf32> to vector<8x32xf32>
    %200 = vector.broadcast %10 : vector<1x32xf32> to vector<8x32xf32>
    %201 = arith.addf %199, %200 : vector<8x32xf32>
    %202 = arith.negf %201 : vector<8x32xf32>
    %203 = math.exp %202 : vector<8x32xf32>
    %cst_57 = arith.constant 1.000000e+00 : f32
    %204 = vector.broadcast %cst_57 : f32 to vector<8x32xf32>
    %205 = arith.addf %204, %203 : vector<8x32xf32>
    %206 = arith.divf %204, %205 : vector<8x32xf32>
    %207 = vector.extract_strided_slice %190 {offsets = [0, 64], sizes = [8, 32], strides = [1, 1]} : vector<8x128xf32> to vector<8x32xf32>
    %208 = vector.broadcast %11 : vector<1x32xf32> to vector<8x32xf32>
    %209 = arith.addf %207, %208 : vector<8x32xf32>
    %210 = vector.extract_strided_slice %190 {offsets = [0, 96], sizes = [8, 32], strides = [1, 1]} : vector<8x128xf32> to vector<8x32xf32>
    %211 = vector.broadcast %5 : vector<1x32xf32> to vector<8x32xf32>
    %212 = arith.addf %210, %211 : vector<8x32xf32>
    %213 = arith.mulf %198, %212 : vector<8x32xf32>
    %214 = arith.addf %209, %213 : vector<8x32xf32>
    %215 = math.tanh %214 : vector<8x32xf32>
    %cst_58 = arith.constant 1.000000e+00 : f32
    %216 = vector.broadcast %cst_58 : f32 to vector<8x32xf32>
    %217 = arith.subf %216, %206 : vector<8x32xf32>
    %218 = arith.mulf %217, %215 : vector<8x32xf32>
    %219 = arith.mulf %206, %156 : vector<8x32xf32>
    %220 = arith.addf %218, %219 : vector<8x32xf32>
    %c3_i32 = arith.constant 3 : i32
    %221 = arith.index_cast %c3_i32 : i32 to index
    %c0_59 = arith.constant 0 : index
    %c0_60 = arith.constant 0 : index
    %222 = vector.load %arg13[%221, %c0_59, %c0_60] : memref<4x8x96xf32, #tpu.memory_space<vmem>>, vector<1x8x96xf32>
    %223 = vector.shape_cast %222 : vector<1x8x96xf32> to vector<8x96xf32>
    %224 = vector.extract_strided_slice %223 {offsets = [0, 0], sizes = [8, 32], strides = [1, 1]} : vector<8x96xf32> to vector<8x32xf32>
    %225 = vector.extract_strided_slice %223 {offsets = [0, 32], sizes = [8, 32], strides = [1, 1]} : vector<8x96xf32> to vector<8x32xf32>
    %226 = vector.extract_strided_slice %223 {offsets = [0, 64], sizes = [8, 32], strides = [1, 1]} : vector<8x96xf32> to vector<8x32xf32>
    %cst_61 = arith.constant dense<0.000000e+00> : vector<8x96xf32>
    %227 = tpu.matmul %188, %0, %cst_61 {dimension_numbers = #tpu.dot_dimension_numbers<[1], [0], [0], [1], [0, 0, 1, 1], [], []>} : vector<8x32xf32>, vector<32x96xf32>, vector<8x96xf32> -> vector<8x96xf32>
    %228 = vector.extract_strided_slice %227 {offsets = [0, 0], sizes = [8, 32], strides = [1, 1]} : vector<8x96xf32> to vector<8x32xf32>
    %229 = arith.addf %224, %228 : vector<8x32xf32>
    %230 = arith.negf %229 : vector<8x32xf32>
    %231 = math.exp %230 : vector<8x32xf32>
    %cst_62 = arith.constant 1.000000e+00 : f32
    %232 = vector.broadcast %cst_62 : f32 to vector<8x32xf32>
    %233 = arith.addf %232, %231 : vector<8x32xf32>
    %234 = arith.divf %232, %233 : vector<8x32xf32>
    %235 = vector.extract_strided_slice %227 {offsets = [0, 32], sizes = [8, 32], strides = [1, 1]} : vector<8x96xf32> to vector<8x32xf32>
    %236 = arith.addf %225, %235 : vector<8x32xf32>
    %237 = arith.negf %236 : vector<8x32xf32>
    %238 = math.exp %237 : vector<8x32xf32>
    %cst_63 = arith.constant 1.000000e+00 : f32
    %239 = vector.broadcast %cst_63 : f32 to vector<8x32xf32>
    %240 = arith.addf %239, %238 : vector<8x32xf32>
    %241 = arith.divf %239, %240 : vector<8x32xf32>
    %242 = vector.extract_strided_slice %227 {offsets = [0, 64], sizes = [8, 32], strides = [1, 1]} : vector<8x96xf32> to vector<8x32xf32>
    %243 = vector.broadcast %3 : vector<1x32xf32> to vector<8x32xf32>
    %244 = arith.addf %242, %243 : vector<8x32xf32>
    %245 = arith.mulf %234, %244 : vector<8x32xf32>
    %246 = arith.addf %226, %245 : vector<8x32xf32>
    %247 = math.tanh %246 : vector<8x32xf32>
    %cst_64 = arith.constant 1.000000e+00 : f32
    %248 = vector.broadcast %cst_64 : f32 to vector<8x32xf32>
    %249 = arith.subf %248, %241 : vector<8x32xf32>
    %250 = arith.mulf %249, %247 : vector<8x32xf32>
    %251 = arith.mulf %241, %188 : vector<8x32xf32>
    %252 = arith.addf %250, %251 : vector<8x32xf32>
    %253 = tpu.concatenate %252, %220 in 1 : vector<8x32xf32>, vector<8x32xf32> -> vector<8x64xf32>
    %cst_65 = arith.constant dense<0.000000e+00> : vector<8x128xf32>
    %254 = tpu.matmul %253, %1, %cst_65 {dimension_numbers = #tpu.dot_dimension_numbers<[1], [0], [0], [1], [0, 0, 1, 1], [], []>} : vector<8x64xf32>, vector<64x128xf32>, vector<8x128xf32> -> vector<8x128xf32>
    %255 = vector.extract_strided_slice %254 {offsets = [0, 0], sizes = [8, 32], strides = [1, 1]} : vector<8x128xf32> to vector<8x32xf32>
    %256 = vector.broadcast %9 : vector<1x32xf32> to vector<8x32xf32>
    %257 = arith.addf %255, %256 : vector<8x32xf32>
    %258 = arith.negf %257 : vector<8x32xf32>
    %259 = math.exp %258 : vector<8x32xf32>
    %cst_66 = arith.constant 1.000000e+00 : f32
    %260 = vector.broadcast %cst_66 : f32 to vector<8x32xf32>
    %261 = arith.addf %260, %259 : vector<8x32xf32>
    %262 = arith.divf %260, %261 : vector<8x32xf32>
    %263 = vector.extract_strided_slice %254 {offsets = [0, 32], sizes = [8, 32], strides = [1, 1]} : vector<8x128xf32> to vector<8x32xf32>
    %264 = vector.broadcast %10 : vector<1x32xf32> to vector<8x32xf32>
    %265 = arith.addf %263, %264 : vector<8x32xf32>
    %266 = arith.negf %265 : vector<8x32xf32>
    %267 = math.exp %266 : vector<8x32xf32>
    %cst_67 = arith.constant 1.000000e+00 : f32
    %268 = vector.broadcast %cst_67 : f32 to vector<8x32xf32>
    %269 = arith.addf %268, %267 : vector<8x32xf32>
    %270 = arith.divf %268, %269 : vector<8x32xf32>
    %271 = vector.extract_strided_slice %254 {offsets = [0, 64], sizes = [8, 32], strides = [1, 1]} : vector<8x128xf32> to vector<8x32xf32>
    %272 = vector.broadcast %11 : vector<1x32xf32> to vector<8x32xf32>
    %273 = arith.addf %271, %272 : vector<8x32xf32>
    %274 = vector.extract_strided_slice %254 {offsets = [0, 96], sizes = [8, 32], strides = [1, 1]} : vector<8x128xf32> to vector<8x32xf32>
    %275 = vector.broadcast %5 : vector<1x32xf32> to vector<8x32xf32>
    %276 = arith.addf %274, %275 : vector<8x32xf32>
    %277 = arith.mulf %262, %276 : vector<8x32xf32>
    %278 = arith.addf %273, %277 : vector<8x32xf32>
    %279 = math.tanh %278 : vector<8x32xf32>
    %cst_68 = arith.constant 1.000000e+00 : f32
    %280 = vector.broadcast %cst_68 : f32 to vector<8x32xf32>
    %281 = arith.subf %280, %270 : vector<8x32xf32>
    %282 = arith.mulf %281, %279 : vector<8x32xf32>
    %283 = arith.mulf %270, %220 : vector<8x32xf32>
    %284 = arith.addf %282, %283 : vector<8x32xf32>
    %c4_i32 = arith.constant 4 : i32
    %c0_i32_69 = arith.constant 0 : i32
    %cst_70 = arith.constant dense<0.000000e+00> : vector<8x96xf32>
    %285 = tpu.matmul %252, %0, %cst_70 {dimension_numbers = #tpu.dot_dimension_numbers<[1], [0], [0], [1], [0, 0, 1, 1], [], []>} : vector<8x32xf32>, vector<32x96xf32>, vector<8x96xf32> -> vector<8x96xf32>
    %286 = vector.extract_strided_slice %285 {offsets = [0, 0], sizes = [8, 32], strides = [1, 1]} : vector<8x96xf32> to vector<8x32xf32>
    %287 = vector.broadcast %6 : vector<1x32xf32> to vector<8x32xf32>
    %288 = arith.addf %287, %286 : vector<8x32xf32>
    %289 = arith.negf %288 : vector<8x32xf32>
    %290 = math.exp %289 : vector<8x32xf32>
    %cst_71 = arith.constant 1.000000e+00 : f32
    %291 = vector.broadcast %cst_71 : f32 to vector<8x32xf32>
    %292 = arith.addf %291, %290 : vector<8x32xf32>
    %293 = arith.divf %291, %292 : vector<8x32xf32>
    %294 = vector.extract_strided_slice %285 {offsets = [0, 32], sizes = [8, 32], strides = [1, 1]} : vector<8x96xf32> to vector<8x32xf32>
    %295 = vector.broadcast %7 : vector<1x32xf32> to vector<8x32xf32>
    %296 = arith.addf %295, %294 : vector<8x32xf32>
    %297 = arith.negf %296 : vector<8x32xf32>
    %298 = math.exp %297 : vector<8x32xf32>
    %cst_72 = arith.constant 1.000000e+00 : f32
    %299 = vector.broadcast %cst_72 : f32 to vector<8x32xf32>
    %300 = arith.addf %299, %298 : vector<8x32xf32>
    %301 = arith.divf %299, %300 : vector<8x32xf32>
    %302 = vector.extract_strided_slice %285 {offsets = [0, 64], sizes = [8, 32], strides = [1, 1]} : vector<8x96xf32> to vector<8x32xf32>
    %303 = vector.broadcast %3 : vector<1x32xf32> to vector<8x32xf32>
    %304 = arith.addf %302, %303 : vector<8x32xf32>
    %305 = arith.mulf %293, %304 : vector<8x32xf32>
    %306 = vector.broadcast %8 : vector<1x32xf32> to vector<8x32xf32>
    %307 = arith.addf %306, %305 : vector<8x32xf32>
    %308 = math.tanh %307 : vector<8x32xf32>
    %cst_73 = arith.constant 1.000000e+00 : f32
    %309 = vector.broadcast %cst_73 : f32 to vector<8x32xf32>
    %310 = arith.subf %309, %301 : vector<8x32xf32>
    %311 = arith.mulf %310, %308 : vector<8x32xf32>
    %312 = arith.mulf %301, %252 : vector<8x32xf32>
    %313 = arith.addf %311, %312 : vector<8x32xf32>
    %314 = arith.index_cast %c0_i32_69 : i32 to index
    %c0_74 = arith.constant 0 : index
    %c0_75 = arith.constant 0 : index
    %315 = vector.load %arg14[%314, %c0_74, %c0_75] : memref<5x8x96xf32, #tpu.memory_space<vmem>>, vector<1x8x96xf32>
    %316 = vector.shape_cast %315 : vector<1x8x96xf32> to vector<8x96xf32>
    %317 = vector.extract_strided_slice %316 {offsets = [0, 0], sizes = [8, 32], strides = [1, 1]} : vector<8x96xf32> to vector<8x32xf32>
    %318 = vector.extract_strided_slice %316 {offsets = [0, 32], sizes = [8, 32], strides = [1, 1]} : vector<8x96xf32> to vector<8x32xf32>
    %319 = vector.extract_strided_slice %316 {offsets = [0, 64], sizes = [8, 32], strides = [1, 1]} : vector<8x96xf32> to vector<8x32xf32>
    %320 = tpu.concatenate %313, %284 in 1 : vector<8x32xf32>, vector<8x32xf32> -> vector<8x64xf32>
    %cst_76 = arith.constant dense<0.000000e+00> : vector<8x128xf32>
    %321 = tpu.matmul %320, %1, %cst_76 {dimension_numbers = #tpu.dot_dimension_numbers<[1], [0], [0], [1], [0, 0, 1, 1], [], []>} : vector<8x64xf32>, vector<64x128xf32>, vector<8x128xf32> -> vector<8x128xf32>
    %322 = vector.extract_strided_slice %321 {offsets = [0, 0], sizes = [8, 32], strides = [1, 1]} : vector<8x128xf32> to vector<8x32xf32>
    %323 = arith.addf %322, %317 : vector<8x32xf32>
    %324 = arith.negf %323 : vector<8x32xf32>
    %325 = math.exp %324 : vector<8x32xf32>
    %cst_77 = arith.constant 1.000000e+00 : f32
    %326 = vector.broadcast %cst_77 : f32 to vector<8x32xf32>
    %327 = arith.addf %326, %325 : vector<8x32xf32>
    %328 = arith.divf %326, %327 : vector<8x32xf32>
    %329 = vector.extract_strided_slice %321 {offsets = [0, 32], sizes = [8, 32], strides = [1, 1]} : vector<8x128xf32> to vector<8x32xf32>
    %330 = arith.addf %329, %318 : vector<8x32xf32>
    %331 = arith.negf %330 : vector<8x32xf32>
    %332 = math.exp %331 : vector<8x32xf32>
    %cst_78 = arith.constant 1.000000e+00 : f32
    %333 = vector.broadcast %cst_78 : f32 to vector<8x32xf32>
    %334 = arith.addf %333, %332 : vector<8x32xf32>
    %335 = arith.divf %333, %334 : vector<8x32xf32>
    %336 = vector.extract_strided_slice %321 {offsets = [0, 64], sizes = [8, 32], strides = [1, 1]} : vector<8x128xf32> to vector<8x32xf32>
    %337 = arith.addf %336, %319 : vector<8x32xf32>
    %338 = vector.extract_strided_slice %321 {offsets = [0, 96], sizes = [8, 32], strides = [1, 1]} : vector<8x128xf32> to vector<8x32xf32>
    %339 = vector.broadcast %5 : vector<1x32xf32> to vector<8x32xf32>
    %340 = arith.addf %338, %339 : vector<8x32xf32>
    %341 = arith.mulf %328, %340 : vector<8x32xf32>
    %342 = arith.addf %337, %341 : vector<8x32xf32>
    %343 = math.tanh %342 : vector<8x32xf32>
    %cst_79 = arith.constant 1.000000e+00 : f32
    %344 = vector.broadcast %cst_79 : f32 to vector<8x32xf32>
    %345 = arith.subf %344, %335 : vector<8x32xf32>
    %346 = arith.mulf %345, %343 : vector<8x32xf32>
    %347 = arith.mulf %335, %284 : vector<8x32xf32>
    %348 = arith.addf %346, %347 : vector<8x32xf32>
    %349 = arith.index_cast %c0_i32_69 : i32 to index
    %c0_80 = arith.constant 0 : index
    %c0_81 = arith.constant 0 : index
    %350 = vector.load %arg15[%349, %c0_80, %c0_81] : memref<5x8x32xf32, #tpu.memory_space<vmem>>, vector<1x8x32xf32>
    %351 = vector.shape_cast %350 : vector<1x8x32xf32> to vector<8x32xf32>
    %352 = vector.shape_cast %348 : vector<8x32xf32> to vector<1x8x32xf32>
    tpu.vector_store %arg15[%349, %c0_80, %c0_81], %352 {strides = array<i32>} : memref<5x8x32xf32, #tpu.memory_space<vmem>>, vector<1x8x32xf32>,
    %c1_i32_82 = arith.constant 1 : i32
    %cst_83 = arith.constant dense<0.000000e+00> : vector<8x96xf32>
    %353 = tpu.matmul %313, %0, %cst_83 {dimension_numbers = #tpu.dot_dimension_numbers<[1], [0], [0], [1], [0, 0, 1, 1], [], []>} : vector<8x32xf32>, vector<32x96xf32>, vector<8x96xf32> -> vector<8x96xf32>
    %354 = vector.extract_strided_slice %353 {offsets = [0, 0], sizes = [8, 32], strides = [1, 1]} : vector<8x96xf32> to vector<8x32xf32>
    %355 = vector.broadcast %6 : vector<1x32xf32> to vector<8x32xf32>
    %356 = arith.addf %355, %354 : vector<8x32xf32>
    %357 = arith.negf %356 : vector<8x32xf32>
    %358 = math.exp %357 : vector<8x32xf32>
    %cst_84 = arith.constant 1.000000e+00 : f32
    %359 = vector.broadcast %cst_84 : f32 to vector<8x32xf32>
    %360 = arith.addf %359, %358 : vector<8x32xf32>
    %361 = arith.divf %359, %360 : vector<8x32xf32>
    %362 = vector.extract_strided_slice %353 {offsets = [0, 32], sizes = [8, 32], strides = [1, 1]} : vector<8x96xf32> to vector<8x32xf32>
    %363 = vector.broadcast %7 : vector<1x32xf32> to vector<8x32xf32>
    %364 = arith.addf %363, %362 : vector<8x32xf32>
    %365 = arith.negf %364 : vector<8x32xf32>
    %366 = math.exp %365 : vector<8x32xf32>
    %cst_85 = arith.constant 1.000000e+00 : f32
    %367 = vector.broadcast %cst_85 : f32 to vector<8x32xf32>
    %368 = arith.addf %367, %366 : vector<8x32xf32>
    %369 = arith.divf %367, %368 : vector<8x32xf32>
    %370 = vector.extract_strided_slice %353 {offsets = [0, 64], sizes = [8, 32], strides = [1, 1]} : vector<8x96xf32> to vector<8x32xf32>
    %371 = vector.broadcast %3 : vector<1x32xf32> to vector<8x32xf32>
    %372 = arith.addf %370, %371 : vector<8x32xf32>
    %373 = arith.mulf %361, %372 : vector<8x32xf32>
    %374 = vector.broadcast %8 : vector<1x32xf32> to vector<8x32xf32>
    %375 = arith.addf %374, %373 : vector<8x32xf32>
    %376 = math.tanh %375 : vector<8x32xf32>
    %cst_86 = arith.constant 1.000000e+00 : f32
    %377 = vector.broadcast %cst_86 : f32 to vector<8x32xf32>
    %378 = arith.subf %377, %369 : vector<8x32xf32>
    %379 = arith.mulf %378, %376 : vector<8x32xf32>
    %380 = arith.mulf %369, %313 : vector<8x32xf32>
    %381 = arith.addf %379, %380 : vector<8x32xf32>
    %382 = arith.index_cast %c1_i32_82 : i32 to index
    %c0_87 = arith.constant 0 : index
    %c0_88 = arith.constant 0 : index
    %383 = vector.load %arg14[%382, %c0_87, %c0_88] : memref<5x8x96xf32, #tpu.memory_space<vmem>>, vector<1x8x96xf32>
    %384 = vector.shape_cast %383 : vector<1x8x96xf32> to vector<8x96xf32>
    %385 = vector.extract_strided_slice %384 {offsets = [0, 0], sizes = [8, 32], strides = [1, 1]} : vector<8x96xf32> to vector<8x32xf32>
    %386 = vector.extract_strided_slice %384 {offsets = [0, 32], sizes = [8, 32], strides = [1, 1]} : vector<8x96xf32> to vector<8x32xf32>
    %387 = vector.extract_strided_slice %384 {offsets = [0, 64], sizes = [8, 32], strides = [1, 1]} : vector<8x96xf32> to vector<8x32xf32>
    %388 = tpu.concatenate %381, %348 in 1 : vector<8x32xf32>, vector<8x32xf32> -> vector<8x64xf32>
    %cst_89 = arith.constant dense<0.000000e+00> : vector<8x128xf32>
    %389 = tpu.matmul %388, %1, %cst_89 {dimension_numbers = #tpu.dot_dimension_numbers<[1], [0], [0], [1], [0, 0, 1, 1], [], []>} : vector<8x64xf32>, vector<64x128xf32>, vector<8x128xf32> -> vector<8x128xf32>
    %390 = vector.extract_strided_slice %389 {offsets = [0, 0], sizes = [8, 32], strides = [1, 1]} : vector<8x128xf32> to vector<8x32xf32>
    %391 = arith.addf %390, %385 : vector<8x32xf32>
    %392 = arith.negf %391 : vector<8x32xf32>
    %393 = math.exp %392 : vector<8x32xf32>
    %cst_90 = arith.constant 1.000000e+00 : f32
    %394 = vector.broadcast %cst_90 : f32 to vector<8x32xf32>
    %395 = arith.addf %394, %393 : vector<8x32xf32>
    %396 = arith.divf %394, %395 : vector<8x32xf32>
    %397 = vector.extract_strided_slice %389 {offsets = [0, 32], sizes = [8, 32], strides = [1, 1]} : vector<8x128xf32> to vector<8x32xf32>
    %398 = arith.addf %397, %386 : vector<8x32xf32>
    %399 = arith.negf %398 : vector<8x32xf32>
    %400 = math.exp %399 : vector<8x32xf32>
    %cst_91 = arith.constant 1.000000e+00 : f32
    %401 = vector.broadcast %cst_91 : f32 to vector<8x32xf32>
    %402 = arith.addf %401, %400 : vector<8x32xf32>
    %403 = arith.divf %401, %402 : vector<8x32xf32>
    %404 = vector.extract_strided_slice %389 {offsets = [0, 64], sizes = [8, 32], strides = [1, 1]} : vector<8x128xf32> to vector<8x32xf32>
    %405 = arith.addf %404, %387 : vector<8x32xf32>
    %406 = vector.extract_strided_slice %389 {offsets = [0, 96], sizes = [8, 32], strides = [1, 1]} : vector<8x128xf32> to vector<8x32xf32>
    %407 = vector.broadcast %5 : vector<1x32xf32> to vector<8x32xf32>
    %408 = arith.addf %406, %407 : vector<8x32xf32>
    %409 = arith.mulf %396, %408 : vector<8x32xf32>
    %410 = arith.addf %405, %409 : vector<8x32xf32>
    %411 = math.tanh %410 : vector<8x32xf32>
    %cst_92 = arith.constant 1.000000e+00 : f32
    %412 = vector.broadcast %cst_92 : f32 to vector<8x32xf32>
    %413 = arith.subf %412, %403 : vector<8x32xf32>
    %414 = arith.mulf %413, %411 : vector<8x32xf32>
    %415 = arith.mulf %403, %348 : vector<8x32xf32>
    %416 = arith.addf %414, %415 : vector<8x32xf32>
    %417 = arith.index_cast %c1_i32_82 : i32 to index
    %c0_93 = arith.constant 0 : index
    %c0_94 = arith.constant 0 : index
    %418 = vector.load %arg15[%417, %c0_93, %c0_94] : memref<5x8x32xf32, #tpu.memory_space<vmem>>, vector<1x8x32xf32>
    %419 = vector.shape_cast %418 : vector<1x8x32xf32> to vector<8x32xf32>
    %420 = vector.shape_cast %416 : vector<8x32xf32> to vector<1x8x32xf32>
    tpu.vector_store %arg15[%417, %c0_93, %c0_94], %420 {strides = array<i32>} : memref<5x8x32xf32, #tpu.memory_space<vmem>>, vector<1x8x32xf32>,
    %c2_i32_95 = arith.constant 2 : i32
    %cst_96 = arith.constant dense<0.000000e+00> : vector<8x96xf32>
    %421 = tpu.matmul %381, %0, %cst_96 {dimension_numbers = #tpu.dot_dimension_numbers<[1], [0], [0], [1], [0, 0, 1, 1], [], []>} : vector<8x32xf32>, vector<32x96xf32>, vector<8x96xf32> -> vector<8x96xf32>
    %422 = vector.extract_strided_slice %421 {offsets = [0, 0], sizes = [8, 32], strides = [1, 1]} : vector<8x96xf32> to vector<8x32xf32>
    %423 = vector.broadcast %6 : vector<1x32xf32> to vector<8x32xf32>
    %424 = arith.addf %423, %422 : vector<8x32xf32>
    %425 = arith.negf %424 : vector<8x32xf32>
    %426 = math.exp %425 : vector<8x32xf32>
    %cst_97 = arith.constant 1.000000e+00 : f32
    %427 = vector.broadcast %cst_97 : f32 to vector<8x32xf32>
    %428 = arith.addf %427, %426 : vector<8x32xf32>
    %429 = arith.divf %427, %428 : vector<8x32xf32>
    %430 = vector.extract_strided_slice %421 {offsets = [0, 32], sizes = [8, 32], strides = [1, 1]} : vector<8x96xf32> to vector<8x32xf32>
    %431 = vector.broadcast %7 : vector<1x32xf32> to vector<8x32xf32>
    %432 = arith.addf %431, %430 : vector<8x32xf32>
    %433 = arith.negf %432 : vector<8x32xf32>
    %434 = math.exp %433 : vector<8x32xf32>
    %cst_98 = arith.constant 1.000000e+00 : f32
    %435 = vector.broadcast %cst_98 : f32 to vector<8x32xf32>
    %436 = arith.addf %435, %434 : vector<8x32xf32>
    %437 = arith.divf %435, %436 : vector<8x32xf32>
    %438 = vector.extract_strided_slice %421 {offsets = [0, 64], sizes = [8, 32], strides = [1, 1]} : vector<8x96xf32> to vector<8x32xf32>
    %439 = vector.broadcast %3 : vector<1x32xf32> to vector<8x32xf32>
    %440 = arith.addf %438, %439 : vector<8x32xf32>
    %441 = arith.mulf %429, %440 : vector<8x32xf32>
    %442 = vector.broadcast %8 : vector<1x32xf32> to vector<8x32xf32>
    %443 = arith.addf %442, %441 : vector<8x32xf32>
    %444 = math.tanh %443 : vector<8x32xf32>
    %cst_99 = arith.constant 1.000000e+00 : f32
    %445 = vector.broadcast %cst_99 : f32 to vector<8x32xf32>
    %446 = arith.subf %445, %437 : vector<8x32xf32>
    %447 = arith.mulf %446, %444 : vector<8x32xf32>
    %448 = arith.mulf %437, %381 : vector<8x32xf32>
    %449 = arith.addf %447, %448 : vector<8x32xf32>
    %450 = arith.index_cast %c2_i32_95 : i32 to index
    %c0_100 = arith.constant 0 : index
    %c0_101 = arith.constant 0 : index
    %451 = vector.load %arg14[%450, %c0_100, %c0_101] : memref<5x8x96xf32, #tpu.memory_space<vmem>>, vector<1x8x96xf32>
    %452 = vector.shape_cast %451 : vector<1x8x96xf32> to vector<8x96xf32>
    %453 = vector.extract_strided_slice %452 {offsets = [0, 0], sizes = [8, 32], strides = [1, 1]} : vector<8x96xf32> to vector<8x32xf32>
    %454 = vector.extract_strided_slice %452 {offsets = [0, 32], sizes = [8, 32], strides = [1, 1]} : vector<8x96xf32> to vector<8x32xf32>
    %455 = vector.extract_strided_slice %452 {offsets = [0, 64], sizes = [8, 32], strides = [1, 1]} : vector<8x96xf32> to vector<8x32xf32>
    %456 = tpu.concatenate %449, %416 in 1 : vector<8x32xf32>, vector<8x32xf32> -> vector<8x64xf32>
    %cst_102 = arith.constant dense<0.000000e+00> : vector<8x128xf32>
    %457 = tpu.matmul %456, %1, %cst_102 {dimension_numbers = #tpu.dot_dimension_numbers<[1], [0], [0], [1], [0, 0, 1, 1], [], []>} : vector<8x64xf32>, vector<64x128xf32>, vector<8x128xf32> -> vector<8x128xf32>
    %458 = vector.extract_strided_slice %457 {offsets = [0, 0], sizes = [8, 32], strides = [1, 1]} : vector<8x128xf32> to vector<8x32xf32>
    %459 = arith.addf %458, %453 : vector<8x32xf32>
    %460 = arith.negf %459 : vector<8x32xf32>
    %461 = math.exp %460 : vector<8x32xf32>
    %cst_103 = arith.constant 1.000000e+00 : f32
    %462 = vector.broadcast %cst_103 : f32 to vector<8x32xf32>
    %463 = arith.addf %462, %461 : vector<8x32xf32>
    %464 = arith.divf %462, %463 : vector<8x32xf32>
    %465 = vector.extract_strided_slice %457 {offsets = [0, 32], sizes = [8, 32], strides = [1, 1]} : vector<8x128xf32> to vector<8x32xf32>
    %466 = arith.addf %465, %454 : vector<8x32xf32>
    %467 = arith.negf %466 : vector<8x32xf32>
    %468 = math.exp %467 : vector<8x32xf32>
    %cst_104 = arith.constant 1.000000e+00 : f32
    %469 = vector.broadcast %cst_104 : f32 to vector<8x32xf32>
    %470 = arith.addf %469, %468 : vector<8x32xf32>
    %471 = arith.divf %469, %470 : vector<8x32xf32>
    %472 = vector.extract_strided_slice %457 {offsets = [0, 64], sizes = [8, 32], strides = [1, 1]} : vector<8x128xf32> to vector<8x32xf32>
    %473 = arith.addf %472, %455 : vector<8x32xf32>
    %474 = vector.extract_strided_slice %457 {offsets = [0, 96], sizes = [8, 32], strides = [1, 1]} : vector<8x128xf32> to vector<8x32xf32>
    %475 = vector.broadcast %5 : vector<1x32xf32> to vector<8x32xf32>
    %476 = arith.addf %474, %475 : vector<8x32xf32>
    %477 = arith.mulf %464, %476 : vector<8x32xf32>
    %478 = arith.addf %473, %477 : vector<8x32xf32>
    %479 = math.tanh %478 : vector<8x32xf32>
    %cst_105 = arith.constant 1.000000e+00 : f32
    %480 = vector.broadcast %cst_105 : f32 to vector<8x32xf32>
    %481 = arith.subf %480, %471 : vector<8x32xf32>
    %482 = arith.mulf %481, %479 : vector<8x32xf32>
    %483 = arith.mulf %471, %416 : vector<8x32xf32>
    %484 = arith.addf %482, %483 : vector<8x32xf32>
    %485 = arith.index_cast %c2_i32_95 : i32 to index
    %c0_106 = arith.constant 0 : index
    %c0_107 = arith.constant 0 : index
    %486 = vector.load %arg15[%485, %c0_106, %c0_107] : memref<5x8x32xf32, #tpu.memory_space<vmem>>, vector<1x8x32xf32>
    %487 = vector.shape_cast %486 : vector<1x8x32xf32> to vector<8x32xf32>
    %488 = vector.shape_cast %484 : vector<8x32xf32> to vector<1x8x32xf32>
    tpu.vector_store %arg15[%485, %c0_106, %c0_107], %488 {strides = array<i32>} : memref<5x8x32xf32, #tpu.memory_space<vmem>>, vector<1x8x32xf32>,
    %c3_i32_108 = arith.constant 3 : i32
    %cst_109 = arith.constant dense<0.000000e+00> : vector<8x96xf32>
    %489 = tpu.matmul %449, %0, %cst_109 {dimension_numbers = #tpu.dot_dimension_numbers<[1], [0], [0], [1], [0, 0, 1, 1], [], []>} : vector<8x32xf32>, vector<32x96xf32>, vector<8x96xf32> -> vector<8x96xf32>
    %490 = vector.extract_strided_slice %489 {offsets = [0, 0], sizes = [8, 32], strides = [1, 1]} : vector<8x96xf32> to vector<8x32xf32>
    %491 = vector.broadcast %6 : vector<1x32xf32> to vector<8x32xf32>
    %492 = arith.addf %491, %490 : vector<8x32xf32>
    %493 = arith.negf %492 : vector<8x32xf32>
    %494 = math.exp %493 : vector<8x32xf32>
    %cst_110 = arith.constant 1.000000e+00 : f32
    %495 = vector.broadcast %cst_110 : f32 to vector<8x32xf32>
    %496 = arith.addf %495, %494 : vector<8x32xf32>
    %497 = arith.divf %495, %496 : vector<8x32xf32>
    %498 = vector.extract_strided_slice %489 {offsets = [0, 32], sizes = [8, 32], strides = [1, 1]} : vector<8x96xf32> to vector<8x32xf32>
    %499 = vector.broadcast %7 : vector<1x32xf32> to vector<8x32xf32>
    %500 = arith.addf %499, %498 : vector<8x32xf32>
    %501 = arith.negf %500 : vector<8x32xf32>
    %502 = math.exp %501 : vector<8x32xf32>
    %cst_111 = arith.constant 1.000000e+00 : f32
    %503 = vector.broadcast %cst_111 : f32 to vector<8x32xf32>
    %504 = arith.addf %503, %502 : vector<8x32xf32>
    %505 = arith.divf %503, %504 : vector<8x32xf32>
    %506 = vector.extract_strided_slice %489 {offsets = [0, 64], sizes = [8, 32], strides = [1, 1]} : vector<8x96xf32> to vector<8x32xf32>
    %507 = vector.broadcast %3 : vector<1x32xf32> to vector<8x32xf32>
    %508 = arith.addf %506, %507 : vector<8x32xf32>
    %509 = arith.mulf %497, %508 : vector<8x32xf32>
    %510 = vector.broadcast %8 : vector<1x32xf32> to vector<8x32xf32>
    %511 = arith.addf %510, %509 : vector<8x32xf32>
    %512 = math.tanh %511 : vector<8x32xf32>
    %cst_112 = arith.constant 1.000000e+00 : f32
    %513 = vector.broadcast %cst_112 : f32 to vector<8x32xf32>
    %514 = arith.subf %513, %505 : vector<8x32xf32>
    %515 = arith.mulf %514, %512 : vector<8x32xf32>
    %516 = arith.mulf %505, %449 : vector<8x32xf32>
    %517 = arith.addf %515, %516 : vector<8x32xf32>
    %518 = arith.index_cast %c3_i32_108 : i32 to index
    %c0_113 = arith.constant 0 : index
    %c0_114 = arith.constant 0 : index
    %519 = vector.load %arg14[%518, %c0_113, %c0_114] : memref<5x8x96xf32, #tpu.memory_space<vmem>>, vector<1x8x96xf32>
    %520 = vector.shape_cast %519 : vector<1x8x96xf32> to vector<8x96xf32>
    %521 = vector.extract_strided_slice %520 {offsets = [0, 0], sizes = [8, 32], strides = [1, 1]} : vector<8x96xf32> to vector<8x32xf32>
    %522 = vector.extract_strided_slice %520 {offsets = [0, 32], sizes = [8, 32], strides = [1, 1]} : vector<8x96xf32> to vector<8x32xf32>
    %523 = vector.extract_strided_slice %520 {offsets = [0, 64], sizes = [8, 32], strides = [1, 1]} : vector<8x96xf32> to vector<8x32xf32>
    %524 = tpu.concatenate %517, %484 in 1 : vector<8x32xf32>, vector<8x32xf32> -> vector<8x64xf32>
    %cst_115 = arith.constant dense<0.000000e+00> : vector<8x128xf32>
    %525 = tpu.matmul %524, %1, %cst_115 {dimension_numbers = #tpu.dot_dimension_numbers<[1], [0], [0], [1], [0, 0, 1, 1], [], []>} : vector<8x64xf32>, vector<64x128xf32>, vector<8x128xf32> -> vector<8x128xf32>
    %526 = vector.extract_strided_slice %525 {offsets = [0, 0], sizes = [8, 32], strides = [1, 1]} : vector<8x128xf32> to vector<8x32xf32>
    %527 = arith.addf %526, %521 : vector<8x32xf32>
    %528 = arith.negf %527 : vector<8x32xf32>
    %529 = math.exp %528 : vector<8x32xf32>
    %cst_116 = arith.constant 1.000000e+00 : f32
    %530 = vector.broadcast %cst_116 : f32 to vector<8x32xf32>
    %531 = arith.addf %530, %529 : vector<8x32xf32>
    %532 = arith.divf %530, %531 : vector<8x32xf32>
    %533 = vector.extract_strided_slice %525 {offsets = [0, 32], sizes = [8, 32], strides = [1, 1]} : vector<8x128xf32> to vector<8x32xf32>
    %534 = arith.addf %533, %522 : vector<8x32xf32>
    %535 = arith.negf %534 : vector<8x32xf32>
    %536 = math.exp %535 : vector<8x32xf32>
    %cst_117 = arith.constant 1.000000e+00 : f32
    %537 = vector.broadcast %cst_117 : f32 to vector<8x32xf32>
    %538 = arith.addf %537, %536 : vector<8x32xf32>
    %539 = arith.divf %537, %538 : vector<8x32xf32>
    %540 = vector.extract_strided_slice %525 {offsets = [0, 64], sizes = [8, 32], strides = [1, 1]} : vector<8x128xf32> to vector<8x32xf32>
    %541 = arith.addf %540, %523 : vector<8x32xf32>
    %542 = vector.extract_strided_slice %525 {offsets = [0, 96], sizes = [8, 32], strides = [1, 1]} : vector<8x128xf32> to vector<8x32xf32>
    %543 = vector.broadcast %5 : vector<1x32xf32> to vector<8x32xf32>
    %544 = arith.addf %542, %543 : vector<8x32xf32>
    %545 = arith.mulf %532, %544 : vector<8x32xf32>
    %546 = arith.addf %541, %545 : vector<8x32xf32>
    %547 = math.tanh %546 : vector<8x32xf32>
    %cst_118 = arith.constant 1.000000e+00 : f32
    %548 = vector.broadcast %cst_118 : f32 to vector<8x32xf32>
    %549 = arith.subf %548, %539 : vector<8x32xf32>
    %550 = arith.mulf %549, %547 : vector<8x32xf32>
    %551 = arith.mulf %539, %484 : vector<8x32xf32>
    %552 = arith.addf %550, %551 : vector<8x32xf32>
    %553 = arith.index_cast %c3_i32_108 : i32 to index
    %c0_119 = arith.constant 0 : index
    %c0_120 = arith.constant 0 : index
    %554 = vector.load %arg15[%553, %c0_119, %c0_120] : memref<5x8x32xf32, #tpu.memory_space<vmem>>, vector<1x8x32xf32>
    %555 = vector.shape_cast %554 : vector<1x8x32xf32> to vector<8x32xf32>
    %556 = vector.shape_cast %552 : vector<8x32xf32> to vector<1x8x32xf32>
    tpu.vector_store %arg15[%553, %c0_119, %c0_120], %556 {strides = array<i32>} : memref<5x8x32xf32, #tpu.memory_space<vmem>>, vector<1x8x32xf32>,
    %c4_i32_121 = arith.constant 4 : i32
    %cst_122 = arith.constant dense<0.000000e+00> : vector<8x96xf32>
    %557 = tpu.matmul %517, %0, %cst_122 {dimension_numbers = #tpu.dot_dimension_numbers<[1], [0], [0], [1], [0, 0, 1, 1], [], []>} : vector<8x32xf32>, vector<32x96xf32>, vector<8x96xf32> -> vector<8x96xf32>
    %558 = vector.extract_strided_slice %557 {offsets = [0, 0], sizes = [8, 32], strides = [1, 1]} : vector<8x96xf32> to vector<8x32xf32>
    %559 = vector.broadcast %6 : vector<1x32xf32> to vector<8x32xf32>
    %560 = arith.addf %559, %558 : vector<8x32xf32>
    %561 = arith.negf %560 : vector<8x32xf32>
    %562 = math.exp %561 : vector<8x32xf32>
    %cst_123 = arith.constant 1.000000e+00 : f32
    %563 = vector.broadcast %cst_123 : f32 to vector<8x32xf32>
    %564 = arith.addf %563, %562 : vector<8x32xf32>
    %565 = arith.divf %563, %564 : vector<8x32xf32>
    %566 = vector.extract_strided_slice %557 {offsets = [0, 32], sizes = [8, 32], strides = [1, 1]} : vector<8x96xf32> to vector<8x32xf32>
    %567 = vector.broadcast %7 : vector<1x32xf32> to vector<8x32xf32>
    %568 = arith.addf %567, %566 : vector<8x32xf32>
    %569 = arith.negf %568 : vector<8x32xf32>
    %570 = math.exp %569 : vector<8x32xf32>
    %cst_124 = arith.constant 1.000000e+00 : f32
    %571 = vector.broadcast %cst_124 : f32 to vector<8x32xf32>
    %572 = arith.addf %571, %570 : vector<8x32xf32>
    %573 = arith.divf %571, %572 : vector<8x32xf32>
    %574 = vector.extract_strided_slice %557 {offsets = [0, 64], sizes = [8, 32], strides = [1, 1]} : vector<8x96xf32> to vector<8x32xf32>
    %575 = vector.broadcast %3 : vector<1x32xf32> to vector<8x32xf32>
    %576 = arith.addf %574, %575 : vector<8x32xf32>
    %577 = arith.mulf %565, %576 : vector<8x32xf32>
    %578 = vector.broadcast %8 : vector<1x32xf32> to vector<8x32xf32>
    %579 = arith.addf %578, %577 : vector<8x32xf32>
    %580 = math.tanh %579 : vector<8x32xf32>
    %cst_125 = arith.constant 1.000000e+00 : f32
    %581 = vector.broadcast %cst_125 : f32 to vector<8x32xf32>
    %582 = arith.subf %581, %573 : vector<8x32xf32>
    %583 = arith.mulf %582, %580 : vector<8x32xf32>
    %584 = arith.mulf %573, %517 : vector<8x32xf32>
    %585 = arith.addf %583, %584 : vector<8x32xf32>
    %586 = arith.index_cast %c4_i32_121 : i32 to index
    %c0_126 = arith.constant 0 : index
    %c0_127 = arith.constant 0 : index
    %587 = vector.load %arg14[%586, %c0_126, %c0_127] : memref<5x8x96xf32, #tpu.memory_space<vmem>>, vector<1x8x96xf32>
    %588 = vector.shape_cast %587 : vector<1x8x96xf32> to vector<8x96xf32>
    %589 = vector.extract_strided_slice %588 {offsets = [0, 0], sizes = [8, 32], strides = [1, 1]} : vector<8x96xf32> to vector<8x32xf32>
    %590 = vector.extract_strided_slice %588 {offsets = [0, 32], sizes = [8, 32], strides = [1, 1]} : vector<8x96xf32> to vector<8x32xf32>
    %591 = vector.extract_strided_slice %588 {offsets = [0, 64], sizes = [8, 32], strides = [1, 1]} : vector<8x96xf32> to vector<8x32xf32>
    %592 = tpu.concatenate %585, %552 in 1 : vector<8x32xf32>, vector<8x32xf32> -> vector<8x64xf32>
    %cst_128 = arith.constant dense<0.000000e+00> : vector<8x128xf32>
    %593 = tpu.matmul %592, %1, %cst_128 {dimension_numbers = #tpu.dot_dimension_numbers<[1], [0], [0], [1], [0, 0, 1, 1], [], []>} : vector<8x64xf32>, vector<64x128xf32>, vector<8x128xf32> -> vector<8x128xf32>
    %594 = vector.extract_strided_slice %593 {offsets = [0, 0], sizes = [8, 32], strides = [1, 1]} : vector<8x128xf32> to vector<8x32xf32>
    %595 = arith.addf %594, %589 : vector<8x32xf32>
    %596 = arith.negf %595 : vector<8x32xf32>
    %597 = math.exp %596 : vector<8x32xf32>
    %cst_129 = arith.constant 1.000000e+00 : f32
    %598 = vector.broadcast %cst_129 : f32 to vector<8x32xf32>
    %599 = arith.addf %598, %597 : vector<8x32xf32>
    %600 = arith.divf %598, %599 : vector<8x32xf32>
    %601 = vector.extract_strided_slice %593 {offsets = [0, 32], sizes = [8, 32], strides = [1, 1]} : vector<8x128xf32> to vector<8x32xf32>
    %602 = arith.addf %601, %590 : vector<8x32xf32>
    %603 = arith.negf %602 : vector<8x32xf32>
    %604 = math.exp %603 : vector<8x32xf32>
    %cst_130 = arith.constant 1.000000e+00 : f32
    %605 = vector.broadcast %cst_130 : f32 to vector<8x32xf32>
    %606 = arith.addf %605, %604 : vector<8x32xf32>
    %607 = arith.divf %605, %606 : vector<8x32xf32>
    %608 = vector.extract_strided_slice %593 {offsets = [0, 64], sizes = [8, 32], strides = [1, 1]} : vector<8x128xf32> to vector<8x32xf32>
    %609 = arith.addf %608, %591 : vector<8x32xf32>
    %610 = vector.extract_strided_slice %593 {offsets = [0, 96], sizes = [8, 32], strides = [1, 1]} : vector<8x128xf32> to vector<8x32xf32>
    %611 = vector.broadcast %5 : vector<1x32xf32> to vector<8x32xf32>
    %612 = arith.addf %610, %611 : vector<8x32xf32>
    %613 = arith.mulf %600, %612 : vector<8x32xf32>
    %614 = arith.addf %609, %613 : vector<8x32xf32>
    %615 = math.tanh %614 : vector<8x32xf32>
    %cst_131 = arith.constant 1.000000e+00 : f32
    %616 = vector.broadcast %cst_131 : f32 to vector<8x32xf32>
    %617 = arith.subf %616, %607 : vector<8x32xf32>
    %618 = arith.mulf %617, %615 : vector<8x32xf32>
    %619 = arith.mulf %607, %552 : vector<8x32xf32>
    %620 = arith.addf %618, %619 : vector<8x32xf32>
    %621 = arith.index_cast %c4_i32_121 : i32 to index
    %c0_132 = arith.constant 0 : index
    %c0_133 = arith.constant 0 : index
    %622 = vector.load %arg15[%621, %c0_132, %c0_133] : memref<5x8x32xf32, #tpu.memory_space<vmem>>, vector<1x8x32xf32>
    %623 = vector.shape_cast %622 : vector<1x8x32xf32> to vector<8x32xf32>
    %624 = vector.shape_cast %620 : vector<8x32xf32> to vector<1x8x32xf32>
    tpu.vector_store %arg15[%621, %c0_132, %c0_133], %624 {strides = array<i32>} : memref<5x8x32xf32, #tpu.memory_space<vmem>>, vector<1x8x32xf32>,
    %c5_i32 = arith.constant 5 : i32
    %c0_134 = arith.constant 0 : index
    %c0_135 = arith.constant 0 : index
    %c0_136 = arith.constant 0 : index
    %625 = vector.load %arg15[%c0_134, %c0_135, %c0_136] : memref<5x8x32xf32, #tpu.memory_space<vmem>>, vector<5x8x32xf32>
    %626 = vector.shape_cast %625 : vector<5x8x32xf32> to vector<40x32xf32>
    %c0_137 = arith.constant 0 : index
    %c0_138 = arith.constant 0 : index
    %627 = vector.load %arg10[%c0_137, %c0_138] : memref<32x128xf32, #tpu.memory_space<vmem>>, vector<32x128xf32>
    %cst_139 = arith.constant dense<0.000000e+00> : vector<40x128xf32>
    %628 = tpu.matmul %626, %627, %cst_139 {dimension_numbers = #tpu.dot_dimension_numbers<[1], [0], [0], [1], [0, 0, 1, 1], [], []>} : vector<40x32xf32>, vector<32x128xf32>, vector<40x128xf32> -> vector<40x128xf32>
    %c0_140 = arith.constant 0 : index
    %c0_141 = arith.constant 0 : index
    %629 = vector.load %arg11[%c0_140, %c0_141] : memref<1x128xf32, #tpu.memory_space<vmem>>, vector<1x128xf32>
    %630 = vector.broadcast %629 : vector<1x128xf32> to vector<40x128xf32>
    %631 = arith.addf %628, %630 : vector<40x128xf32>
    %cst_142 = arith.constant dense<0xFF800000> : vector<40xf32>
    %632 = vector.multi_reduction <maximumf>, %631, %cst_142 [1] : vector<40x128xf32> to vector<40xf32>
    %cst_143 = arith.constant 0xFF800000 : f32
    %633 = vector.broadcast %cst_143 : f32 to vector<40xf32>
    %634 = arith.maximumf %633, %632 : vector<40xf32>
    %635 = vector.shape_cast %634 : vector<40xf32> to vector<40x1xf32>
    %636 = vector.broadcast %635 : vector<40x1xf32> to vector<40x128xf32>
    %637 = arith.subf %631, %636 : vector<40x128xf32>
    %638 = math.exp %637 : vector<40x128xf32>
    %cst_144 = arith.constant dense<0.000000e+00> : vector<40xf32>
    %639 = vector.multi_reduction <add>, %638, %cst_144 [1] : vector<40x128xf32> to vector<40xf32>
    %640 = vector.shape_cast %639 : vector<40xf32> to vector<40x1xf32>
    %641 = math.log %640 : vector<40x1xf32>
    %642 = vector.broadcast %641 : vector<40x1xf32> to vector<40x128xf32>
    %643 = arith.subf %637, %642 : vector<40x128xf32>
    %644 = vector.shape_cast %643 : vector<40x128xf32> to vector<5x8x128xf32>
    %c0_145 = arith.constant 0 : index
    %c0_146 = arith.constant 0 : index
    %c0_147 = arith.constant 0 : index
    %645 = vector.load %arg12[%c0_145, %c0_146, %c0_147] : memref<5x8x128xf32, #tpu.memory_space<vmem>>, vector<5x8x128xf32>
    tpu.vector_store %arg12[%c0_145, %c0_146, %c0_147], %644 {strides = array<i32>} : memref<5x8x128xf32, #tpu.memory_space<vmem>>, vector<5x8x128xf32>,
    return
  }
}

</mosaic_0001>

<llo_original>
// kernel: s2vt_forward_train.1
$region0: #{s2vt_forward_train.1}
  #allocation0 [shape = 'u32[]', space=smem, size = 0x4, offset = 0x4, fixed_abs, tag = 'smem constant byte address 0x4 - core index']
  #allocation1 [shape = 'u32[144,128]{1,0:T(1,128)}', space=vmem, size = 0x12000, scoped, tag = 'internal scratch']
  #allocation2 [shape = 'f32[4,8,96]{2,1,0:T(8,128)}', space=vmem, size = 0x4000, scoped, tag = 'scratch operand']
  #allocation3 [shape = 'f32[5,8,96]{2,1,0:T(8,128)}', space=vmem, size = 0x5000, scoped, tag = 'scratch operand']
  #allocation4 [shape = 'f32[5,8,32]{2,1,0:T(8,128)}', space=vmem, size = 0x5000, scoped, tag = 'scratch operand']
  %s0 = inlined_call_operand.vmem [shape: f32[4,8,64], index: 0, kind: input, shape index: {}]
  %s1 = inlined_call_operand.vmem [shape: f32[5,8,16], index: 1, kind: input, shape index: {}]
  %s2 = inlined_call_operand.vmem [shape: f32[64,96], index: 2, kind: input, shape index: {}]
  %s3 = inlined_call_operand.vmem [shape: f32[32,96], index: 3, kind: input, shape index: {}]
  %s4 = inlined_call_operand.vmem [shape: f32[1,96], index: 4, kind: input, shape index: {}]
  %s5 = inlined_call_operand.vmem [shape: f32[1,32], index: 5, kind: input, shape index: {}]
  %s6 = inlined_call_operand.vmem [shape: f32[64,128], index: 6, kind: input, shape index: {}]
  %s7 = inlined_call_operand.vmem [shape: f32[16,96], index: 7, kind: input, shape index: {}]
  %s8 = inlined_call_operand.vmem [shape: f32[1,96], index: 8, kind: input, shape index: {}]
  %s9 = inlined_call_operand.vmem [shape: f32[1,32], index: 9, kind: input, shape index: {}]
  %s10 = inlined_call_operand.vmem [shape: f32[32,128], index: 10, kind: input, shape index: {}]
  %s11 = inlined_call_operand.vmem [shape: f32[1,128], index: 11, kind: input, shape index: {}]
  %s12 = inlined_call_operand.vmem [shape: f32[5,8,128], index: 12, kind: output, shape index: {}]
  %s13 = sld [smem:[#allocation0]]
  $region58: #{s2vt_forward_train.1} parent=0
    _
  %s15 = ssub.s32 1, %s13
  %s16 = scalar_select 0, %s15, %s13
  // Predicated region
  $region2: #{s2vt_forward_train.1} parent=0 // pred_check
    _
  $region3: #{s2vt_forward_train.1} parent=0 // pred_check_branch
    %18 = sbr.rel (0) target = $region5
  $region4: #{s2vt_forward_train.1} parent=0 // pred_region
    _
  $region5: #{s2vt_forward_train.1} parent=0 // pred_fallthru
    _
  // Predicated region
  $region6: #{s2vt_forward_train.1} parent=0 // pred_check
    _
  $region7: #{s2vt_forward_train.1} parent=0 // pred_check_branch
    %20 = sbr.rel (0) target = $region9
  $region8: #{s2vt_forward_train.1} parent=0 // pred_region
    _
  $region9: #{s2vt_forward_train.1} parent=0 // pred_fallthru
    _
  // Predicated region
  $region10: #{s2vt_forward_train.1} parent=0 // pred_check
    _
  $region11: #{s2vt_forward_train.1} parent=0 // pred_check_branch
    %22 = sbr.rel (0) target = $region13
  $region12: #{s2vt_forward_train.1} parent=0 // pred_region
    _
  $region13: #{s2vt_forward_train.1} parent=0 // pred_fallthru
    _
  // Predicated region
  $region14: #{s2vt_forward_train.1} parent=0 // pred_check
    _
  $region15: #{s2vt_forward_train.1} parent=0 // pred_check_branch
    %24 = sbr.rel (0) target = $region17
  $region16: #{s2vt_forward_train.1} parent=0 // pred_region
    _
  $region17: #{s2vt_forward_train.1} parent=0 // pred_fallthru
    _
  // Predicated region
  $region18: #{s2vt_forward_train.1} parent=0 // pred_check
    _
  $region19: #{s2vt_forward_train.1} parent=0 // pred_check_branch
    %26 = sbr.rel (0) target = $region21
  $region20: #{s2vt_forward_train.1} parent=0 // pred_region
    _
  $region21: #{s2vt_forward_train.1} parent=0 // pred_fallthru
    _
  // Predicated region
  $region22: #{s2vt_forward_train.1} parent=0 // pred_check
    _
  $region23: #{s2vt_forward_train.1} parent=0 // pred_check_branch
    %28 = sbr.rel (0) target = $region25
  $region24: #{s2vt_forward_train.1} parent=0 // pred_region
    _
  $region25: #{s2vt_forward_train.1} parent=0 // pred_fallthru
    _
  // Predicated region
  $region26: #{s2vt_forward_train.1} parent=0 // pred_check
    _
  $region27: #{s2vt_forward_train.1} parent=0 // pred_check_branch
    %30 = sbr.rel (0) target = $region29
  $region28: #{s2vt_forward_train.1} parent=0 // pred_region
    _
  $region29: #{s2vt_forward_train.1} parent=0 // pred_fallthru
    _
  // Predicated region
  $region30: #{s2vt_forward_train.1} parent=0 // pred_check
    _
  $region31: #{s2vt_forward_train.1} parent=0 // pred_check_branch
    %32 = sbr.rel (0) target = $region33
  $region32: #{s2vt_forward_train.1} parent=0 // pred_region
    _
  $region33: #{s2vt_forward_train.1} parent=0 // pred_fallthru
    _
  // Predicated region
  $region34: #{s2vt_forward_train.1} parent=0 // pred_check
    _
  $region35: #{s2vt_forward_train.1} parent=0 // pred_check_branch
    %34 = sbr.rel (0) target = $region37
  $region36: #{s2vt_forward_train.1} parent=0 // pred_region
    _
  $region37: #{s2vt_forward_train.1} parent=0 // pred_fallthru
    _
  // Predicated region
  $region38: #{s2vt_forward_train.1} parent=0 // pred_check
    _
  $region39: #{s2vt_forward_train.1} parent=0 // pred_check_branch
    %36 = sbr.rel (0) target = $region41
  $region40: #{s2vt_forward_train.1} parent=0 // pred_region
    _
  $region41: #{s2vt_forward_train.1} parent=0 // pred_fallthru
    _
  // Predicated region
  $region42: #{s2vt_forward_train.1} parent=0 // pred_check
    _
  $region43: #{s2vt_forward_train.1} parent=0 // pred_check_branch
    %38 = sbr.rel (0) target = $region45
  $region44: #{s2vt_forward_train.1} parent=0 // pred_region
    _
  $region45: #{s2vt_forward_train.1} parent=0 // pred_fallthru
    _
  // Predicated region
  $region46: #{s2vt_forward_train.1} parent=0 // pred_check
    _
  $region47: #{s2vt_forward_train.1} parent=0 // pred_check_branch
    %40 = sbr.rel (0) target = $region49
  $region48: #{s2vt_forward_train.1} parent=0 // pred_region
    _
  $region49: #{s2vt_forward_train.1} parent=0 // pred_fallthru
    _
  %v41 = vld [vmem:[%s3] sm:$0xff]
  %v42 = vld [vmem:[%s3 + $0x8] sm:$0xff]
  %v43 = vld [vmem:[%s3 + $0x10] sm:$0xff]
  %v44 = vld [vmem:[%s3 + $0x18] sm:$0xff]
  %v45 = vld [vmem:[%s6] sm:$0xff]
  %v46 = vld [vmem:[%s6 + $0x8] sm:$0xff]
  %v47 = vld [vmem:[%s6 + $0x10] sm:$0xff]
  %v48 = vld [vmem:[%s6 + $0x18] sm:$0xff]
  %v49 = vld [vmem:[%s6 + $0x20] sm:$0xff]
  %v50 = vld [vmem:[%s6 + $0x28] sm:$0xff]
  %v51 = vld [vmem:[%s6 + $0x30] sm:$0xff]
  %v52 = vld [vmem:[%s6 + $0x38] sm:$0xff]
  %v53 = vld [vmem:[%s4] sm:$0x1]
  %v54 = vld [vmem:[%s5] sm:$0x1]
  %v55 = vld [vmem:[%s8] sm:$0x1]
  %v56 = vld [vmem:[%s9] sm:$0x1]
  %v57 = vld [vmem:[%s0] sm:$0xff]
  %v58 = vld [vmem:[%s0 + $0x8] sm:$0xff]
  %v59 = vld [vmem:[%s0 + $0x10] sm:$0xff]
  %v60 = vld [vmem:[%s0 + $0x18] sm:$0xff]
  %v61 = vld [vmem:[%s2] sm:$0xff]
  %v62 = vld [vmem:[%s2 + $0x8] sm:$0xff]
  %v63 = vld [vmem:[%s2 + $0x10] sm:$0xff]
  %v64 = vld [vmem:[%s2 + $0x18] sm:$0xff]
  %v65 = vld [vmem:[%s2 + $0x20] sm:$0xff]
  %v66 = vld [vmem:[%s2 + $0x28] sm:$0xff]
  %v67 = vld [vmem:[%s2 + $0x30] sm:$0xff]
  %v68 = vld [vmem:[%s2 + $0x38] sm:$0xff]
  %v70 = vlaneseq
  %v71 = vshrl.u32 %v70, 7
  %v72 = vsub.s32 0, %v71
  %v73 = vrot.slane %v53, %v72
  %vm75 = vcmask 523264
  %v77 = vsel %vm75, %v57, 0
  %v80 = vsel %vm75, %v58, 0
  %v83 = vsel %vm75, %v59, 0
  %v86 = vsel %vm75, %v60, 0
  %88 = vmatprep.subr.mxu0 0.0
  %89 = vmatpush1.msra.mxu0 %v61
  %90 = vmatprep.subr.mxu0 0.0
  %91 = vmatpush1.msra.mxu0 %v62
  %92 = vmatprep.subr.mxu0 0.0
  %93 = vmatpush1.msra.mxu0 %v63
  %94 = vmatprep.subr.mxu0 0.0
  %95 = vmatpush1.msra.mxu0 %v64
  %96 = vmatprep.subr.mxu0 0.0
  %97 = vmatpush1.msra.mxu0 %v65
  %98 = vmatprep.subr.mxu0 0.0
  %99 = vmatpush1.msra.mxu0 %v66
  %100 = vmatprep.subr.mxu0 0.0
  %101 = vmatpush1.msra.mxu0 %v67
  %102 = vmatprep.subr.mxu0 0.0
  %103 = vmatpush1.msra.mxu0 %v68
  %104 = vmatprep.subr.mxu0 0.0
  %105 = vmatpush1.msra.mxu0 0.0
  %106 = vmatprep.subr.mxu0 0.0
  %107 = vmatpush1.msra.mxu0 0.0
  %108 = vmatprep.subr.mxu0 0.0
  %109 = vmatpush1.msra.mxu0 0.0
  %110 = vmatprep.subr.mxu0 0.0
  %111 = vmatpush1.msra.mxu0 0.0
  %112 = vmatprep.subr.mxu0 0.0
  %113 = vmatpush1.msra.mxu0 0.0
  %114 = vmatprep.subr.mxu0 0.0
  %115 = vmatpush1.msra.mxu0 0.0
  %116 = vmatprep.subr.mxu0 0.0
  %117 = vmatpush1.msra.mxu0 0.0
  %118 = vmatprep.subr.mxu0 0.0
  %119 = vmatpush1.msra.mxu0 0.0
  %120 = vmatprep.subr.mxu0 0.0
  %121 = vmatpush1.msra.mxu0 0.0
  %122 = vmatprep.subr.mxu0 0.0
  %123 = vmatpush1.msra.mxu0 0.0
  %124 = vmatprep.subr.mxu0 0.0
  %125 = vmatpush1.msra.mxu0 0.0
  %126 = vmatprep.subr.mxu0 0.0
  %127 = vmatpush1.msra.mxu0 0.0
  %128 = vmatprep.subr.mxu0 0.0
  %129 = vmatpush1.msra.mxu0 0.0
  %130 = vmatprep.subr.mxu0 0.0
  %131 = vmatpush1.msra.mxu0 0.0
  %132 = vmatprep.subr.mxu0 0.0
  %133 = vmatpush1.msra.mxu0 0.0
  %134 = vmatprep.subr.mxu0 0.0
  %135 = vmatpush1.msra.mxu0 0.0
  %136 = vmatprep.subr.mxu0 0.0
  %137 = vmatpush1.msra.mxu0 0.0
  %138 = vmatprep.subr.mxu0 0.0
  %139 = vmatpush1.msra.mxu0 0.0
  %140 = vmatprep.subr.mxu0 0.0
  %141 = vmatpush1.msra.mxu0 0.0
  %142 = vmatprep.subr.mxu0 0.0
  %143 = vmatpush1.msra.mxu0 0.0
  %144 = vmatprep.subr.mxu0 0.0
  %145 = vmatpush1.msra.mxu0 0.0
  %146 = vmatprep.subr.mxu0 0.0
  %147 = vmatpush1.msra.mxu0 0.0
  %148 = vmatprep.subr.mxu0 0.0
  %149 = vmatpush1.msra.mxu0 0.0
  %150 = vmatprep.subr.mxu0 0.0
  %151 = vmatpush1.msra.mxu0 0.0
  %152 = vmatprep.mubr.f32.mxu0 0.0
  %153 = vmatmul.mubr.f32.gmra.mrb[0].mxu0 %v77
  %v154 = vpop.f32.mrb[0].mxu0
  %v155 = vadd.f32 %v73, %v154
  %v156 = vpop.f32.mrb[0].mxu0
  %157 = vmatprep.mubr.f32.mxu0 0.0
  %158 = vmatmul.mubr.f32.gmra.mrb[0].mxu0 %v80
  %v159 = vpop.f32.mrb[0].mxu0
  %v160 = vadd.f32 %v73, %v159
  %v161 = vpop.f32.mrb[0].mxu0
  %162 = vmatprep.mubr.f32.mxu0 0.0
  %163 = vmatmul.mubr.f32.gmra.mrb[0].mxu0 %v83
  %v164 = vpop.f32.mrb[0].mxu0
  %v165 = vadd.f32 %v73, %v164
  %v166 = vpop.f32.mrb[0].mxu0
  %167 = vmatprep.mubr.f32.mxu0 0.0
  %168 = vmatmul.mubr.f32.gmra.mrb[0].mxu0 %v86
  %v169 = vpop.f32.mrb[0].mxu0
  %v170 = vadd.f32 %v73, %v169
  %v171 = vpop.f32.mrb[0].mxu0
  %172 = vdwg.mxu0
  %vm173 = vcmask 785408
  %174 = vst.msk [vmem:[#allocation2] sm:$0xff] %vm173, %v155
  %175 = vst.msk [vmem:[#allocation2 + $0x8] sm:$0xff] %vm173, %v160
  %176 = vst.msk [vmem:[#allocation2 + $0x10] sm:$0xff] %vm173, %v165
  %177 = vst.msk [vmem:[#allocation2 + $0x18] sm:$0xff] %vm173, %v170
  %v178 = vld [vmem:[%s1] sm:$0xff]
  %v179 = vld [vmem:[%s1 + $0x8] sm:$0xff]
  %v180 = vld [vmem:[%s1 + $0x10] sm:$0xff]
  %v181 = vld [vmem:[%s1 + $0x18] sm:$0xff]
  %v182 = vld [vmem:[%s1 + $0x20] sm:$0xff]
  %v183 = vld [vmem:[%s7] sm:$0xff]
  %v184 = vld [vmem:[%s7 + $0x8] sm:$0xff]
  %v186 = vlaneseq
  %v187 = vshrl.u32 %v186, 7
  %v188 = vsub.s32 0, %v187
  %v189 = vrot.slane %v55, %v188
  %vm191 = vcmask 130048
  %v193 = vsel %vm191, %v178, 0
  %v196 = vsel %vm191, %v179, 0
  %v199 = vsel %vm191, %v180, 0
  %v202 = vsel %vm191, %v181, 0
  %v205 = vsel %vm191, %v182, 0
  %207 = vmatprep.subr.mxu0 0.0
  %208 = vmatpush1.msra.mxu0 %v183
  %209 = vmatprep.subr.mxu0 0.0
  %210 = vmatpush1.msra.mxu0 %v184
  %211 = vmatprep.subr.mxu0 0.0
  %212 = vmatpush1.msra.mxu0 0.0
  %213 = vmatprep.subr.mxu0 0.0
  %214 = vmatpush1.msra.mxu0 0.0
  %215 = vmatprep.subr.mxu0 0.0
  %216 = vmatpush1.msra.mxu0 0.0
  %217 = vmatprep.subr.mxu0 0.0
  %218 = vmatpush1.msra.mxu0 0.0
  %219 = vmatprep.subr.mxu0 0.0
  %220 = vmatpush1.msra.mxu0 0.0
  %221 = vmatprep.subr.mxu0 0.0
  %222 = vmatpush1.msra.mxu0 0.0
  %223 = vmatprep.subr.mxu0 0.0
  %224 = vmatpush1.msra.mxu0 0.0
  %225 = vmatprep.subr.mxu0 0.0
  %226 = vmatpush1.msra.mxu0 0.0
  %227 = vmatprep.subr.mxu0 0.0
  %228 = vmatpush1.msra.mxu0 0.0
  %229 = vmatprep.subr.mxu0 0.0
  %230 = vmatpush1.msra.mxu0 0.0
  %231 = vmatprep.subr.mxu0 0.0
  %232 = vmatpush1.msra.mxu0 0.0
  %233 = vmatprep.subr.mxu0 0.0
  %234 = vmatpush1.msra.mxu0 0.0
  %235 = vmatprep.subr.mxu0 0.0
  %236 = vmatpush1.msra.mxu0 0.0
  %237 = vmatprep.subr.mxu0 0.0
  %238 = vmatpush1.msra.mxu0 0.0
  %239 = vmatprep.subr.mxu0 0.0
  %240 = vmatpush1.msra.mxu0 0.0
  %241 = vmatprep.subr.mxu0 0.0
  %242 = vmatpush1.msra.mxu0 0.0
  %243 = vmatprep.subr.mxu0 0.0
  %244 = vmatpush1.msra.mxu0 0.0
  %245 = vmatprep.subr.mxu0 0.0
  %246 = vmatpush1.msra.mxu0 0.0
  %247 = vmatprep.subr.mxu0 0.0
  %248 = vmatpush1.msra.mxu0 0.0
  %249 = vmatprep.subr.mxu0 0.0
  %250 = vmatpush1.msra.mxu0 0.0
  %251 = vmatprep.subr.mxu0 0.0
  %252 = vmatpush1.msra.mxu0 0.0
  %253 = vmatprep.subr.mxu0 0.0
  %254 = vmatpush1.msra.mxu0 0.0
  %255 = vmatprep.subr.mxu0 0.0
  %256 = vmatpush1.msra.mxu0 0.0
  %257 = vmatprep.subr.mxu0 0.0
  %258 = vmatpush1.msra.mxu0 0.0
  %259 = vmatprep.subr.mxu0 0.0
  %260 = vmatpush1.msra.mxu0 0.0
  %261 = vmatprep.subr.mxu0 0.0
  %262 = vmatpush1.msra.mxu0 0.0
  %263 = vmatprep.subr.mxu0 0.0
  %264 = vmatpush1.msra.mxu0 0.0
  %265 = vmatprep.subr.mxu0 0.0
  %266 = vmatpush1.msra.mxu0 0.0
  %267 = vmatprep.subr.mxu0 0.0
  %268 = vmatpush1.msra.mxu0 0.0
  %269 = vmatprep.subr.mxu0 0.0
  %270 = vmatpush1.msra.mxu0 0.0
  %271 = vmatprep.mubr.f32.mxu0 0.0
  %272 = vmatmul.mubr.f32.gmra.mrb[0].mxu0 %v193
  %v273 = vpop.f32.mrb[0].mxu0
  %v274 = vadd.f32 %v189, %v273
  %v275 = vpop.f32.mrb[0].mxu0
  %276 = vmatprep.mubr.f32.mxu0 0.0
  %277 = vmatmul.mubr.f32.gmra.mrb[0].mxu0 %v196
  %v278 = vpop.f32.mrb[0].mxu0
  %v279 = vadd.f32 %v189, %v278
  %v280 = vpop.f32.mrb[0].mxu0
  %281 = vmatprep.mubr.f32.mxu0 0.0
  %282 = vmatmul.mubr.f32.gmra.mrb[0].mxu0 %v199
  %v283 = vpop.f32.mrb[0].mxu0
  %v284 = vadd.f32 %v189, %v283
  %v285 = vpop.f32.mrb[0].mxu0
  %286 = vmatprep.mubr.f32.mxu0 0.0
  %287 = vmatmul.mubr.f32.gmra.mrb[0].mxu0 %v202
  %v288 = vpop.f32.mrb[0].mxu0
  %v289 = vadd.f32 %v189, %v288
  %v290 = vpop.f32.mrb[0].mxu0
  %291 = vmatprep.mubr.f32.mxu0 0.0
  %292 = vmatmul.mubr.f32.gmra.mrb[0].mxu0 %v205
  %v293 = vpop.f32.mrb[0].mxu0
  %v294 = vadd.f32 %v189, %v293
  %v295 = vpop.f32.mrb[0].mxu0
  %296 = vdwg.mxu0
  %297 = vst.msk [vmem:[#allocation3] sm:$0xff] %vm173, %v274
  %298 = vst.msk [vmem:[#allocation3 + $0x8] sm:$0xff] %vm173, %v279
  %299 = vst.msk [vmem:[#allocation3 + $0x10] sm:$0xff] %vm173, %v284
  %300 = vst.msk [vmem:[#allocation3 + $0x18] sm:$0xff] %vm173, %v289
  %301 = vst.msk [vmem:[#allocation3 + $0x20] sm:$0xff] %vm173, %v294
  %v302 = vld [vmem:[#allocation2] sm:$0xff]
  %vm303 = vcmask 261120
  %v305 = vsel %vm303, 0.0, 0
  %307 = vmatprep.subr.mxu0 0.0
  %308 = vmatpush1.msra.mxu0 %v41
  %309 = vmatprep.subr.mxu0 0.0
  %310 = vmatpush1.msra.mxu0 %v42
  %311 = vmatprep.subr.mxu0 0.0
  %312 = vmatpush1.msra.mxu0 %v43
  %313 = vmatprep.subr.mxu0 0.0
  %314 = vmatpush1.msra.mxu0 %v44
  %315 = vmatprep.subr.mxu0 0.0
  %316 = vmatpush1.msra.mxu0 0.0
  %317 = vmatprep.subr.mxu0 0.0
  %318 = vmatpush1.msra.mxu0 0.0
  %319 = vmatprep.subr.mxu0 0.0
  %320 = vmatpush1.msra.mxu0 0.0
  %321 = vmatprep.subr.mxu0 0.0
  %322 = vmatpush1.msra.mxu0 0.0
  %323 = vmatprep.subr.mxu0 0.0
  %324 = vmatpush1.msra.mxu0 0.0
  %325 = vmatprep.subr.mxu0 0.0
  %326 = vmatpush1.msra.mxu0 0.0
  %327 = vmatprep.subr.mxu0 0.0
  %328 = vmatpush1.msra.mxu0 0.0
  %329 = vmatprep.subr.mxu0 0.0
  %330 = vmatpush1.msra.mxu0 0.0
  %331 = vmatprep.subr.mxu0 0.0
  %332 = vmatpush1.msra.mxu0 0.0
  %333 = vmatprep.subr.mxu0 0.0
  %334 = vmatpush1.msra.mxu0 0.0
  %335 = vmatprep.subr.mxu0 0.0
  %336 = vmatpush1.msra.mxu0 0.0
  %337 = vmatprep.subr.mxu0 0.0
  %338 = vmatpush1.msra.mxu0 0.0
  %339 = vmatprep.subr.mxu0 0.0
  %340 = vmatpush1.msra.mxu0 0.0
  %341 = vmatprep.subr.mxu0 0.0
  %342 = vmatpush1.msra.mxu0 0.0
  %343 = vmatprep.subr.mxu0 0.0
  %344 = vmatpush1.msra.mxu0 0.0
  %345 = vmatprep.subr.mxu0 0.0
  %346 = vmatpush1.msra.mxu0 0.0
  %347 = vmatprep.subr.mxu0 0.0
  %348 = vmatpush1.msra.mxu0 0.0
  %349 = vmatprep.subr.mxu0 0.0
  %350 = vmatpush1.msra.mxu0 0.0
  %351 = vmatprep.subr.mxu0 0.0
  %352 = vmatpush1.msra.mxu0 0.0
  %353 = vmatprep.subr.mxu0 0.0
  %354 = vmatpush1.msra.mxu0 0.0
  %355 = vmatprep.subr.mxu0 0.0
  %356 = vmatpush1.msra.mxu0 0.0
  %357 = vmatprep.subr.mxu0 0.0
  %358 = vmatpush1.msra.mxu0 0.0
  %359 = vmatprep.subr.mxu0 0.0
  %360 = vmatpush1.msra.mxu0 0.0
  %361 = vmatprep.subr.mxu0 0.0
  %362 = vmatpush1.msra.mxu0 0.0
  %363 = vmatprep.subr.mxu0 0.0
  %364 = vmatpush1.msra.mxu0 0.0
  %365 = vmatprep.subr.mxu0 0.0
  %366 = vmatpush1.msra.mxu0 0.0
  %367 = vmatprep.subr.mxu0 0.0
  %368 = vmatpush1.msra.mxu0 0.0
  %369 = vmatprep.subr.mxu0 0.0
  %370 = vmatpush1.msra.mxu0 0.0
  %371 = vmatprep.mubr.f32.mxu0 0.0
  %372 = vmatmul.mubr.f32.gmra.mrb[0].mxu0 %v305
  %v373 = vpop.f32.mrb[0].mxu0
  %v374 = vadd.f32 0.0, %v373
  %v375 = vpop.f32.mrb[0].mxu0
  %376 = vdwg.mxu0
  %v377 = vadd.f32 %v302, %v374
  %v378 = vxor.u32 %v377, 2147483648
  %v379 = vmul.f32 %v378, 1.442695
  %v380 = vpow.pop %v379
  %v381 = vadd.f32 %v380, 1.0
  %v382 = vrcp.pop %v381
  %v383 = vmul.f32 1.0, %v382
  %v385 = vlaneseq
  %v386 = vshrl.u32 %v385, 7
  %v387 = vsub.s32 0, %v386
  %v388 = vrot.slane %v54, %v387
  %389 = vrot.lane.b32.xlu0 %v388, 64
  %v390 = vpop.permute.xlu0 %389
  %v392 = vadd.f32 %v374, %v390
  %394 = vrot.lane.b32.xlu0 %v392, 64
  %v395 = vpop.permute.xlu0 %394
  %v397 = vmul.f32 %v383, %v395
  %399 = vrot.lane.b32.xlu0 %v397, 64
  %v400 = vpop.permute.xlu0 %399
  %v402 = vadd.f32 %v302, %v400
  %v403 = vtanh.pop %v402
  %v404 = vsub.f32 1.0, %v383
  %406 = vrot.lane.b32.xlu0 %v403, 96
  %v407 = vpop.permute.xlu0 %406
  %v409 = vmul.f32 %v404, %v407
  %v410 = vmul.f32 %v383, 0.0
  %v411 = vadd.f32 %v409, %v410
  %413 = vrot.lane.b32.xlu0 %v411, 96
  %v414 = vpop.permute.xlu0 %413
  %v416 = vsel %vm303, %v414, 0.0
  %v418 = vsel %vm75, %v416, 0
  %420 = vmatprep.subr.mxu0 0.0
  %421 = vmatpush1.msra.mxu0 %v45
  %422 = vmatprep.subr.mxu0 0.0
  %423 = vmatpush1.msra.mxu0 %v46
  %424 = vmatprep.subr.mxu0 0.0
  %425 = vmatpush1.msra.mxu0 %v47
  %426 = vmatprep.subr.mxu0 0.0
  %427 = vmatpush1.msra.mxu0 %v48
  %428 = vmatprep.subr.mxu0 0.0
  %429 = vmatpush1.msra.mxu0 %v49
  %430 = vmatprep.subr.mxu0 0.0
  %431 = vmatpush1.msra.mxu0 %v50
  %432 = vmatprep.subr.mxu0 0.0
  %433 = vmatpush1.msra.mxu0 %v51
  %434 = vmatprep.subr.mxu0 0.0
  %435 = vmatpush1.msra.mxu0 %v52
  %436 = vmatprep.subr.mxu0 0.0
  %437 = vmatpush1.msra.mxu0 0.0
  %438 = vmatprep.subr.mxu0 0.0
  %439 = vmatpush1.msra.mxu0 0.0
  %440 = vmatprep.subr.mxu0 0.0
  %441 = vmatpush1.msra.mxu0 0.0
  %442 = vmatprep.subr.mxu0 0.0
  %443 = vmatpush1.msra.mxu0 0.0
  %444 = vmatprep.subr.mxu0 0.0
  %445 = vmatpush1.msra.mxu0 0.0
  %446 = vmatprep.subr.mxu0 0.0
  %447 = vmatpush1.msra.mxu0 0.0
  %448 = vmatprep.subr.mxu0 0.0
  %449 = vmatpush1.msra.mxu0 0.0
  %450 = vmatprep.subr.mxu0 0.0
  %451 = vmatpush1.msra.mxu0 0.0
  %452 = vmatprep.subr.mxu0 0.0
  %453 = vmatpush1.msra.mxu0 0.0
  %454 = vmatprep.subr.mxu0 0.0
  %455 = vmatpush1.msra.mxu0 0.0
  %456 = vmatprep.subr.mxu0 0.0
  %457 = vmatpush1.msra.mxu0 0.0
  %458 = vmatprep.subr.mxu0 0.0
  %459 = vmatpush1.msra.mxu0 0.0
  %460 = vmatprep.subr.mxu0 0.0
  %461 = vmatpush1.msra.mxu0 0.0
  %462 = vmatprep.subr.mxu0 0.0
  %463 = vmatpush1.msra.mxu0 0.0
  %464 = vmatprep.subr.mxu0 0.0
  %465 = vmatpush1.msra.mxu0 0.0
  %466 = vmatprep.subr.mxu0 0.0
  %467 = vmatpush1.msra.mxu0 0.0
  %468 = vmatprep.subr.mxu0 0.0
  %469 = vmatpush1.msra.mxu0 0.0
  %470 = vmatprep.subr.mxu0 0.0
  %471 = vmatpush1.msra.mxu0 0.0
  %472 = vmatprep.subr.mxu0 0.0
  %473 = vmatpush1.msra.mxu0 0.0
  %474 = vmatprep.subr.mxu0 0.0
  %475 = vmatpush1.msra.mxu0 0.0
  %476 = vmatprep.subr.mxu0 0.0
  %477 = vmatpush1.msra.mxu0 0.0
  %478 = vmatprep.subr.mxu0 0.0
  %479 = vmatpush1.msra.mxu0 0.0
  %480 = vmatprep.subr.mxu0 0.0
  %481 = vmatpush1.msra.mxu0 0.0
  %482 = vmatprep.subr.mxu0 0.0
  %483 = vmatpush1.msra.mxu0 0.0
  %484 = vmatprep.mubr.f32.mxu0 0.0
  %485 = vmatmul.mubr.f32.gmra.mrb[0].mxu0 %v418
  %v486 = vpop.f32.mrb[0].mxu0
  %v487 = vadd.f32 0.0, %v486
  %v488 = vpop.f32.mrb[0].mxu0
  %489 = vdwg.mxu0
  %v490 = vadd.f32 %v487, %v189
  %v491 = vxor.u32 %v490, 2147483648
  %v492 = vmul.f32 %v491, 1.442695
  %v493 = vpow.pop %v492
  %v494 = vadd.f32 %v493, 1.0
  %v495 = vrcp.pop %v494
  %v496 = vmul.f32 1.0, %v495
  %v498 = vlaneseq
  %v499 = vshrl.u32 %v498, 7
  %v500 = vsub.s32 0, %v499
  %v501 = vrot.slane %v56, %v500
  %502 = vrot.lane.b32.xlu0 %v501, 96
  %v503 = vpop.permute.xlu0 %502
  %v505 = vadd.f32 %v487, %v503
  %507 = vrot.lane.b32.xlu0 %v505, 32
  %v508 = vpop.permute.xlu0 %507
  %v510 = vmul.f32 %v496, %v508
  %512 = vrot.lane.b32.xlu0 %v510, 64
  %v513 = vpop.permute.xlu0 %512
  %v515 = vadd.f32 %v490, %v513
  %v516 = vtanh.pop %v515
  %v517 = vsub.f32 1.0, %v496
  %519 = vrot.lane.b32.xlu0 %v516, 96
  %v520 = vpop.permute.xlu0 %519
  %v522 = vmul.f32 %v517, %v520
  %v523 = vmul.f32 %v496, 0.0
  %v524 = vadd.f32 %v522, %v523
  %s525 = scalar_lea.vmem [#allocation2], 8
  %v526 = vld [vmem:[%s525] sm:$0xff]
  %v527 = vsel %vm303, %v414, 0
  %529 = vmatprep.subr.mxu0 0.0
  %530 = vmatpush1.msra.mxu0 %v41
  %531 = vmatprep.subr.mxu0 0.0
  %532 = vmatpush1.msra.mxu0 %v42
  %533 = vmatprep.subr.mxu0 0.0
  %534 = vmatpush1.msra.mxu0 %v43
  %535 = vmatprep.subr.mxu0 0.0
  %536 = vmatpush1.msra.mxu0 %v44
  %537 = vmatprep.subr.mxu0 0.0
  %538 = vmatpush1.msra.mxu0 0.0
  %539 = vmatprep.subr.mxu0 0.0
  %540 = vmatpush1.msra.mxu0 0.0
  %541 = vmatprep.subr.mxu0 0.0
  %542 = vmatpush1.msra.mxu0 0.0
  %543 = vmatprep.subr.mxu0 0.0
  %544 = vmatpush1.msra.mxu0 0.0
  %545 = vmatprep.subr.mxu0 0.0
  %546 = vmatpush1.msra.mxu0 0.0
  %547 = vmatprep.subr.mxu0 0.0
  %548 = vmatpush1.msra.mxu0 0.0
  %549 = vmatprep.subr.mxu0 0.0
  %550 = vmatpush1.msra.mxu0 0.0
  %551 = vmatprep.subr.mxu0 0.0
  %552 = vmatpush1.msra.mxu0 0.0
  %553 = vmatprep.subr.mxu0 0.0
  %554 = vmatpush1.msra.mxu0 0.0
  %555 = vmatprep.subr.mxu0 0.0
  %556 = vmatpush1.msra.mxu0 0.0
  %557 = vmatprep.subr.mxu0 0.0
  %558 = vmatpush1.msra.mxu0 0.0
  %559 = vmatprep.subr.mxu0 0.0
  %560 = vmatpush1.msra.mxu0 0.0
  %561 = vmatprep.subr.mxu0 0.0
  %562 = vmatpush1.msra.mxu0 0.0
  %563 = vmatprep.subr.mxu0 0.0
  %564 = vmatpush1.msra.mxu0 0.0
  %565 = vmatprep.subr.mxu0 0.0
  %566 = vmatpush1.msra.mxu0 0.0
  %567 = vmatprep.subr.mxu0 0.0
  %568 = vmatpush1.msra.mxu0 0.0
  %569 = vmatprep.subr.mxu0 0.0
  %570 = vmatpush1.msra.mxu0 0.0
  %571 = vmatprep.subr.mxu0 0.0
  %572 = vmatpush1.msra.mxu0 0.0
  %573 = vmatprep.subr.mxu0 0.0
  %574 = vmatpush1.msra.mxu0 0.0
  %575 = vmatprep.subr.mxu0 0.0
  %576 = vmatpush1.msra.mxu0 0.0
  %577 = vmatprep.subr.mxu0 0.0
  %578 = vmatpush1.msra.mxu0 0.0
  %579 = vmatprep.subr.mxu0 0.0
  %580 = vmatpush1.msra.mxu0 0.0
  %581 = vmatprep.subr.mxu0 0.0
  %582 = vmatpush1.msra.mxu0 0.0
  %583 = vmatprep.subr.mxu0 0.0
  %584 = vmatpush1.msra.mxu0 0.0
  %585 = vmatprep.subr.mxu0 0.0
  %586 = vmatpush1.msra.mxu0 0.0
  %587 = vmatprep.subr.mxu0 0.0
  %588 = vmatpush1.msra.mxu0 0.0
  %589 = vmatprep.subr.mxu0 0.0
  %590 = vmatpush1.msra.mxu0 0.0
  %591 = vmatprep.subr.mxu0 0.0
  %592 = vmatpush1.msra.mxu0 0.0
  %593 = vmatprep.mubr.f32.mxu0 0.0
  %594 = vmatmul.mubr.f32.gmra.mrb[0].mxu0 %v527
  %v595 = vpop.f32.mrb[0].mxu0
  %v596 = vadd.f32 0.0, %v595
  %v597 = vpop.f32.mrb[0].mxu0
  %598 = vdwg.mxu0
  %v599 = vadd.f32 %v526, %v596
  %v600 = vxor.u32 %v599, 2147483648
  %v601 = vmul.f32 %v600, 1.442695
  %v602 = vpow.pop %v601
  %v603 = vadd.f32 %v602, 1.0
  %v604 = vrcp.pop %v603
  %v605 = vmul.f32 1.0, %v604
  %v606 = vadd.f32 %v596, %v390
  %608 = vrot.lane.b32.xlu0 %v606, 64
  %v609 = vpop.permute.xlu0 %608
  %v611 = vmul.f32 %v605, %v609
  %613 = vrot.lane.b32.xlu0 %v611, 64
  %v614 = vpop.permute.xlu0 %613
  %v616 = vadd.f32 %v526, %v614
  %v617 = vtanh.pop %v616
  %v618 = vsub.f32 1.0, %v605
  %620 = vrot.lane.b32.xlu0 %v617, 96
  %v621 = vpop.permute.xlu0 %620
  %v623 = vmul.f32 %v618, %v621
  %v624 = vmul.f32 %v605, %v411
  %v625 = vadd.f32 %v623, %v624
  %627 = vrot.lane.b32.xlu0 %v625, 96
  %v628 = vpop.permute.xlu0 %627
  %v630 = vsel %vm303, %v628, %v524
  %v632 = vsel %vm75, %v630, 0
  %634 = vmatprep.subr.mxu0 0.0
  %635 = vmatpush1.msra.mxu0 %v45
  %636 = vmatprep.subr.mxu0 0.0
  %637 = vmatpush1.msra.mxu0 %v46
  %638 = vmatprep.subr.mxu0 0.0
  %639 = vmatpush1.msra.mxu0 %v47
  %640 = vmatprep.subr.mxu0 0.0
  %641 = vmatpush1.msra.mxu0 %v48
  %642 = vmatprep.subr.mxu0 0.0
  %643 = vmatpush1.msra.mxu0 %v49
  %644 = vmatprep.subr.mxu0 0.0
  %645 = vmatpush1.msra.mxu0 %v50
  %646 = vmatprep.subr.mxu0 0.0
  %647 = vmatpush1.msra.mxu0 %v51
  %648 = vmatprep.subr.mxu0 0.0
  %649 = vmatpush1.msra.mxu0 %v52
  %650 = vmatprep.subr.mxu0 0.0
  %651 = vmatpush1.msra.mxu0 0.0
  %652 = vmatprep.subr.mxu0 0.0
  %653 = vmatpush1.msra.mxu0 0.0
  %654 = vmatprep.subr.mxu0 0.0
  %655 = vmatpush1.msra.mxu0 0.0
  %656 = vmatprep.subr.mxu0 0.0
  %657 = vmatpush1.msra.mxu0 0.0
  %658 = vmatprep.subr.mxu0 0.0
  %659 = vmatpush1.msra.mxu0 0.0
  %660 = vmatprep.subr.mxu0 0.0
  %661 = vmatpush1.msra.mxu0 0.0
  %662 = vmatprep.subr.mxu0 0.0
  %663 = vmatpush1.msra.mxu0 0.0
  %664 = vmatprep.subr.mxu0 0.0
  %665 = vmatpush1.msra.mxu0 0.0
  %666 = vmatprep.subr.mxu0 0.0
  %667 = vmatpush1.msra.mxu0 0.0
  %668 = vmatprep.subr.mxu0 0.0
  %669 = vmatpush1.msra.mxu0 0.0
  %670 = vmatprep.subr.mxu0 0.0
  %671 = vmatpush1.msra.mxu0 0.0
  %672 = vmatprep.subr.mxu0 0.0
  %673 = vmatpush1.msra.mxu0 0.0
  %674 = vmatprep.subr.mxu0 0.0
  %675 = vmatpush1.msra.mxu0 0.0
  %676 = vmatprep.subr.mxu0 0.0
  %677 = vmatpush1.msra.mxu0 0.0
  %678 = vmatprep.subr.mxu0 0.0
  %679 = vmatpush1.msra.mxu0 0.0
  %680 = vmatprep.subr.mxu0 0.0
  %681 = vmatpush1.msra.mxu0 0.0
  %682 = vmatprep.subr.mxu0 0.0
  %683 = vmatpush1.msra.mxu0 0.0
  %684 = vmatprep.subr.mxu0 0.0
  %685 = vmatpush1.msra.mxu0 0.0
  %686 = vmatprep.subr.mxu0 0.0
  %687 = vmatpush1.msra.mxu0 0.0
  %688 = vmatprep.subr.mxu0 0.0
  %689 = vmatpush1.msra.mxu0 0.0
  %690 = vmatprep.subr.mxu0 0.0
  %691 = vmatpush1.msra.mxu0 0.0
  %692 = vmatprep.subr.mxu0 0.0
  %693 = vmatpush1.msra.mxu0 0.0
  %694 = vmatprep.subr.mxu0 0.0
  %695 = vmatpush1.msra.mxu0 0.0
  %696 = vmatprep.subr.mxu0 0.0
  %697 = vmatpush1.msra.mxu0 0.0
  %698 = vmatprep.mubr.f32.mxu0 0.0
  %699 = vmatmul.mubr.f32.gmra.mrb[0].mxu0 %v632
  %v700 = vpop.f32.mrb[0].mxu0
  %v701 = vadd.f32 0.0, %v700
  %v702 = vpop.f32.mrb[0].mxu0
  %703 = vdwg.mxu0
  %v704 = vadd.f32 %v701, %v189
  %v705 = vxor.u32 %v704, 2147483648
  %v706 = vmul.f32 %v705, 1.442695
  %v707 = vpow.pop %v706
  %v708 = vadd.f32 %v707, 1.0
  %v709 = vrcp.pop %v708
  %v710 = vmul.f32 1.0, %v709
  %v711 = vadd.f32 %v701, %v503
  %713 = vrot.lane.b32.xlu0 %v711, 32
  %v714 = vpop.permute.xlu0 %713
  %v716 = vmul.f32 %v710, %v714
  %718 = vrot.lane.b32.xlu0 %v716, 64
  %v719 = vpop.permute.xlu0 %718
  %v721 = vadd.f32 %v704, %v719
  %v722 = vtanh.pop %v721
  %v723 = vsub.f32 1.0, %v710
  %725 = vrot.lane.b32.xlu0 %v722, 96
  %v726 = vpop.permute.xlu0 %725
  %v728 = vmul.f32 %v723, %v726
  %v729 = vmul.f32 %v710, %v524
  %v730 = vadd.f32 %v728, %v729
  %s731 = scalar_lea.vmem [#allocation2], 16
  %v732 = vld [vmem:[%s731] sm:$0xff]
  %v733 = vsel %vm303, %v628, 0
  %735 = vmatprep.subr.mxu0 0.0
  %736 = vmatpush1.msra.mxu0 %v41
  %737 = vmatprep.subr.mxu0 0.0
  %738 = vmatpush1.msra.mxu0 %v42
  %739 = vmatprep.subr.mxu0 0.0
  %740 = vmatpush1.msra.mxu0 %v43
  %741 = vmatprep.subr.mxu0 0.0
  %742 = vmatpush1.msra.mxu0 %v44
  %743 = vmatprep.subr.mxu0 0.0
  %744 = vmatpush1.msra.mxu0 0.0
  %745 = vmatprep.subr.mxu0 0.0
  %746 = vmatpush1.msra.mxu0 0.0
  %747 = vmatprep.subr.mxu0 0.0
  %748 = vmatpush1.msra.mxu0 0.0
  %749 = vmatprep.subr.mxu0 0.0
  %750 = vmatpush1.msra.mxu0 0.0
  %751 = vmatprep.subr.mxu0 0.0
  %752 = vmatpush1.msra.mxu0 0.0
  %753 = vmatprep.subr.mxu0 0.0
  %754 = vmatpush1.msra.mxu0 0.0
  %755 = vmatprep.subr.mxu0 0.0
  %756 = vmatpush1.msra.mxu0 0.0
  %757 = vmatprep.subr.mxu0 0.0
  %758 = vmatpush1.msra.mxu0 0.0
  %759 = vmatprep.subr.mxu0 0.0
  %760 = vmatpush1.msra.mxu0 0.0
  %761 = vmatprep.subr.mxu0 0.0
  %762 = vmatpush1.msra.mxu0 0.0
  %763 = vmatprep.subr.mxu0 0.0
  %764 = vmatpush1.msra.mxu0 0.0
  %765 = vmatprep.subr.mxu0 0.0
  %766 = vmatpush1.msra.mxu0 0.0
  %767 = vmatprep.subr.mxu0 0.0
  %768 = vmatpush1.msra.mxu0 0.0
  %769 = vmatprep.subr.mxu0 0.0
  %770 = vmatpush1.msra.mxu0 0.0
  %771 = vmatprep.subr.mxu0 0.0
  %772 = vmatpush1.msra.mxu0 0.0
  %773 = vmatprep.subr.mxu0 0.0
  %774 = vmatpush1.msra.mxu0 0.0
  %775 = vmatprep.subr.mxu0 0.0
  %776 = vmatpush1.msra.mxu0 0.0
  %777 = vmatprep.subr.mxu0 0.0
  %778 = vmatpush1.msra.mxu0 0.0
  %779 = vmatprep.subr.mxu0 0.0
  %780 = vmatpush1.msra.mxu0 0.0
  %781 = vmatprep.subr.mxu0 0.0
  %782 = vmatpush1.msra.mxu0 0.0
  %783 = vmatprep.subr.mxu0 0.0
  %784 = vmatpush1.msra.mxu0 0.0
  %785 = vmatprep.subr.mxu0 0.0
  %786 = vmatpush1.msra.mxu0 0.0
  %787 = vmatprep.subr.mxu0 0.0
  %788 = vmatpush1.msra.mxu0 0.0
  %789 = vmatprep.subr.mxu0 0.0
  %790 = vmatpush1.msra.mxu0 0.0
  %791 = vmatprep.subr.mxu0 0.0
  %792 = vmatpush1.msra.mxu0 0.0
  %793 = vmatprep.subr.mxu0 0.0
  %794 = vmatpush1.msra.mxu0 0.0
  %795 = vmatprep.subr.mxu0 0.0
  %796 = vmatpush1.msra.mxu0 0.0
  %797 = vmatprep.subr.mxu0 0.0
  %798 = vmatpush1.msra.mxu0 0.0
  %799 = vmatprep.mubr.f32.mxu0 0.0
  %800 = vmatmul.mubr.f32.gmra.mrb[0].mxu0 %v733
  %v801 = vpop.f32.mrb[0].mxu0
  %v802 = vadd.f32 0.0, %v801
  %v803 = vpop.f32.mrb[0].mxu0
  %804 = vdwg.mxu0
  %v805 = vadd.f32 %v732, %v802
  %v806 = vxor.u32 %v805, 2147483648
  %v807 = vmul.f32 %v806, 1.442695
  %v808 = vpow.pop %v807
  %v809 = vadd.f32 %v808, 1.0
  %v810 = vrcp.pop %v809
  %v811 = vmul.f32 1.0, %v810
  %v812 = vadd.f32 %v802, %v390
  %814 = vrot.lane.b32.xlu0 %v812, 64
  %v815 = vpop.permute.xlu0 %814
  %v817 = vmul.f32 %v811, %v815
  %819 = vrot.lane.b32.xlu0 %v817, 64
  %v820 = vpop.permute.xlu0 %819
  %v822 = vadd.f32 %v732, %v820
  %v823 = vtanh.pop %v822
  %v824 = vsub.f32 1.0, %v811
  %826 = vrot.lane.b32.xlu0 %v823, 96
  %v827 = vpop.permute.xlu0 %826
  %v829 = vmul.f32 %v824, %v827
  %v830 = vmul.f32 %v811, %v625
  %v831 = vadd.f32 %v829, %v830
  %833 = vrot.lane.b32.xlu0 %v831, 96
  %v834 = vpop.permute.xlu0 %833
  %v836 = vsel %vm303, %v834, %v730
  %v838 = vsel %vm75, %v836, 0
  %840 = vmatprep.subr.mxu0 0.0
  %841 = vmatpush1.msra.mxu0 %v45
  %842 = vmatprep.subr.mxu0 0.0
  %843 = vmatpush1.msra.mxu0 %v46
  %844 = vmatprep.subr.mxu0 0.0
  %845 = vmatpush1.msra.mxu0 %v47
  %846 = vmatprep.subr.mxu0 0.0
  %847 = vmatpush1.msra.mxu0 %v48
  %848 = vmatprep.subr.mxu0 0.0
  %849 = vmatpush1.msra.mxu0 %v49
  %850 = vmatprep.subr.mxu0 0.0
  %851 = vmatpush1.msra.mxu0 %v50
  %852 = vmatprep.subr.mxu0 0.0
  %853 = vmatpush1.msra.mxu0 %v51
  %854 = vmatprep.subr.mxu0 0.0
  %855 = vmatpush1.msra.mxu0 %v52
  %856 = vmatprep.subr.mxu0 0.0
  %857 = vmatpush1.msra.mxu0 0.0
  %858 = vmatprep.subr.mxu0 0.0
  %859 = vmatpush1.msra.mxu0 0.0
  %860 = vmatprep.subr.mxu0 0.0
  %861 = vmatpush1.msra.mxu0 0.0
  %862 = vmatprep.subr.mxu0 0.0
  %863 = vmatpush1.msra.mxu0 0.0
  %864 = vmatprep.subr.mxu0 0.0
  %865 = vmatpush1.msra.mxu0 0.0
  %866 = vmatprep.subr.mxu0 0.0
  %867 = vmatpush1.msra.mxu0 0.0
  %868 = vmatprep.subr.mxu0 0.0
  %869 = vmatpush1.msra.mxu0 0.0
  %870 = vmatprep.subr.mxu0 0.0
  %871 = vmatpush1.msra.mxu0 0.0
  %872 = vmatprep.subr.mxu0 0.0
  %873 = vmatpush1.msra.mxu0 0.0
  %874 = vmatprep.subr.mxu0 0.0
  %875 = vmatpush1.msra.mxu0 0.0
  %876 = vmatprep.subr.mxu0 0.0
  %877 = vmatpush1.msra.mxu0 0.0
  %878 = vmatprep.subr.mxu0 0.0
  %879 = vmatpush1.msra.mxu0 0.0
  %880 = vmatprep.subr.mxu0 0.0
  %881 = vmatpush1.msra.mxu0 0.0
  %882 = vmatprep.subr.mxu0 0.0
  %883 = vmatpush1.msra.mxu0 0.0
  %884 = vmatprep.subr.mxu0 0.0
  %885 = vmatpush1.msra.mxu0 0.0
  %886 = vmatprep.subr.mxu0 0.0
  %887 = vmatpush1.msra.mxu0 0.0
  %888 = vmatprep.subr.mxu0 0.0
  %889 = vmatpush1.msra.mxu0 0.0
  %890 = vmatprep.subr.mxu0 0.0
  %891 = vmatpush1.msra.mxu0 0.0
  %892 = vmatprep.subr.mxu0 0.0
  %893 = vmatpush1.msra.mxu0 0.0
  %894 = vmatprep.subr.mxu0 0.0
  %895 = vmatpush1.msra.mxu0 0.0
  %896 = vmatprep.subr.mxu0 0.0
  %897 = vmatpush1.msra.mxu0 0.0
  %898 = vmatprep.subr.mxu0 0.0
  %899 = vmatpush1.msra.mxu0 0.0
  %900 = vmatprep.subr.mxu0 0.0
  %901 = vmatpush1.msra.mxu0 0.0
  %902 = vmatprep.subr.mxu0 0.0
  %903 = vmatpush1.msra.mxu0 0.0
  %904 = vmatprep.mubr.f32.mxu0 0.0
  %905 = vmatmul.mubr.f32.gmra.mrb[0].mxu0 %v838
  %v906 = vpop.f32.mrb[0].mxu0
  %v907 = vadd.f32 0.0, %v906
  %v908 = vpop.f32.mrb[0].mxu0
  %909 = vdwg.mxu0
  %v910 = vadd.f32 %v907, %v189
  %v911 = vxor.u32 %v910, 2147483648
  %v912 = vmul.f32 %v911, 1.442695
  %v913 = vpow.pop %v912
  %v914 = vadd.f32 %v913, 1.0
  %v915 = vrcp.pop %v914
  %v916 = vmul.f32 1.0, %v915
  %v917 = vadd.f32 %v907, %v503
  %919 = vrot.lane.b32.xlu0 %v917, 32
  %v920 = vpop.permute.xlu0 %919
  %v922 = vmul.f32 %v916, %v920
  %924 = vrot.lane.b32.xlu0 %v922, 64
  %v925 = vpop.permute.xlu0 %924
  %v927 = vadd.f32 %v910, %v925
  %v928 = vtanh.pop %v927
  %v929 = vsub.f32 1.0, %v916
  %931 = vrot.lane.b32.xlu0 %v928, 96
  %v932 = vpop.permute.xlu0 %931
  %v934 = vmul.f32 %v929, %v932
  %v935 = vmul.f32 %v916, %v730
  %v936 = vadd.f32 %v934, %v935
  %s937 = scalar_lea.vmem [#allocation2], 24
  %v938 = vld [vmem:[%s937] sm:$0xff]
  %v939 = vsel %vm303, %v834, 0
  %941 = vmatprep.subr.mxu0 0.0
  %942 = vmatpush1.msra.mxu0 %v41
  %943 = vmatprep.subr.mxu0 0.0
  %944 = vmatpush1.msra.mxu0 %v42
  %945 = vmatprep.subr.mxu0 0.0
  %946 = vmatpush1.msra.mxu0 %v43
  %947 = vmatprep.subr.mxu0 0.0
  %948 = vmatpush1.msra.mxu0 %v44
  %949 = vmatprep.subr.mxu0 0.0
  %950 = vmatpush1.msra.mxu0 0.0
  %951 = vmatprep.subr.mxu0 0.0
  %952 = vmatpush1.msra.mxu0 0.0
  %953 = vmatprep.subr.mxu0 0.0
  %954 = vmatpush1.msra.mxu0 0.0
  %955 = vmatprep.subr.mxu0 0.0
  %956 = vmatpush1.msra.mxu0 0.0
  %957 = vmatprep.subr.mxu0 0.0
  %958 = vmatpush1.msra.mxu0 0.0
  %959 = vmatprep.subr.mxu0 0.0
  %960 = vmatpush1.msra.mxu0 0.0
  %961 = vmatprep.subr.mxu0 0.0
  %962 = vmatpush1.msra.mxu0 0.0
  %963 = vmatprep.subr.mxu0 0.0
  %964 = vmatpush1.msra.mxu0 0.0
  %965 = vmatprep.subr.mxu0 0.0
  %966 = vmatpush1.msra.mxu0 0.0
  %967 = vmatprep.subr.mxu0 0.0
  %968 = vmatpush1.msra.mxu0 0.0
  %969 = vmatprep.subr.mxu0 0.0
  %970 = vmatpush1.msra.mxu0 0.0
  %971 = vmatprep.subr.mxu0 0.0
  %972 = vmatpush1.msra.mxu0 0.0
  %973 = vmatprep.subr.mxu0 0.0
  %974 = vmatpush1.msra.mxu0 0.0
  %975 = vmatprep.subr.mxu0 0.0
  %976 = vmatpush1.msra.mxu0 0.0
  %977 = vmatprep.subr.mxu0 0.0
  %978 = vmatpush1.msra.mxu0 0.0
  %979 = vmatprep.subr.mxu0 0.0
  %980 = vmatpush1.msra.mxu0 0.0
  %981 = vmatprep.subr.mxu0 0.0
  %982 = vmatpush1.msra.mxu0 0.0
  %983 = vmatprep.subr.mxu0 0.0
  %984 = vmatpush1.msra.mxu0 0.0
  %985 = vmatprep.subr.mxu0 0.0
  %986 = vmatpush1.msra.mxu0 0.0
  %987 = vmatprep.subr.mxu0 0.0
  %988 = vmatpush1.msra.mxu0 0.0
  %989 = vmatprep.subr.mxu0 0.0
  %990 = vmatpush1.msra.mxu0 0.0
  %991 = vmatprep.subr.mxu0 0.0
  %992 = vmatpush1.msra.mxu0 0.0
  %993 = vmatprep.subr.mxu0 0.0
  %994 = vmatpush1.msra.mxu0 0.0
  %995 = vmatprep.subr.mxu0 0.0
  %996 = vmatpush1.msra.mxu0 0.0
  %997 = vmatprep.subr.mxu0 0.0
  %998 = vmatpush1.msra.mxu0 0.0
  %999 = vmatprep.subr.mxu0 0.0
  %1000 = vmatpush1.msra.mxu0 0.0
  %1001 = vmatprep.subr.mxu0 0.0
  %1002 = vmatpush1.msra.mxu0 0.0
  %1003 = vmatprep.subr.mxu0 0.0
  %1004 = vmatpush1.msra.mxu0 0.0
  %1005 = vmatprep.mubr.f32.mxu0 0.0
  %1006 = vmatmul.mubr.f32.gmra.mrb[0].mxu0 %v939
  %v1007 = vpop.f32.mrb[0].mxu0
  %v1008 = vadd.f32 0.0, %v1007
  %v1009 = vpop.f32.mrb[0].mxu0
  %1010 = vdwg.mxu0
  %v1011 = vadd.f32 %v938, %v1008
  %v1012 = vxor.u32 %v1011, 2147483648
  %v1013 = vmul.f32 %v1012, 1.442695
  %v1014 = vpow.pop %v1013
  %v1015 = vadd.f32 %v1014, 1.0
  %v1016 = vrcp.pop %v1015
  %v1017 = vmul.f32 1.0, %v1016
  %v1018 = vadd.f32 %v1008, %v390
  %1020 = vrot.lane.b32.xlu0 %v1018, 64
  %v1021 = vpop.permute.xlu0 %1020
  %v1023 = vmul.f32 %v1017, %v1021
  %1025 = vrot.lane.b32.xlu0 %v1023, 64
  %v1026 = vpop.permute.xlu0 %1025
  %v1028 = vadd.f32 %v938, %v1026
  %v1029 = vtanh.pop %v1028
  %v1030 = vsub.f32 1.0, %v1017
  %1032 = vrot.lane.b32.xlu0 %v1029, 96
  %v1033 = vpop.permute.xlu0 %1032
  %v1035 = vmul.f32 %v1030, %v1033
  %v1036 = vmul.f32 %v1017, %v831
  %v1037 = vadd.f32 %v1035, %v1036
  %1039 = vrot.lane.b32.xlu0 %v1037, 96
  %v1040 = vpop.permute.xlu0 %1039
  %v1042 = vsel %vm303, %v1040, %v936
  %v1044 = vsel %vm75, %v1042, 0
  %1046 = vmatprep.subr.mxu0 0.0
  %1047 = vmatpush1.msra.mxu0 %v45
  %1048 = vmatprep.subr.mxu0 0.0
  %1049 = vmatpush1.msra.mxu0 %v46
  %1050 = vmatprep.subr.mxu0 0.0
  %1051 = vmatpush1.msra.mxu0 %v47
  %1052 = vmatprep.subr.mxu0 0.0
  %1053 = vmatpush1.msra.mxu0 %v48
  %1054 = vmatprep.subr.mxu0 0.0
  %1055 = vmatpush1.msra.mxu0 %v49
  %1056 = vmatprep.subr.mxu0 0.0
  %1057 = vmatpush1.msra.mxu0 %v50
  %1058 = vmatprep.subr.mxu0 0.0
  %1059 = vmatpush1.msra.mxu0 %v51
  %1060 = vmatprep.subr.mxu0 0.0
  %1061 = vmatpush1.msra.mxu0 %v52
  %1062 = vmatprep.subr.mxu0 0.0
  %1063 = vmatpush1.msra.mxu0 0.0
  %1064 = vmatprep.subr.mxu0 0.0
  %1065 = vmatpush1.msra.mxu0 0.0
  %1066 = vmatprep.subr.mxu0 0.0
  %1067 = vmatpush1.msra.mxu0 0.0
  %1068 = vmatprep.subr.mxu0 0.0
  %1069 = vmatpush1.msra.mxu0 0.0
  %1070 = vmatprep.subr.mxu0 0.0
  %1071 = vmatpush1.msra.mxu0 0.0
  %1072 = vmatprep.subr.mxu0 0.0
  %1073 = vmatpush1.msra.mxu0 0.0
  %1074 = vmatprep.subr.mxu0 0.0
  %1075 = vmatpush1.msra.mxu0 0.0
  %1076 = vmatprep.subr.mxu0 0.0
  %1077 = vmatpush1.msra.mxu0 0.0
  %1078 = vmatprep.subr.mxu0 0.0
  %1079 = vmatpush1.msra.mxu0 0.0
  %1080 = vmatprep.subr.mxu0 0.0
  %1081 = vmatpush1.msra.mxu0 0.0
  %1082 = vmatprep.subr.mxu0 0.0
  %1083 = vmatpush1.msra.mxu0 0.0
  %1084 = vmatprep.subr.mxu0 0.0
  %1085 = vmatpush1.msra.mxu0 0.0
  %1086 = vmatprep.subr.mxu0 0.0
  %1087 = vmatpush1.msra.mxu0 0.0
  %1088 = vmatprep.subr.mxu0 0.0
  %1089 = vmatpush1.msra.mxu0 0.0
  %1090 = vmatprep.subr.mxu0 0.0
  %1091 = vmatpush1.msra.mxu0 0.0
  %1092 = vmatprep.subr.mxu0 0.0
  %1093 = vmatpush1.msra.mxu0 0.0
  %1094 = vmatprep.subr.mxu0 0.0
  %1095 = vmatpush1.msra.mxu0 0.0
  %1096 = vmatprep.subr.mxu0 0.0
  %1097 = vmatpush1.msra.mxu0 0.0
  %1098 = vmatprep.subr.mxu0 0.0
  %1099 = vmatpush1.msra.mxu0 0.0
  %1100 = vmatprep.subr.mxu0 0.0
  %1101 = vmatpush1.msra.mxu0 0.0
  %1102 = vmatprep.subr.mxu0 0.0
  %1103 = vmatpush1.msra.mxu0 0.0
  %1104 = vmatprep.subr.mxu0 0.0
  %1105 = vmatpush1.msra.mxu0 0.0
  %1106 = vmatprep.subr.mxu0 0.0
  %1107 = vmatpush1.msra.mxu0 0.0
  %1108 = vmatprep.subr.mxu0 0.0
  %1109 = vmatpush1.msra.mxu0 0.0
  %1110 = vmatprep.mubr.f32.mxu0 0.0
  %1111 = vmatmul.mubr.f32.gmra.mrb[0].mxu0 %v1044
  %v1112 = vpop.f32.mrb[0].mxu0
  %v1113 = vadd.f32 0.0, %v1112
  %v1114 = vpop.f32.mrb[0].mxu0
  %1115 = vdwg.mxu0
  %v1116 = vadd.f32 %v1113, %v189
  %v1117 = vxor.u32 %v1116, 2147483648
  %v1118 = vmul.f32 %v1117, 1.442695
  %v1119 = vpow.pop %v1118
  %v1120 = vadd.f32 %v1119, 1.0
  %v1121 = vrcp.pop %v1120
  %v1122 = vmul.f32 1.0, %v1121
  %v1123 = vadd.f32 %v1113, %v503
  %1125 = vrot.lane.b32.xlu0 %v1123, 32
  %v1126 = vpop.permute.xlu0 %1125
  %v1128 = vmul.f32 %v1122, %v1126
  %1130 = vrot.lane.b32.xlu0 %v1128, 64
  %v1131 = vpop.permute.xlu0 %1130
  %v1133 = vadd.f32 %v1116, %v1131
  %v1134 = vtanh.pop %v1133
  %v1135 = vsub.f32 1.0, %v1122
  %1137 = vrot.lane.b32.xlu0 %v1134, 96
  %v1138 = vpop.permute.xlu0 %1137
  %v1140 = vmul.f32 %v1135, %v1138
  %v1141 = vmul.f32 %v1122, %v936
  %v1142 = vadd.f32 %v1140, %v1141
  %v1143 = vsel %vm303, %v1040, 0
  %1145 = vmatprep.subr.mxu0 0.0
  %1146 = vmatpush1.msra.mxu0 %v41
  %1147 = vmatprep.subr.mxu0 0.0
  %1148 = vmatpush1.msra.mxu0 %v42
  %1149 = vmatprep.subr.mxu0 0.0
  %1150 = vmatpush1.msra.mxu0 %v43
  %1151 = vmatprep.subr.mxu0 0.0
  %1152 = vmatpush1.msra.mxu0 %v44
  %1153 = vmatprep.subr.mxu0 0.0
  %1154 = vmatpush1.msra.mxu0 0.0
  %1155 = vmatprep.subr.mxu0 0.0
  %1156 = vmatpush1.msra.mxu0 0.0
  %1157 = vmatprep.subr.mxu0 0.0
  %1158 = vmatpush1.msra.mxu0 0.0
  %1159 = vmatprep.subr.mxu0 0.0
  %1160 = vmatpush1.msra.mxu0 0.0
  %1161 = vmatprep.subr.mxu0 0.0
  %1162 = vmatpush1.msra.mxu0 0.0
  %1163 = vmatprep.subr.mxu0 0.0
  %1164 = vmatpush1.msra.mxu0 0.0
  %1165 = vmatprep.subr.mxu0 0.0
  %1166 = vmatpush1.msra.mxu0 0.0
  %1167 = vmatprep.subr.mxu0 0.0
  %1168 = vmatpush1.msra.mxu0 0.0
  %1169 = vmatprep.subr.mxu0 0.0
  %1170 = vmatpush1.msra.mxu0 0.0
  %1171 = vmatprep.subr.mxu0 0.0
  %1172 = vmatpush1.msra.mxu0 0.0
  %1173 = vmatprep.subr.mxu0 0.0
  %1174 = vmatpush1.msra.mxu0 0.0
  %1175 = vmatprep.subr.mxu0 0.0
  %1176 = vmatpush1.msra.mxu0 0.0
  %1177 = vmatprep.subr.mxu0 0.0
  %1178 = vmatpush1.msra.mxu0 0.0
  %1179 = vmatprep.subr.mxu0 0.0
  %1180 = vmatpush1.msra.mxu0 0.0
  %1181 = vmatprep.subr.mxu0 0.0
  %1182 = vmatpush1.msra.mxu0 0.0
  %1183 = vmatprep.subr.mxu0 0.0
  %1184 = vmatpush1.msra.mxu0 0.0
  %1185 = vmatprep.subr.mxu0 0.0
  %1186 = vmatpush1.msra.mxu0 0.0
  %1187 = vmatprep.subr.mxu0 0.0
  %1188 = vmatpush1.msra.mxu0 0.0
  %1189 = vmatprep.subr.mxu0 0.0
  %1190 = vmatpush1.msra.mxu0 0.0
  %1191 = vmatprep.subr.mxu0 0.0
  %1192 = vmatpush1.msra.mxu0 0.0
  %1193 = vmatprep.subr.mxu0 0.0
  %1194 = vmatpush1.msra.mxu0 0.0
  %1195 = vmatprep.subr.mxu0 0.0
  %1196 = vmatpush1.msra.mxu0 0.0
  %1197 = vmatprep.subr.mxu0 0.0
  %1198 = vmatpush1.msra.mxu0 0.0
  %1199 = vmatprep.subr.mxu0 0.0
  %1200 = vmatpush1.msra.mxu0 0.0
  %1201 = vmatprep.subr.mxu0 0.0
  %1202 = vmatpush1.msra.mxu0 0.0
  %1203 = vmatprep.subr.mxu0 0.0
  %1204 = vmatpush1.msra.mxu0 0.0
  %1205 = vmatprep.subr.mxu0 0.0
  %1206 = vmatpush1.msra.mxu0 0.0
  %1207 = vmatprep.subr.mxu0 0.0
  %1208 = vmatpush1.msra.mxu0 0.0
  %1209 = vmatprep.mubr.f32.mxu0 0.0
  %1210 = vmatmul.mubr.f32.gmra.mrb[0].mxu0 %v1143
  %v1211 = vpop.f32.mrb[0].mxu0
  %v1212 = vadd.f32 0.0, %v1211
  %v1213 = vpop.f32.mrb[0].mxu0
  %1214 = vdwg.mxu0
  %v1215 = vadd.f32 %v73, %v1212
  %v1216 = vxor.u32 %v1215, 2147483648
  %v1217 = vmul.f32 %v1216, 1.442695
  %v1218 = vpow.pop %v1217
  %v1219 = vadd.f32 %v1218, 1.0
  %v1220 = vrcp.pop %v1219
  %v1221 = vmul.f32 1.0, %v1220
  %v1222 = vadd.f32 %v1212, %v390
  %1224 = vrot.lane.b32.xlu0 %v1222, 64
  %v1225 = vpop.permute.xlu0 %1224
  %v1227 = vmul.f32 %v1221, %v1225
  %1229 = vrot.lane.b32.xlu0 %v1227, 64
  %v1230 = vpop.permute.xlu0 %1229
  %v1232 = vadd.f32 %v73, %v1230
  %v1233 = vtanh.pop %v1232
  %v1234 = vsub.f32 1.0, %v1221
  %1236 = vrot.lane.b32.xlu0 %v1233, 96
  %v1237 = vpop.permute.xlu0 %1236
  %v1239 = vmul.f32 %v1234, %v1237
  %v1240 = vmul.f32 %v1221, %v1037
  %v1241 = vadd.f32 %v1239, %v1240
  %v1242 = vld [vmem:[#allocation3] sm:$0xff]
  %1244 = vrot.lane.b32.xlu0 %v1241, 96
  %v1245 = vpop.permute.xlu0 %1244
  %v1247 = vsel %vm303, %v1245, %v1142
  %v1249 = vsel %vm75, %v1247, 0
  %1251 = vmatprep.subr.mxu0 0.0
  %1252 = vmatpush1.msra.mxu0 %v45
  %1253 = vmatprep.subr.mxu0 0.0
  %1254 = vmatpush1.msra.mxu0 %v46
  %1255 = vmatprep.subr.mxu0 0.0
  %1256 = vmatpush1.msra.mxu0 %v47
  %1257 = vmatprep.subr.mxu0 0.0
  %1258 = vmatpush1.msra.mxu0 %v48
  %1259 = vmatprep.subr.mxu0 0.0
  %1260 = vmatpush1.msra.mxu0 %v49
  %1261 = vmatprep.subr.mxu0 0.0
  %1262 = vmatpush1.msra.mxu0 %v50
  %1263 = vmatprep.subr.mxu0 0.0
  %1264 = vmatpush1.msra.mxu0 %v51
  %1265 = vmatprep.subr.mxu0 0.0
  %1266 = vmatpush1.msra.mxu0 %v52
  %1267 = vmatprep.subr.mxu0 0.0
  %1268 = vmatpush1.msra.mxu0 0.0
  %1269 = vmatprep.subr.mxu0 0.0
  %1270 = vmatpush1.msra.mxu0 0.0
  %1271 = vmatprep.subr.mxu0 0.0
  %1272 = vmatpush1.msra.mxu0 0.0
  %1273 = vmatprep.subr.mxu0 0.0
  %1274 = vmatpush1.msra.mxu0 0.0
  %1275 = vmatprep.subr.mxu0 0.0
  %1276 = vmatpush1.msra.mxu0 0.0
  %1277 = vmatprep.subr.mxu0 0.0
  %1278 = vmatpush1.msra.mxu0 0.0
  %1279 = vmatprep.subr.mxu0 0.0
  %1280 = vmatpush1.msra.mxu0 0.0
  %1281 = vmatprep.subr.mxu0 0.0
  %1282 = vmatpush1.msra.mxu0 0.0
  %1283 = vmatprep.subr.mxu0 0.0
  %1284 = vmatpush1.msra.mxu0 0.0
  %1285 = vmatprep.subr.mxu0 0.0
  %1286 = vmatpush1.msra.mxu0 0.0
  %1287 = vmatprep.subr.mxu0 0.0
  %1288 = vmatpush1.msra.mxu0 0.0
  %1289 = vmatprep.subr.mxu0 0.0
  %1290 = vmatpush1.msra.mxu0 0.0
  %1291 = vmatprep.subr.mxu0 0.0
  %1292 = vmatpush1.msra.mxu0 0.0
  %1293 = vmatprep.subr.mxu0 0.0
  %1294 = vmatpush1.msra.mxu0 0.0
  %1295 = vmatprep.subr.mxu0 0.0
  %1296 = vmatpush1.msra.mxu0 0.0
  %1297 = vmatprep.subr.mxu0 0.0
  %1298 = vmatpush1.msra.mxu0 0.0
  %1299 = vmatprep.subr.mxu0 0.0
  %1300 = vmatpush1.msra.mxu0 0.0
  %1301 = vmatprep.subr.mxu0 0.0
  %1302 = vmatpush1.msra.mxu0 0.0
  %1303 = vmatprep.subr.mxu0 0.0
  %1304 = vmatpush1.msra.mxu0 0.0
  %1305 = vmatprep.subr.mxu0 0.0
  %1306 = vmatpush1.msra.mxu0 0.0
  %1307 = vmatprep.subr.mxu0 0.0
  %1308 = vmatpush1.msra.mxu0 0.0
  %1309 = vmatprep.subr.mxu0 0.0
  %1310 = vmatpush1.msra.mxu0 0.0
  %1311 = vmatprep.subr.mxu0 0.0
  %1312 = vmatpush1.msra.mxu0 0.0
  %1313 = vmatprep.subr.mxu0 0.0
  %1314 = vmatpush1.msra.mxu0 0.0
  %1315 = vmatprep.mubr.f32.mxu0 0.0
  %1316 = vmatmul.mubr.f32.gmra.mrb[0].mxu0 %v1249
  %v1317 = vpop.f32.mrb[0].mxu0
  %v1318 = vadd.f32 0.0, %v1317
  %v1319 = vpop.f32.mrb[0].mxu0
  %1320 = vdwg.mxu0
  %v1321 = vadd.f32 %v1318, %v1242
  %v1322 = vxor.u32 %v1321, 2147483648
  %v1323 = vmul.f32 %v1322, 1.442695
  %v1324 = vpow.pop %v1323
  %v1325 = vadd.f32 %v1324, 1.0
  %v1326 = vrcp.pop %v1325
  %v1327 = vmul.f32 1.0, %v1326
  %v1328 = vadd.f32 %v1318, %v503
  %1330 = vrot.lane.b32.xlu0 %v1328, 32
  %v1331 = vpop.permute.xlu0 %1330
  %v1333 = vmul.f32 %v1327, %v1331
  %1335 = vrot.lane.b32.xlu0 %v1333, 64
  %v1336 = vpop.permute.xlu0 %1335
  %v1338 = vadd.f32 %v1321, %v1336
  %v1339 = vtanh.pop %v1338
  %v1340 = vsub.f32 1.0, %v1327
  %1342 = vrot.lane.b32.xlu0 %v1339, 96
  %v1343 = vpop.permute.xlu0 %1342
  %v1345 = vmul.f32 %v1340, %v1343
  %v1346 = vmul.f32 %v1327, %v1142
  %v1347 = vadd.f32 %v1345, %v1346
  %1349 = vrot.lane.b32.xlu0 %v1347, 96
  %v1350 = vpop.permute.xlu0 %1349
  %1352 = vst.msk [vmem:[#allocation4] sm:$0xff] %vm303, %v1350
  %v1353 = vsel %vm303, %v1245, 0
  %1355 = vmatprep.subr.mxu0 0.0
  %1356 = vmatpush1.msra.mxu0 %v41
  %1357 = vmatprep.subr.mxu0 0.0
  %1358 = vmatpush1.msra.mxu0 %v42
  %1359 = vmatprep.subr.mxu0 0.0
  %1360 = vmatpush1.msra.mxu0 %v43
  %1361 = vmatprep.subr.mxu0 0.0
  %1362 = vmatpush1.msra.mxu0 %v44
  %1363 = vmatprep.subr.mxu0 0.0
  %1364 = vmatpush1.msra.mxu0 0.0
  %1365 = vmatprep.subr.mxu0 0.0
  %1366 = vmatpush1.msra.mxu0 0.0
  %1367 = vmatprep.subr.mxu0 0.0
  %1368 = vmatpush1.msra.mxu0 0.0
  %1369 = vmatprep.subr.mxu0 0.0
  %1370 = vmatpush1.msra.mxu0 0.0
  %1371 = vmatprep.subr.mxu0 0.0
  %1372 = vmatpush1.msra.mxu0 0.0
  %1373 = vmatprep.subr.mxu0 0.0
  %1374 = vmatpush1.msra.mxu0 0.0
  %1375 = vmatprep.subr.mxu0 0.0
  %1376 = vmatpush1.msra.mxu0 0.0
  %1377 = vmatprep.subr.mxu0 0.0
  %1378 = vmatpush1.msra.mxu0 0.0
  %1379 = vmatprep.subr.mxu0 0.0
  %1380 = vmatpush1.msra.mxu0 0.0
  %1381 = vmatprep.subr.mxu0 0.0
  %1382 = vmatpush1.msra.mxu0 0.0
  %1383 = vmatprep.subr.mxu0 0.0
  %1384 = vmatpush1.msra.mxu0 0.0
  %1385 = vmatprep.subr.mxu0 0.0
  %1386 = vmatpush1.msra.mxu0 0.0
  %1387 = vmatprep.subr.mxu0 0.0
  %1388 = vmatpush1.msra.mxu0 0.0
  %1389 = vmatprep.subr.mxu0 0.0
  %1390 = vmatpush1.msra.mxu0 0.0
  %1391 = vmatprep.subr.mxu0 0.0
  %1392 = vmatpush1.msra.mxu0 0.0
  %1393 = vmatprep.subr.mxu0 0.0
  %1394 = vmatpush1.msra.mxu0 0.0
  %1395 = vmatprep.subr.mxu0 0.0
  %1396 = vmatpush1.msra.mxu0 0.0
  %1397 = vmatprep.subr.mxu0 0.0
  %1398 = vmatpush1.msra.mxu0 0.0
  %1399 = vmatprep.subr.mxu0 0.0
  %1400 = vmatpush1.msra.mxu0 0.0
  %1401 = vmatprep.subr.mxu0 0.0
  %1402 = vmatpush1.msra.mxu0 0.0
  %1403 = vmatprep.subr.mxu0 0.0
  %1404 = vmatpush1.msra.mxu0 0.0
  %1405 = vmatprep.subr.mxu0 0.0
  %1406 = vmatpush1.msra.mxu0 0.0
  %1407 = vmatprep.subr.mxu0 0.0
  %1408 = vmatpush1.msra.mxu0 0.0
  %1409 = vmatprep.subr.mxu0 0.0
  %1410 = vmatpush1.msra.mxu0 0.0
  %1411 = vmatprep.subr.mxu0 0.0
  %1412 = vmatpush1.msra.mxu0 0.0
  %1413 = vmatprep.subr.mxu0 0.0
  %1414 = vmatpush1.msra.mxu0 0.0
  %1415 = vmatprep.subr.mxu0 0.0
  %1416 = vmatpush1.msra.mxu0 0.0
  %1417 = vmatprep.subr.mxu0 0.0
  %1418 = vmatpush1.msra.mxu0 0.0
  %1419 = vmatprep.mubr.f32.mxu0 0.0
  %1420 = vmatmul.mubr.f32.gmra.mrb[0].mxu0 %v1353
  %v1421 = vpop.f32.mrb[0].mxu0
  %v1422 = vadd.f32 0.0, %v1421
  %v1423 = vpop.f32.mrb[0].mxu0
  %1424 = vdwg.mxu0
  %v1425 = vadd.f32 %v73, %v1422
  %v1426 = vxor.u32 %v1425, 2147483648
  %v1427 = vmul.f32 %v1426, 1.442695
  %v1428 = vpow.pop %v1427
  %v1429 = vadd.f32 %v1428, 1.0
  %v1430 = vrcp.pop %v1429
  %v1431 = vmul.f32 1.0, %v1430
  %v1432 = vadd.f32 %v1422, %v390
  %1434 = vrot.lane.b32.xlu0 %v1432, 64
  %v1435 = vpop.permute.xlu0 %1434
  %v1437 = vmul.f32 %v1431, %v1435
  %1439 = vrot.lane.b32.xlu0 %v1437, 64
  %v1440 = vpop.permute.xlu0 %1439
  %v1442 = vadd.f32 %v73, %v1440
  %v1443 = vtanh.pop %v1442
  %v1444 = vsub.f32 1.0, %v1431
  %1446 = vrot.lane.b32.xlu0 %v1443, 96
  %v1447 = vpop.permute.xlu0 %1446
  %v1449 = vmul.f32 %v1444, %v1447
  %v1450 = vmul.f32 %v1431, %v1241
  %v1451 = vadd.f32 %v1449, %v1450
  %s1452 = scalar_lea.vmem [#allocation3], 8
  %v1453 = vld [vmem:[%s1452] sm:$0xff]
  %1455 = vrot.lane.b32.xlu0 %v1451, 96
  %v1456 = vpop.permute.xlu0 %1455
  %v1458 = vsel %vm303, %v1456, %v1347
  %v1460 = vsel %vm75, %v1458, 0
  %1462 = vmatprep.subr.mxu0 0.0
  %1463 = vmatpush1.msra.mxu0 %v45
  %1464 = vmatprep.subr.mxu0 0.0
  %1465 = vmatpush1.msra.mxu0 %v46
  %1466 = vmatprep.subr.mxu0 0.0
  %1467 = vmatpush1.msra.mxu0 %v47
  %1468 = vmatprep.subr.mxu0 0.0
  %1469 = vmatpush1.msra.mxu0 %v48
  %1470 = vmatprep.subr.mxu0 0.0
  %1471 = vmatpush1.msra.mxu0 %v49
  %1472 = vmatprep.subr.mxu0 0.0
  %1473 = vmatpush1.msra.mxu0 %v50
  %1474 = vmatprep.subr.mxu0 0.0
  %1475 = vmatpush1.msra.mxu0 %v51
  %1476 = vmatprep.subr.mxu0 0.0
  %1477 = vmatpush1.msra.mxu0 %v52
  %1478 = vmatprep.subr.mxu0 0.0
  %1479 = vmatpush1.msra.mxu0 0.0
  %1480 = vmatprep.subr.mxu0 0.0
  %1481 = vmatpush1.msra.mxu0 0.0
  %1482 = vmatprep.subr.mxu0 0.0
  %1483 = vmatpush1.msra.mxu0 0.0
  %1484 = vmatprep.subr.mxu0 0.0
  %1485 = vmatpush1.msra.mxu0 0.0
  %1486 = vmatprep.subr.mxu0 0.0
  %1487 = vmatpush1.msra.mxu0 0.0
  %1488 = vmatprep.subr.mxu0 0.0
  %1489 = vmatpush1.msra.mxu0 0.0
  %1490 = vmatprep.subr.mxu0 0.0
  %1491 = vmatpush1.msra.mxu0 0.0
  %1492 = vmatprep.subr.mxu0 0.0
  %1493 = vmatpush1.msra.mxu0 0.0
  %1494 = vmatprep.subr.mxu0 0.0
  %1495 = vmatpush1.msra.mxu0 0.0
  %1496 = vmatprep.subr.mxu0 0.0
  %1497 = vmatpush1.msra.mxu0 0.0
  %1498 = vmatprep.subr.mxu0 0.0
  %1499 = vmatpush1.msra.mxu0 0.0
  %1500 = vmatprep.subr.mxu0 0.0
  %1501 = vmatpush1.msra.mxu0 0.0
  %1502 = vmatprep.subr.mxu0 0.0
  %1503 = vmatpush1.msra.mxu0 0.0
  %1504 = vmatprep.subr.mxu0 0.0
  %1505 = vmatpush1.msra.mxu0 0.0
  %1506 = vmatprep.subr.mxu0 0.0
  %1507 = vmatpush1.msra.mxu0 0.0
  %1508 = vmatprep.subr.mxu0 0.0
  %1509 = vmatpush1.msra.mxu0 0.0
  %1510 = vmatprep.subr.mxu0 0.0
  %1511 = vmatpush1.msra.mxu0 0.0
  %1512 = vmatprep.subr.mxu0 0.0
  %1513 = vmatpush1.msra.mxu0 0.0
  %1514 = vmatprep.subr.mxu0 0.0
  %1515 = vmatpush1.msra.mxu0 0.0
  %1516 = vmatprep.subr.mxu0 0.0
  %1517 = vmatpush1.msra.mxu0 0.0
  %1518 = vmatprep.subr.mxu0 0.0
  %1519 = vmatpush1.msra.mxu0 0.0
  %1520 = vmatprep.subr.mxu0 0.0
  %1521 = vmatpush1.msra.mxu0 0.0
  %1522 = vmatprep.subr.mxu0 0.0
  %1523 = vmatpush1.msra.mxu0 0.0
  %1524 = vmatprep.subr.mxu0 0.0
  %1525 = vmatpush1.msra.mxu0 0.0
  %1526 = vmatprep.mubr.f32.mxu0 0.0
  %1527 = vmatmul.mubr.f32.gmra.mrb[0].mxu0 %v1460
  %v1528 = vpop.f32.mrb[0].mxu0
  %v1529 = vadd.f32 0.0, %v1528
  %v1530 = vpop.f32.mrb[0].mxu0
  %1531 = vdwg.mxu0
  %v1532 = vadd.f32 %v1529, %v1453
  %v1533 = vxor.u32 %v1532, 2147483648
  %v1534 = vmul.f32 %v1533, 1.442695
  %v1535 = vpow.pop %v1534
  %v1536 = vadd.f32 %v1535, 1.0
  %v1537 = vrcp.pop %v1536
  %v1538 = vmul.f32 1.0, %v1537
  %v1539 = vadd.f32 %v1529, %v503
  %1541 = vrot.lane.b32.xlu0 %v1539, 32
  %v1542 = vpop.permute.xlu0 %1541
  %v1544 = vmul.f32 %v1538, %v1542
  %1546 = vrot.lane.b32.xlu0 %v1544, 64
  %v1547 = vpop.permute.xlu0 %1546
  %v1549 = vadd.f32 %v1532, %v1547
  %v1550 = vtanh.pop %v1549
  %v1551 = vsub.f32 1.0, %v1538
  %1553 = vrot.lane.b32.xlu0 %v1550, 96
  %v1554 = vpop.permute.xlu0 %1553
  %v1556 = vmul.f32 %v1551, %v1554
  %v1557 = vmul.f32 %v1538, %v1347
  %v1558 = vadd.f32 %v1556, %v1557
  %1560 = vrot.lane.b32.xlu0 %v1558, 96
  %v1561 = vpop.permute.xlu0 %1560
  %s1563 = scalar_lea.vmem [#allocation4], 8
  %1564 = vst.msk [vmem:[%s1563] sm:$0xff] %vm303, %v1561
  %v1565 = vsel %vm303, %v1456, 0
  %1567 = vmatprep.subr.mxu0 0.0
  %1568 = vmatpush1.msra.mxu0 %v41
  %1569 = vmatprep.subr.mxu0 0.0
  %1570 = vmatpush1.msra.mxu0 %v42
  %1571 = vmatprep.subr.mxu0 0.0
  %1572 = vmatpush1.msra.mxu0 %v43
  %1573 = vmatprep.subr.mxu0 0.0
  %1574 = vmatpush1.msra.mxu0 %v44
  %1575 = vmatprep.subr.mxu0 0.0
  %1576 = vmatpush1.msra.mxu0 0.0
  %1577 = vmatprep.subr.mxu0 0.0
  %1578 = vmatpush1.msra.mxu0 0.0
  %1579 = vmatprep.subr.mxu0 0.0
  %1580 = vmatpush1.msra.mxu0 0.0
  %1581 = vmatprep.subr.mxu0 0.0
  %1582 = vmatpush1.msra.mxu0 0.0
  %1583 = vmatprep.subr.mxu0 0.0
  %1584 = vmatpush1.msra.mxu0 0.0
  %1585 = vmatprep.subr.mxu0 0.0
  %1586 = vmatpush1.msra.mxu0 0.0
  %1587 = vmatprep.subr.mxu0 0.0
  %1588 = vmatpush1.msra.mxu0 0.0
  %1589 = vmatprep.subr.mxu0 0.0
  %1590 = vmatpush1.msra.mxu0 0.0
  %1591 = vmatprep.subr.mxu0 0.0
  %1592 = vmatpush1.msra.mxu0 0.0
  %1593 = vmatprep.subr.mxu0 0.0
  %1594 = vmatpush1.msra.mxu0 0.0
  %1595 = vmatprep.subr.mxu0 0.0
  %1596 = vmatpush1.msra.mxu0 0.0
  %1597 = vmatprep.subr.mxu0 0.0
  %1598 = vmatpush1.msra.mxu0 0.0
  %1599 = vmatprep.subr.mxu0 0.0
  %1600 = vmatpush1.msra.mxu0 0.0
  %1601 = vmatprep.subr.mxu0 0.0
  %1602 = vmatpush1.msra.mxu0 0.0
  %1603 = vmatprep.subr.mxu0 0.0
  %1604 = vmatpush1.msra.mxu0 0.0
  %1605 = vmatprep.subr.mxu0 0.0
  %1606 = vmatpush1.msra.mxu0 0.0
  %1607 = vmatprep.subr.mxu0 0.0
  %1608 = vmatpush1.msra.mxu0 0.0
  %1609 = vmatprep.subr.mxu0 0.0
  %1610 = vmatpush1.msra.mxu0 0.0
  %1611 = vmatprep.subr.mxu0 0.0
  %1612 = vmatpush1.msra.mxu0 0.0
  %1613 = vmatprep.subr.mxu0 0.0
  %1614 = vmatpush1.msra.mxu0 0.0
  %1615 = vmatprep.subr.mxu0 0.0
  %1616 = vmatpush1.msra.mxu0 0.0
  %1617 = vmatprep.subr.mxu0 0.0
  %1618 = vmatpush1.msra.mxu0 0.0
  %1619 = vmatprep.subr.mxu0 0.0
  %1620 = vmatpush1.msra.mxu0 0.0
  %1621 = vmatprep.subr.mxu0 0.0
  %1622 = vmatpush1.msra.mxu0 0.0
  %1623 = vmatprep.subr.mxu0 0.0
  %1624 = vmatpush1.msra.mxu0 0.0
  %1625 = vmatprep.subr.mxu0 0.0
  %1626 = vmatpush1.msra.mxu0 0.0
  %1627 = vmatprep.subr.mxu0 0.0
  %1628 = vmatpush1.msra.mxu0 0.0
  %1629 = vmatprep.subr.mxu0 0.0
  %1630 = vmatpush1.msra.mxu0 0.0
  %1631 = vmatprep.mubr.f32.mxu0 0.0
  %1632 = vmatmul.mubr.f32.gmra.mrb[0].mxu0 %v1565
  %v1633 = vpop.f32.mrb[0].mxu0
  %v1634 = vadd.f32 0.0, %v1633
  %v1635 = vpop.f32.mrb[0].mxu0
  %1636 = vdwg.mxu0
  %v1637 = vadd.f32 %v73, %v1634
  %v1638 = vxor.u32 %v1637, 2147483648
  %v1639 = vmul.f32 %v1638, 1.442695
  %v1640 = vpow.pop %v1639
  %v1641 = vadd.f32 %v1640, 1.0
  %v1642 = vrcp.pop %v1641
  %v1643 = vmul.f32 1.0, %v1642
  %v1644 = vadd.f32 %v1634, %v390
  %1646 = vrot.lane.b32.xlu0 %v1644, 64
  %v1647 = vpop.permute.xlu0 %1646
  %v1649 = vmul.f32 %v1643, %v1647
  %1651 = vrot.lane.b32.xlu0 %v1649, 64
  %v1652 = vpop.permute.xlu0 %1651
  %v1654 = vadd.f32 %v73, %v1652
  %v1655 = vtanh.pop %v1654
  %v1656 = vsub.f32 1.0, %v1643
  %1658 = vrot.lane.b32.xlu0 %v1655, 96
  %v1659 = vpop.permute.xlu0 %1658
  %v1661 = vmul.f32 %v1656, %v1659
  %v1662 = vmul.f32 %v1643, %v1451
  %v1663 = vadd.f32 %v1661, %v1662
  %s1664 = scalar_lea.vmem [#allocation3], 16
  %v1665 = vld [vmem:[%s1664] sm:$0xff]
  %1667 = vrot.lane.b32.xlu0 %v1663, 96
  %v1668 = vpop.permute.xlu0 %1667
  %v1670 = vsel %vm303, %v1668, %v1558
  %v1672 = vsel %vm75, %v1670, 0
  %1674 = vmatprep.subr.mxu0 0.0
  %1675 = vmatpush1.msra.mxu0 %v45
  %1676 = vmatprep.subr.mxu0 0.0
  %1677 = vmatpush1.msra.mxu0 %v46
  %1678 = vmatprep.subr.mxu0 0.0
  %1679 = vmatpush1.msra.mxu0 %v47
  %1680 = vmatprep.subr.mxu0 0.0
  %1681 = vmatpush1.msra.mxu0 %v48
  %1682 = vmatprep.subr.mxu0 0.0
  %1683 = vmatpush1.msra.mxu0 %v49
  %1684 = vmatprep.subr.mxu0 0.0
  %1685 = vmatpush1.msra.mxu0 %v50
  %1686 = vmatprep.subr.mxu0 0.0
  %1687 = vmatpush1.msra.mxu0 %v51
  %1688 = vmatprep.subr.mxu0 0.0
  %1689 = vmatpush1.msra.mxu0 %v52
  %1690 = vmatprep.subr.mxu0 0.0
  %1691 = vmatpush1.msra.mxu0 0.0
  %1692 = vmatprep.subr.mxu0 0.0
  %1693 = vmatpush1.msra.mxu0 0.0
  %1694 = vmatprep.subr.mxu0 0.0
  %1695 = vmatpush1.msra.mxu0 0.0
  %1696 = vmatprep.subr.mxu0 0.0
  %1697 = vmatpush1.msra.mxu0 0.0
  %1698 = vmatprep.subr.mxu0 0.0
  %1699 = vmatpush1.msra.mxu0 0.0
  %1700 = vmatprep.subr.mxu0 0.0
  %1701 = vmatpush1.msra.mxu0 0.0
  %1702 = vmatprep.subr.mxu0 0.0
  %1703 = vmatpush1.msra.mxu0 0.0
  %1704 = vmatprep.subr.mxu0 0.0
  %1705 = vmatpush1.msra.mxu0 0.0
  %1706 = vmatprep.subr.mxu0 0.0
  %1707 = vmatpush1.msra.mxu0 0.0
  %1708 = vmatprep.subr.mxu0 0.0
  %1709 = vmatpush1.msra.mxu0 0.0
  %1710 = vmatprep.subr.mxu0 0.0
  %1711 = vmatpush1.msra.mxu0 0.0
  %1712 = vmatprep.subr.mxu0 0.0
  %1713 = vmatpush1.msra.mxu0 0.0
  %1714 = vmatprep.subr.mxu0 0.0
  %1715 = vmatpush1.msra.mxu0 0.0
  %1716 = vmatprep.subr.mxu0 0.0
  %1717 = vmatpush1.msra.mxu0 0.0
  %1718 = vmatprep.subr.mxu0 0.0
  %1719 = vmatpush1.msra.mxu0 0.0
  %1720 = vmatprep.subr.mxu0 0.0
  %1721 = vmatpush1.msra.mxu0 0.0
  %1722 = vmatprep.subr.mxu0 0.0
  %1723 = vmatpush1.msra.mxu0 0.0
  %1724 = vmatprep.subr.mxu0 0.0
  %1725 = vmatpush1.msra.mxu0 0.0
  %1726 = vmatprep.subr.mxu0 0.0
  %1727 = vmatpush1.msra.mxu0 0.0
  %1728 = vmatprep.subr.mxu0 0.0
  %1729 = vmatpush1.msra.mxu0 0.0
  %1730 = vmatprep.subr.mxu0 0.0
  %1731 = vmatpush1.msra.mxu0 0.0
  %1732 = vmatprep.subr.mxu0 0.0
  %1733 = vmatpush1.msra.mxu0 0.0
  %1734 = vmatprep.subr.mxu0 0.0
  %1735 = vmatpush1.msra.mxu0 0.0
  %1736 = vmatprep.subr.mxu0 0.0
  %1737 = vmatpush1.msra.mxu0 0.0
  %1738 = vmatprep.mubr.f32.mxu0 0.0
  %1739 = vmatmul.mubr.f32.gmra.mrb[0].mxu0 %v1672
  %v1740 = vpop.f32.mrb[0].mxu0
  %v1741 = vadd.f32 0.0, %v1740
  %v1742 = vpop.f32.mrb[0].mxu0
  %1743 = vdwg.mxu0
  %v1744 = vadd.f32 %v1741, %v1665
  %v1745 = vxor.u32 %v1744, 2147483648
  %v1746 = vmul.f32 %v1745, 1.442695
  %v1747 = vpow.pop %v1746
  %v1748 = vadd.f32 %v1747, 1.0
  %v1749 = vrcp.pop %v1748
  %v1750 = vmul.f32 1.0, %v1749
  %v1751 = vadd.f32 %v1741, %v503
  %1753 = vrot.lane.b32.xlu0 %v1751, 32
  %v1754 = vpop.permute.xlu0 %1753
  %v1756 = vmul.f32 %v1750, %v1754
  %1758 = vrot.lane.b32.xlu0 %v1756, 64
  %v1759 = vpop.permute.xlu0 %1758
  %v1761 = vadd.f32 %v1744, %v1759
  %v1762 = vtanh.pop %v1761
  %v1763 = vsub.f32 1.0, %v1750
  %1765 = vrot.lane.b32.xlu0 %v1762, 96
  %v1766 = vpop.permute.xlu0 %1765
  %v1768 = vmul.f32 %v1763, %v1766
  %v1769 = vmul.f32 %v1750, %v1558
  %v1770 = vadd.f32 %v1768, %v1769
  %1772 = vrot.lane.b32.xlu0 %v1770, 96
  %v1773 = vpop.permute.xlu0 %1772
  %s1775 = scalar_lea.vmem [#allocation4], 16
  %1776 = vst.msk [vmem:[%s1775] sm:$0xff] %vm303, %v1773
  %v1777 = vsel %vm303, %v1668, 0
  %1779 = vmatprep.subr.mxu0 0.0
  %1780 = vmatpush1.msra.mxu0 %v41
  %1781 = vmatprep.subr.mxu0 0.0
  %1782 = vmatpush1.msra.mxu0 %v42
  %1783 = vmatprep.subr.mxu0 0.0
  %1784 = vmatpush1.msra.mxu0 %v43
  %1785 = vmatprep.subr.mxu0 0.0
  %1786 = vmatpush1.msra.mxu0 %v44
  %1787 = vmatprep.subr.mxu0 0.0
  %1788 = vmatpush1.msra.mxu0 0.0
  %1789 = vmatprep.subr.mxu0 0.0
  %1790 = vmatpush1.msra.mxu0 0.0
  %1791 = vmatprep.subr.mxu0 0.0
  %1792 = vmatpush1.msra.mxu0 0.0
  %1793 = vmatprep.subr.mxu0 0.0
  %1794 = vmatpush1.msra.mxu0 0.0
  %1795 = vmatprep.subr.mxu0 0.0
  %1796 = vmatpush1.msra.mxu0 0.0
  %1797 = vmatprep.subr.mxu0 0.0
  %1798 = vmatpush1.msra.mxu0 0.0
  %1799 = vmatprep.subr.mxu0 0.0
  %1800 = vmatpush1.msra.mxu0 0.0
  %1801 = vmatprep.subr.mxu0 0.0
  %1802 = vmatpush1.msra.mxu0 0.0
  %1803 = vmatprep.subr.mxu0 0.0
  %1804 = vmatpush1.msra.mxu0 0.0
  %1805 = vmatprep.subr.mxu0 0.0
  %1806 = vmatpush1.msra.mxu0 0.0
  %1807 = vmatprep.subr.mxu0 0.0
  %1808 = vmatpush1.msra.mxu0 0.0
  %1809 = vmatprep.subr.mxu0 0.0
  %1810 = vmatpush1.msra.mxu0 0.0
  %1811 = vmatprep.subr.mxu0 0.0
  %1812 = vmatpush1.msra.mxu0 0.0
  %1813 = vmatprep.subr.mxu0 0.0
  %1814 = vmatpush1.msra.mxu0 0.0
  %1815 = vmatprep.subr.mxu0 0.0
  %1816 = vmatpush1.msra.mxu0 0.0
  %1817 = vmatprep.subr.mxu0 0.0
  %1818 = vmatpush1.msra.mxu0 0.0
  %1819 = vmatprep.subr.mxu0 0.0
  %1820 = vmatpush1.msra.mxu0 0.0
  %1821 = vmatprep.subr.mxu0 0.0
  %1822 = vmatpush1.msra.mxu0 0.0
  %1823 = vmatprep.subr.mxu0 0.0
  %1824 = vmatpush1.msra.mxu0 0.0
  %1825 = vmatprep.subr.mxu0 0.0
  %1826 = vmatpush1.msra.mxu0 0.0
  %1827 = vmatprep.subr.mxu0 0.0
  %1828 = vmatpush1.msra.mxu0 0.0
  %1829 = vmatprep.subr.mxu0 0.0
  %1830 = vmatpush1.msra.mxu0 0.0
  %1831 = vmatprep.subr.mxu0 0.0
  %1832 = vmatpush1.msra.mxu0 0.0
  %1833 = vmatprep.subr.mxu0 0.0
  %1834 = vmatpush1.msra.mxu0 0.0
  %1835 = vmatprep.subr.mxu0 0.0
  %1836 = vmatpush1.msra.mxu0 0.0
  %1837 = vmatprep.subr.mxu0 0.0
  %1838 = vmatpush1.msra.mxu0 0.0
  %1839 = vmatprep.subr.mxu0 0.0
  %1840 = vmatpush1.msra.mxu0 0.0
  %1841 = vmatprep.subr.mxu0 0.0
  %1842 = vmatpush1.msra.mxu0 0.0
  %1843 = vmatprep.mubr.f32.mxu0 0.0
  %1844 = vmatmul.mubr.f32.gmra.mrb[0].mxu0 %v1777
  %v1845 = vpop.f32.mrb[0].mxu0
  %v1846 = vadd.f32 0.0, %v1845
  %v1847 = vpop.f32.mrb[0].mxu0
  %1848 = vdwg.mxu0
  %v1849 = vadd.f32 %v73, %v1846
  %v1850 = vxor.u32 %v1849, 2147483648
  %v1851 = vmul.f32 %v1850, 1.442695
  %v1852 = vpow.pop %v1851
  %v1853 = vadd.f32 %v1852, 1.0
  %v1854 = vrcp.pop %v1853
  %v1855 = vmul.f32 1.0, %v1854
  %v1856 = vadd.f32 %v1846, %v390
  %1858 = vrot.lane.b32.xlu0 %v1856, 64
  %v1859 = vpop.permute.xlu0 %1858
  %v1861 = vmul.f32 %v1855, %v1859
  %1863 = vrot.lane.b32.xlu0 %v1861, 64
  %v1864 = vpop.permute.xlu0 %1863
  %v1866 = vadd.f32 %v73, %v1864
  %v1867 = vtanh.pop %v1866
  %v1868 = vsub.f32 1.0, %v1855
  %1870 = vrot.lane.b32.xlu0 %v1867, 96
  %v1871 = vpop.permute.xlu0 %1870
  %v1873 = vmul.f32 %v1868, %v1871
  %v1874 = vmul.f32 %v1855, %v1663
  %v1875 = vadd.f32 %v1873, %v1874
  %s1876 = scalar_lea.vmem [#allocation3], 24
  %v1877 = vld [vmem:[%s1876] sm:$0xff]
  %1879 = vrot.lane.b32.xlu0 %v1875, 96
  %v1880 = vpop.permute.xlu0 %1879
  %v1882 = vsel %vm303, %v1880, %v1770
  %v1884 = vsel %vm75, %v1882, 0
  %1886 = vmatprep.subr.mxu0 0.0
  %1887 = vmatpush1.msra.mxu0 %v45
  %1888 = vmatprep.subr.mxu0 0.0
  %1889 = vmatpush1.msra.mxu0 %v46
  %1890 = vmatprep.subr.mxu0 0.0
  %1891 = vmatpush1.msra.mxu0 %v47
  %1892 = vmatprep.subr.mxu0 0.0
  %1893 = vmatpush1.msra.mxu0 %v48
  %1894 = vmatprep.subr.mxu0 0.0
  %1895 = vmatpush1.msra.mxu0 %v49
  %1896 = vmatprep.subr.mxu0 0.0
  %1897 = vmatpush1.msra.mxu0 %v50
  %1898 = vmatprep.subr.mxu0 0.0
  %1899 = vmatpush1.msra.mxu0 %v51
  %1900 = vmatprep.subr.mxu0 0.0
  %1901 = vmatpush1.msra.mxu0 %v52
  %1902 = vmatprep.subr.mxu0 0.0
  %1903 = vmatpush1.msra.mxu0 0.0
  %1904 = vmatprep.subr.mxu0 0.0
  %1905 = vmatpush1.msra.mxu0 0.0
  %1906 = vmatprep.subr.mxu0 0.0
  %1907 = vmatpush1.msra.mxu0 0.0
  %1908 = vmatprep.subr.mxu0 0.0
  %1909 = vmatpush1.msra.mxu0 0.0
  %1910 = vmatprep.subr.mxu0 0.0
  %1911 = vmatpush1.msra.mxu0 0.0
  %1912 = vmatprep.subr.mxu0 0.0
  %1913 = vmatpush1.msra.mxu0 0.0
  %1914 = vmatprep.subr.mxu0 0.0
  %1915 = vmatpush1.msra.mxu0 0.0
  %1916 = vmatprep.subr.mxu0 0.0
  %1917 = vmatpush1.msra.mxu0 0.0
  %1918 = vmatprep.subr.mxu0 0.0
  %1919 = vmatpush1.msra.mxu0 0.0
  %1920 = vmatprep.subr.mxu0 0.0
  %1921 = vmatpush1.msra.mxu0 0.0
  %1922 = vmatprep.subr.mxu0 0.0
  %1923 = vmatpush1.msra.mxu0 0.0
  %1924 = vmatprep.subr.mxu0 0.0
  %1925 = vmatpush1.msra.mxu0 0.0
  %1926 = vmatprep.subr.mxu0 0.0
  %1927 = vmatpush1.msra.mxu0 0.0
  %1928 = vmatprep.subr.mxu0 0.0
  %1929 = vmatpush1.msra.mxu0 0.0
  %1930 = vmatprep.subr.mxu0 0.0
  %1931 = vmatpush1.msra.mxu0 0.0
  %1932 = vmatprep.subr.mxu0 0.0
  %1933 = vmatpush1.msra.mxu0 0.0
  %1934 = vmatprep.subr.mxu0 0.0
  %1935 = vmatpush1.msra.mxu0 0.0
  %1936 = vmatprep.subr.mxu0 0.0
  %1937 = vmatpush1.msra.mxu0 0.0
  %1938 = vmatprep.subr.mxu0 0.0
  %1939 = vmatpush1.msra.mxu0 0.0
  %1940 = vmatprep.subr.mxu0 0.0
  %1941 = vmatpush1.msra.mxu0 0.0
  %1942 = vmatprep.subr.mxu0 0.0
  %1943 = vmatpush1.msra.mxu0 0.0
  %1944 = vmatprep.subr.mxu0 0.0
  %1945 = vmatpush1.msra.mxu0 0.0
  %1946 = vmatprep.subr.mxu0 0.0
  %1947 = vmatpush1.msra.mxu0 0.0
  %1948 = vmatprep.subr.mxu0 0.0
  %1949 = vmatpush1.msra.mxu0 0.0
  %1950 = vmatprep.mubr.f32.mxu0 0.0
  %1951 = vmatmul.mubr.f32.gmra.mrb[0].mxu0 %v1884
  %v1952 = vpop.f32.mrb[0].mxu0
  %v1953 = vadd.f32 0.0, %v1952
  %v1954 = vpop.f32.mrb[0].mxu0
  %1955 = vdwg.mxu0
  %v1956 = vadd.f32 %v1953, %v1877
  %v1957 = vxor.u32 %v1956, 2147483648
  %v1958 = vmul.f32 %v1957, 1.442695
  %v1959 = vpow.pop %v1958
  %v1960 = vadd.f32 %v1959, 1.0
  %v1961 = vrcp.pop %v1960
  %v1962 = vmul.f32 1.0, %v1961
  %v1963 = vadd.f32 %v1953, %v503
  %1965 = vrot.lane.b32.xlu0 %v1963, 32
  %v1966 = vpop.permute.xlu0 %1965
  %v1968 = vmul.f32 %v1962, %v1966
  %1970 = vrot.lane.b32.xlu0 %v1968, 64
  %v1971 = vpop.permute.xlu0 %1970
  %v1973 = vadd.f32 %v1956, %v1971
  %v1974 = vtanh.pop %v1973
  %v1975 = vsub.f32 1.0, %v1962
  %1977 = vrot.lane.b32.xlu0 %v1974, 96
  %v1978 = vpop.permute.xlu0 %1977
  %v1980 = vmul.f32 %v1975, %v1978
  %v1981 = vmul.f32 %v1962, %v1770
  %v1982 = vadd.f32 %v1980, %v1981
  %1984 = vrot.lane.b32.xlu0 %v1982, 96
  %v1985 = vpop.permute.xlu0 %1984
  %s1987 = scalar_lea.vmem [#allocation4], 24
  %1988 = vst.msk [vmem:[%s1987] sm:$0xff] %vm303, %v1985
  %v1989 = vsel %vm303, %v1880, 0
  %1991 = vmatprep.subr.mxu0 0.0
  %1992 = vmatpush1.msra.mxu0 %v41
  %1993 = vmatprep.subr.mxu0 0.0
  %1994 = vmatpush1.msra.mxu0 %v42
  %1995 = vmatprep.subr.mxu0 0.0
  %1996 = vmatpush1.msra.mxu0 %v43
  %1997 = vmatprep.subr.mxu0 0.0
  %1998 = vmatpush1.msra.mxu0 %v44
  %1999 = vmatprep.subr.mxu0 0.0
  %2000 = vmatpush1.msra.mxu0 0.0
  %2001 = vmatprep.subr.mxu0 0.0
  %2002 = vmatpush1.msra.mxu0 0.0
  %2003 = vmatprep.subr.mxu0 0.0
  %2004 = vmatpush1.msra.mxu0 0.0
  %2005 = vmatprep.subr.mxu0 0.0
  %2006 = vmatpush1.msra.mxu0 0.0
  %2007 = vmatprep.subr.mxu0 0.0
  %2008 = vmatpush1.msra.mxu0 0.0
  %2009 = vmatprep.subr.mxu0 0.0
  %2010 = vmatpush1.msra.mxu0 0.0
  %2011 = vmatprep.subr.mxu0 0.0
  %2012 = vmatpush1.msra.mxu0 0.0
  %2013 = vmatprep.subr.mxu0 0.0
  %2014 = vmatpush1.msra.mxu0 0.0
  %2015 = vmatprep.subr.mxu0 0.0
  %2016 = vmatpush1.msra.mxu0 0.0
  %2017 = vmatprep.subr.mxu0 0.0
  %2018 = vmatpush1.msra.mxu0 0.0
  %2019 = vmatprep.subr.mxu0 0.0
  %2020 = vmatpush1.msra.mxu0 0.0
  %2021 = vmatprep.subr.mxu0 0.0
  %2022 = vmatpush1.msra.mxu0 0.0
  %2023 = vmatprep.subr.mxu0 0.0
  %2024 = vmatpush1.msra.mxu0 0.0
  %2025 = vmatprep.subr.mxu0 0.0
  %2026 = vmatpush1.msra.mxu0 0.0
  %2027 = vmatprep.subr.mxu0 0.0
  %2028 = vmatpush1.msra.mxu0 0.0
  %2029 = vmatprep.subr.mxu0 0.0
  %2030 = vmatpush1.msra.mxu0 0.0
  %2031 = vmatprep.subr.mxu0 0.0
  %2032 = vmatpush1.msra.mxu0 0.0
  %2033 = vmatprep.subr.mxu0 0.0
  %2034 = vmatpush1.msra.mxu0 0.0
  %2035 = vmatprep.subr.mxu0 0.0
  %2036 = vmatpush1.msra.mxu0 0.0
  %2037 = vmatprep.subr.mxu0 0.0
  %2038 = vmatpush1.msra.mxu0 0.0
  %2039 = vmatprep.subr.mxu0 0.0
  %2040 = vmatpush1.msra.mxu0 0.0
  %2041 = vmatprep.subr.mxu0 0.0
  %2042 = vmatpush1.msra.mxu0 0.0
  %2043 = vmatprep.subr.mxu0 0.0
  %2044 = vmatpush1.msra.mxu0 0.0
  %2045 = vmatprep.subr.mxu0 0.0
  %2046 = vmatpush1.msra.mxu0 0.0
  %2047 = vmatprep.subr.mxu0 0.0
  %2048 = vmatpush1.msra.mxu0 0.0
  %2049 = vmatprep.subr.mxu0 0.0
  %2050 = vmatpush1.msra.mxu0 0.0
  %2051 = vmatprep.subr.mxu0 0.0
  %2052 = vmatpush1.msra.mxu0 0.0
  %2053 = vmatprep.subr.mxu0 0.0
  %2054 = vmatpush1.msra.mxu0 0.0
  %2055 = vmatprep.mubr.f32.mxu0 0.0
  %2056 = vmatmul.mubr.f32.gmra.mrb[0].mxu0 %v1989
  %v2057 = vpop.f32.mrb[0].mxu0
  %v2058 = vadd.f32 0.0, %v2057
  %v2059 = vpop.f32.mrb[0].mxu0
  %2060 = vdwg.mxu0
  %v2061 = vadd.f32 %v73, %v2058
  %v2062 = vxor.u32 %v2061, 2147483648
  %v2063 = vmul.f32 %v2062, 1.442695
  %v2064 = vpow.pop %v2063
  %v2065 = vadd.f32 %v2064, 1.0
  %v2066 = vrcp.pop %v2065
  %v2067 = vmul.f32 1.0, %v2066
  %v2068 = vadd.f32 %v2058, %v390
  %2070 = vrot.lane.b32.xlu0 %v2068, 64
  %v2071 = vpop.permute.xlu0 %2070
  %v2073 = vmul.f32 %v2067, %v2071
  %2075 = vrot.lane.b32.xlu0 %v2073, 64
  %v2076 = vpop.permute.xlu0 %2075
  %v2078 = vadd.f32 %v73, %v2076
  %v2079 = vtanh.pop %v2078
  %v2080 = vsub.f32 1.0, %v2067
  %2082 = vrot.lane.b32.xlu0 %v2079, 96
  %v2083 = vpop.permute.xlu0 %2082
  %v2085 = vmul.f32 %v2080, %v2083
  %v2086 = vmul.f32 %v2067, %v1875
  %v2087 = vadd.f32 %v2085, %v2086
  %s2088 = scalar_lea.vmem [#allocation3], 32
  %v2089 = vld [vmem:[%s2088] sm:$0xff]
  %2091 = vrot.lane.b32.xlu0 %v2087, 96
  %v2092 = vpop.permute.xlu0 %2091
  %v2094 = vsel %vm303, %v2092, %v1982
  %v2096 = vsel %vm75, %v2094, 0
  %2098 = vmatprep.subr.mxu0 0.0
  %2099 = vmatpush1.msra.mxu0 %v45
  %2100 = vmatprep.subr.mxu0 0.0
  %2101 = vmatpush1.msra.mxu0 %v46
  %2102 = vmatprep.subr.mxu0 0.0
  %2103 = vmatpush1.msra.mxu0 %v47
  %2104 = vmatprep.subr.mxu0 0.0
  %2105 = vmatpush1.msra.mxu0 %v48
  %2106 = vmatprep.subr.mxu0 0.0
  %2107 = vmatpush1.msra.mxu0 %v49
  %2108 = vmatprep.subr.mxu0 0.0
  %2109 = vmatpush1.msra.mxu0 %v50
  %2110 = vmatprep.subr.mxu0 0.0
  %2111 = vmatpush1.msra.mxu0 %v51
  %2112 = vmatprep.subr.mxu0 0.0
  %2113 = vmatpush1.msra.mxu0 %v52
  %2114 = vmatprep.subr.mxu0 0.0
  %2115 = vmatpush1.msra.mxu0 0.0
  %2116 = vmatprep.subr.mxu0 0.0
  %2117 = vmatpush1.msra.mxu0 0.0
  %2118 = vmatprep.subr.mxu0 0.0
  %2119 = vmatpush1.msra.mxu0 0.0
  %2120 = vmatprep.subr.mxu0 0.0
  %2121 = vmatpush1.msra.mxu0 0.0
  %2122 = vmatprep.subr.mxu0 0.0
  %2123 = vmatpush1.msra.mxu0 0.0
  %2124 = vmatprep.subr.mxu0 0.0
  %2125 = vmatpush1.msra.mxu0 0.0
  %2126 = vmatprep.subr.mxu0 0.0
  %2127 = vmatpush1.msra.mxu0 0.0
  %2128 = vmatprep.subr.mxu0 0.0
  %2129 = vmatpush1.msra.mxu0 0.0
  %2130 = vmatprep.subr.mxu0 0.0
  %2131 = vmatpush1.msra.mxu0 0.0
  %2132 = vmatprep.subr.mxu0 0.0
  %2133 = vmatpush1.msra.mxu0 0.0
  %2134 = vmatprep.subr.mxu0 0.0
  %2135 = vmatpush1.msra.mxu0 0.0
  %2136 = vmatprep.subr.mxu0 0.0
  %2137 = vmatpush1.msra.mxu0 0.0
  %2138 = vmatprep.subr.mxu0 0.0
  %2139 = vmatpush1.msra.mxu0 0.0
  %2140 = vmatprep.subr.mxu0 0.0
  %2141 = vmatpush1.msra.mxu0 0.0
  %2142 = vmatprep.subr.mxu0 0.0
  %2143 = vmatpush1.msra.mxu0 0.0
  %2144 = vmatprep.subr.mxu0 0.0
  %2145 = vmatpush1.msra.mxu0 0.0
  %2146 = vmatprep.subr.mxu0 0.0
  %2147 = vmatpush1.msra.mxu0 0.0
  %2148 = vmatprep.subr.mxu0 0.0
  %2149 = vmatpush1.msra.mxu0 0.0
  %2150 = vmatprep.subr.mxu0 0.0
  %2151 = vmatpush1.msra.mxu0 0.0
  %2152 = vmatprep.subr.mxu0 0.0
  %2153 = vmatpush1.msra.mxu0 0.0
  %2154 = vmatprep.subr.mxu0 0.0
  %2155 = vmatpush1.msra.mxu0 0.0
  %2156 = vmatprep.subr.mxu0 0.0
  %2157 = vmatpush1.msra.mxu0 0.0
  %2158 = vmatprep.subr.mxu0 0.0
  %2159 = vmatpush1.msra.mxu0 0.0
  %2160 = vmatprep.subr.mxu0 0.0
  %2161 = vmatpush1.msra.mxu0 0.0
  %2162 = vmatprep.mubr.f32.mxu0 0.0
  %2163 = vmatmul.mubr.f32.gmra.mrb[0].mxu0 %v2096
  %v2164 = vpop.f32.mrb[0].mxu0
  %v2165 = vadd.f32 0.0, %v2164
  %v2166 = vpop.f32.mrb[0].mxu0
  %2167 = vdwg.mxu0
  %v2168 = vadd.f32 %v2165, %v2089
  %v2169 = vxor.u32 %v2168, 2147483648
  %v2170 = vmul.f32 %v2169, 1.442695
  %v2171 = vpow.pop %v2170
  %v2172 = vadd.f32 %v2171, 1.0
  %v2173 = vrcp.pop %v2172
  %v2174 = vmul.f32 1.0, %v2173
  %v2175 = vadd.f32 %v2165, %v503
  %2177 = vrot.lane.b32.xlu0 %v2175, 32
  %v2178 = vpop.permute.xlu0 %2177
  %v2180 = vmul.f32 %v2174, %v2178
  %2182 = vrot.lane.b32.xlu0 %v2180, 64
  %v2183 = vpop.permute.xlu0 %2182
  %v2185 = vadd.f32 %v2168, %v2183
  %v2186 = vtanh.pop %v2185
  %v2187 = vsub.f32 1.0, %v2174
  %2189 = vrot.lane.b32.xlu0 %v2186, 96
  %v2190 = vpop.permute.xlu0 %2189
  %v2192 = vmul.f32 %v2187, %v2190
  %v2193 = vmul.f32 %v2174, %v1982
  %v2194 = vadd.f32 %v2192, %v2193
  %2196 = vrot.lane.b32.xlu0 %v2194, 96
  %v2197 = vpop.permute.xlu0 %2196
  %s2199 = scalar_lea.vmem [#allocation4], 32
  %2200 = vst.msk [vmem:[%s2199] sm:$0xff] %vm303, %v2197
  %v2201 = vld [vmem:[#allocation4] sm:$0xff]
  %v2202 = vld [vmem:[#allocation4 + $0x8] sm:$0xff]
  %v2203 = vld [vmem:[#allocation4 + $0x10] sm:$0xff]
  %v2204 = vld [vmem:[#allocation4 + $0x18] sm:$0xff]
  %v2205 = vld [vmem:[#allocation4 + $0x20] sm:$0xff]
  %v2206 = vld [vmem:[%s10] sm:$0xff]
  %v2207 = vld [vmem:[%s10 + $0x8] sm:$0xff]
  %v2208 = vld [vmem:[%s10 + $0x10] sm:$0xff]
  %v2209 = vld [vmem:[%s10 + $0x18] sm:$0xff]
  %v2210 = vld [vmem:[%s11] sm:$0x1]
  %v2212 = vlaneseq
  %v2213 = vshrl.u32 %v2212, 7
  %v2214 = vsub.s32 0, %v2213
  %v2215 = vrot.slane %v2210, %v2214
  %v2218 = vsel %vm303, %v2201, 0
  %v2221 = vsel %vm303, %v2202, 0
  %v2224 = vsel %vm303, %v2203, 0
  %v2227 = vsel %vm303, %v2204, 0
  %v2230 = vsel %vm303, %v2205, 0
  %2232 = vmatprep.subr.mxu0 0.0
  %2233 = vmatpush1.msra.mxu0 %v2206
  %2234 = vmatprep.subr.mxu0 0.0
  %2235 = vmatpush1.msra.mxu0 %v2207
  %2236 = vmatprep.subr.mxu0 0.0
  %2237 = vmatpush1.msra.mxu0 %v2208
  %2238 = vmatprep.subr.mxu0 0.0
  %2239 = vmatpush1.msra.mxu0 %v2209
  %2240 = vmatprep.subr.mxu0 0.0
  %2241 = vmatpush1.msra.mxu0 0.0
  %2242 = vmatprep.subr.mxu0 0.0
  %2243 = vmatpush1.msra.mxu0 0.0
  %2244 = vmatprep.subr.mxu0 0.0
  %2245 = vmatpush1.msra.mxu0 0.0
  %2246 = vmatprep.subr.mxu0 0.0
  %2247 = vmatpush1.msra.mxu0 0.0
  %2248 = vmatprep.subr.mxu0 0.0
  %2249 = vmatpush1.msra.mxu0 0.0
  %2250 = vmatprep.subr.mxu0 0.0
  %2251 = vmatpush1.msra.mxu0 0.0
  %2252 = vmatprep.subr.mxu0 0.0
  %2253 = vmatpush1.msra.mxu0 0.0
  %2254 = vmatprep.subr.mxu0 0.0
  %2255 = vmatpush1.msra.mxu0 0.0
  %2256 = vmatprep.subr.mxu0 0.0
  %2257 = vmatpush1.msra.mxu0 0.0
  %2258 = vmatprep.subr.mxu0 0.0
  %2259 = vmatpush1.msra.mxu0 0.0
  %2260 = vmatprep.subr.mxu0 0.0
  %2261 = vmatpush1.msra.mxu0 0.0
  %2262 = vmatprep.subr.mxu0 0.0
  %2263 = vmatpush1.msra.mxu0 0.0
  %2264 = vmatprep.subr.mxu0 0.0
  %2265 = vmatpush1.msra.mxu0 0.0
  %2266 = vmatprep.subr.mxu0 0.0
  %2267 = vmatpush1.msra.mxu0 0.0
  %2268 = vmatprep.subr.mxu0 0.0
  %2269 = vmatpush1.msra.mxu0 0.0
  %2270 = vmatprep.subr.mxu0 0.0
  %2271 = vmatpush1.msra.mxu0 0.0
  %2272 = vmatprep.subr.mxu0 0.0
  %2273 = vmatpush1.msra.mxu0 0.0
  %2274 = vmatprep.subr.mxu0 0.0
  %2275 = vmatpush1.msra.mxu0 0.0
  %2276 = vmatprep.subr.mxu0 0.0
  %2277 = vmatpush1.msra.mxu0 0.0
  %2278 = vmatprep.subr.mxu0 0.0
  %2279 = vmatpush1.msra.mxu0 0.0
  %2280 = vmatprep.subr.mxu0 0.0
  %2281 = vmatpush1.msra.mxu0 0.0
  %2282 = vmatprep.subr.mxu0 0.0
  %2283 = vmatpush1.msra.mxu0 0.0
  %2284 = vmatprep.subr.mxu0 0.0
  %2285 = vmatpush1.msra.mxu0 0.0
  %2286 = vmatprep.subr.mxu0 0.0
  %2287 = vmatpush1.msra.mxu0 0.0
  %2288 = vmatprep.subr.mxu0 0.0
  %2289 = vmatpush1.msra.mxu0 0.0
  %2290 = vmatprep.subr.mxu0 0.0
  %2291 = vmatpush1.msra.mxu0 0.0
  %2292 = vmatprep.subr.mxu0 0.0
  %2293 = vmatpush1.msra.mxu0 0.0
  %2294 = vmatprep.subr.mxu0 0.0
  %2295 = vmatpush1.msra.mxu0 0.0
  %2296 = vmatprep.mubr.f32.mxu0 0.0
  %2297 = vmatmul.mubr.f32.gmra.mrb[0].mxu0 %v2218
  %v2298 = vpop.f32.mrb[0].mxu0
  %v2299 = vadd.f32 %v2215, %v2298
  %v2300 = vpop.f32.mrb[0].mxu0
  %2301 = vmatprep.mubr.f32.mxu0 0.0
  %2302 = vmatmul.mubr.f32.gmra.mrb[0].mxu0 %v2221
  %v2303 = vpop.f32.mrb[0].mxu0
  %v2304 = vadd.f32 %v2215, %v2303
  %v2305 = vpop.f32.mrb[0].mxu0
  %2306 = vmatprep.mubr.f32.mxu0 0.0
  %2307 = vmatmul.mubr.f32.gmra.mrb[0].mxu0 %v2224
  %v2308 = vpop.f32.mrb[0].mxu0
  %v2309 = vadd.f32 %v2215, %v2308
  %v2310 = vpop.f32.mrb[0].mxu0
  %2311 = vmatprep.mubr.f32.mxu0 0.0
  %2312 = vmatmul.mubr.f32.gmra.mrb[0].mxu0 %v2227
  %v2313 = vpop.f32.mrb[0].mxu0
  %v2314 = vadd.f32 %v2215, %v2313
  %v2315 = vpop.f32.mrb[0].mxu0
  %2316 = vmatprep.mubr.f32.mxu0 0.0
  %2317 = vmatmul.mubr.f32.gmra.mrb[0].mxu0 %v2230
  %v2318 = vpop.f32.mrb[0].mxu0
  %v2319 = vadd.f32 %v2215, %v2318
  %v2320 = vpop.f32.mrb[0].mxu0
  %2321 = vdwg.mxu0
  %2322 = vmax.xlane.f32.xlu0 %v2299
  %v2323 = vpop.xlane.xlu0 %2322
  %2324 = vmax.xlane.f32.xlu0 %v2304
  %v2325 = vpop.xlane.xlu0 %2324
  %2326 = vmax.xlane.f32.xlu0 %v2309
  %v2327 = vpop.xlane.xlu0 %2326
  %2328 = vmax.xlane.f32.xlu0 %v2314
  %v2329 = vpop.xlane.xlu0 %2328
  %2330 = vmax.xlane.f32.xlu0 %v2319
  %v2331 = vpop.xlane.xlu0 %2330
  %v2332 = vsub.f32 %v2299, %v2323
  %v2333 = vsub.f32 %v2304, %v2325
  %v2334 = vsub.f32 %v2309, %v2327
  %v2335 = vsub.f32 %v2314, %v2329
  %v2336 = vsub.f32 %v2319, %v2331
  %v2337 = vmul.f32 %v2332, 1.442695
  %v2338 = vpow.pop %v2337
  %v2339 = vmul.f32 %v2333, 1.442695
  %v2340 = vpow.pop %v2339
  %v2341 = vmul.f32 %v2334, 1.442695
  %v2342 = vpow.pop %v2341
  %v2343 = vmul.f32 %v2335, 1.442695
  %v2344 = vpow.pop %v2343
  %v2345 = vmul.f32 %v2336, 1.442695
  %v2346 = vpow.pop %v2345
  %2347 = vadd.xlane.f32.xlu0 %v2338
  %v2348 = vpop.xlane.xlu0 %2347
  %2349 = vadd.xlane.f32.xlu0 %v2340
  %v2350 = vpop.xlane.xlu0 %2349
  %2351 = vadd.xlane.f32.xlu0 %v2342
  %v2352 = vpop.xlane.xlu0 %2351
  %2353 = vadd.xlane.f32.xlu0 %v2344
  %v2354 = vpop.xlane.xlu0 %2353
  %2355 = vadd.xlane.f32.xlu0 %v2346
  %v2356 = vpop.xlane.xlu0 %2355
  %v2357 = vlog2.pop %v2348
  %v2358 = vmul.f32 %v2357, 0.6931472
  %v2359 = vlog2.pop %v2350
  %v2360 = vmul.f32 %v2359, 0.6931472
  %v2361 = vlog2.pop %v2352
  %v2362 = vmul.f32 %v2361, 0.6931472
  %v2363 = vlog2.pop %v2354
  %v2364 = vmul.f32 %v2363, 0.6931472
  %v2365 = vlog2.pop %v2356
  %v2366 = vmul.f32 %v2365, 0.6931472
  %v2367 = vsub.f32 %v2332, %v2358
  %v2368 = vsub.f32 %v2333, %v2360
  %v2369 = vsub.f32 %v2334, %v2362
  %v2370 = vsub.f32 %v2335, %v2364
  %v2371 = vsub.f32 %v2336, %v2366
  %2372 = vst [vmem:[%s12] sm:$0xff] %v2367
  %2373 = vst [vmem:[%s12 + $0x8] sm:$0xff] %v2368
  %2374 = vst [vmem:[%s12 + $0x10] sm:$0xff] %v2369
  %2375 = vst [vmem:[%s12 + $0x18] sm:$0xff] %v2370
  %2376 = vst [vmem:[%s12 + $0x20] sm:$0xff] %v2371
  // Predicated region
  $region50: #{s2vt_forward_train.1} parent=0 // pred_check
    _
  $region51: #{s2vt_forward_train.1} parent=0 // pred_check_branch
    %2378 = sbr.rel (0) target = $region53
  $region52: #{s2vt_forward_train.1} parent=0 // pred_region
    _
  $region53: #{s2vt_forward_train.1} parent=0 // pred_fallthru
    _
  // Predicated region
  $region54: #{s2vt_forward_train.1} parent=0 // pred_check
    _
  $region55: #{s2vt_forward_train.1} parent=0 // pred_check_branch
    %2380 = sbr.rel (0) target = $region57
  $region56: #{s2vt_forward_train.1} parent=0 // pred_region
    _
  $region57: #{s2vt_forward_train.1} parent=0 // pred_fallthru
    _

</llo_original>
